<compile_context>
chip_gen: v7x
topology: tpu7x:2x2x1
jax: 0.10.0
libtpu: 0.0.40
codegen_flags: <defaults>
</compile_context>

<pallas_src>
import math
import numpy as np
import jax
import jax.numpy as jnp
from jax import lax
from jax.experimental import pallas as pl
from jax.experimental.pallas import tpu as pltpu

SMEM = pltpu.MemorySpace.SMEM


def _round_up(v, m):
    return -(-v // m) * m


# ----------------------------------------------------------------------------
# Fused kernel: gradient step + conv1 + ReLU + conv2 (+ residual add)
# One grid step processes a tile of `B` batch rows; everything is lane-dense
# (last dim = M, m*m or C*m*m) and all MACs run on the MXU with f32 accumulation.
# ----------------------------------------------------------------------------
def _make_fused_block_kernel(residual_connection, compute_dtype):
    def kernel(mu_ref, b2_ref,              # SMEM scalars
               y_ref, x_ref, a_ref,         # per-tile y/x, resident A
               k1_ref, b1row_ref, k2_ref,   # resident conv operators
               out_ref):
        x = x_ref[...]                       # (B, n)  f32
        y = y_ref[...]                       # (B, M)  f32
        A = a_ref[...]                       # (M, n)  compute_dtype

        # --- gradient (Landweber) step:  x_tilde = x + mu * (y - x A^T) A ---
        xc = x.astype(compute_dtype)
        r = y - lax.dot_general(xc, A, (((1,), (1,)), ((), ())),
                                preferred_element_type=jnp.float32)       # (B, M)
        xt = x + mu_ref[0] * jnp.dot(r.astype(compute_dtype), A,
                                     preferred_element_type=jnp.float32)  # (B, n)

        # --- projector CNN as two lane-dense MXU matmuls ---
        # conv1 (1->C, 3x3, pad=1) + bias + ReLU
        h = jnp.maximum(
            jnp.dot(xt.astype(compute_dtype), k1_ref[...],
                    preferred_element_type=jnp.float32)
            + b1row_ref[...], 0.0)                                         # (B, C*n)
        # conv2 (C->1, 3x3, pad=1) + bias
        out = jnp.dot(h.astype(compute_dtype), k2_ref[...],
                      preferred_element_type=jnp.float32) + b2_ref[0]      # (B, n)

        if residual_connection:
            out = out + xt
        out_ref[...] = out

    return kernel


# ----------------------------------------------------------------------------
# Host-side: express the two 3x3 "same" convolutions as dense zero-padded
# Toeplitz matrices so they become matmuls inside the kernel.
# ----------------------------------------------------------------------------
def _conv_operators(params, m, compute_dtype):
    n = m * m
    w1 = np.asarray(params["w1"], np.float32)   # (C, 1, 3, 3)
    b1 = np.asarray(params["b1"], np.float32)   # (C,)
    w2 = np.asarray(params["w2"], np.float32)   # (1, C, 3, 3)
    b2 = np.asarray(params["b2"], np.float32)   # (1,)
    C = w1.shape[0]

    K1 = np.zeros((n, C * n), np.float32)       # h[:, co*n+p] = xt @ K1
    K2 = np.zeros((C * n, n), np.float32)       # out         = H  @ K2
    for p in range(n):
        i, j = divmod(p, m)
        for dh in (-1, 0, 1):
            for dw in (-1, 0, 1):
                ii, jj = i + dh, j + dw
                if not (0 <= ii < m and 0 <= jj < m):
                    continue                     # zero padding
                q = ii * m + jj
                kh, kw = dh + 1, dw + 1
                for co in range(C):
                    K1[q, co * n + p] += w1[co, 0, kh, kw]
                for ci in range(C):
                    K2[ci * n + q, p] += w2[0, ci, kh, kw]

    b1_row = np.repeat(b1, n)[None, :]           # (1, C*n)
    return (jnp.asarray(K1, compute_dtype), jnp.asarray(b1_row, jnp.float32),
            jnp.asarray(K2, compute_dtype), jnp.asarray(b2, jnp.float32))


# ----------------------------------------------------------------------------
# Batch-tile selection: big enough to feed the MXU (up to 256 rows), but split
# into >=2 grid steps when possible so the v7x megacore can shard the batch.
# ----------------------------------------------------------------------------
def _pick_batch_tile(d, max_tile=256):
    d8 = _round_up(d, 8)
    B = min(d8, max_tile)
    if d8 >= 16 and d8 // B < 2:
        # would be a single grid step -> split in two (costs at most one extra
        # ~0.35us grid step on 1-TC chips, enables megacore on v7x)
        B = _round_up(-(-d8 // 2), 8)
    d_pad = _round_up(d8, B)
    return B, d_pad


# ----------------------------------------------------------------------------
# Block.forward
# ----------------------------------------------------------------------------
def block_forward(y, x, A, mu, params, residual_connection, *,
                  compute_dtype=jnp.bfloat16):
    x = jnp.asarray(x, jnp.float32)
    y = jnp.asarray(y, jnp.float32)
    d, n = x.shape
    M, n2 = A.shape
    assert n2 == n
    m = int(math.isqrt(n))
    assert m * m == n

    K1, b1_row, K2, b2 = _conv_operators(params, m, compute_dtype)
    Cn = K1.shape[1]
    A_c = jnp.asarray(A, compute_dtype)

    itemsize = jnp.dtype(compute_dtype).itemsize
    op_bytes = (n * Cn + Cn * n + M * n) * itemsize
    if op_bytes > (24 << 20):
        # TODO(synk): roll-based conv / K-tiled operators needed for m > ~16.
        raise NotImplementedError(
            "dense Toeplitz conv operators too large for VMEM; use a "
            "roll-based conv kernel for larger images")

    B, d_pad = _pick_batch_tile(d)
    if d_pad != d:
        x = jnp.pad(x, ((0, d_pad - d), (0, 0)))
        y = jnp.pad(y, ((0, d_pad - d), (0, 0)))

    mu_arr = jnp.asarray(mu, jnp.float32).reshape(1)
    kernel = _make_fused_block_kernel(residual_connection, compute_dtype)

    # VMEM budget: resident operators (single-buffered, x2 headroom for the
    # fallback path) + double-buffered streamed tiles + in-kernel temporaries.
    tile_bytes = B * (M + 2 * n) * 4
    work_bytes = 2 * B * (Cn + M + n) * 4
    need = 2 * op_bytes + Cn * 4 + 2 * tile_bytes + work_bytes + (4 << 20)
    try:
        phys = pltpu.get_tpu_info().vmem_capacity_bytes
    except Exception:
        phys = 64 << 20
    vmem_limit = int(min(max(need, 32 << 20), int(0.9 * phys)))

    cost = pl.CostEstimate(
        flops=int(4 * d_pad * n * (M + Cn)),
        transcendentals=0,
        bytes_accessed=int(d_pad * (M + 2 * n) * 4 + op_bytes + Cn * 4),
    )

    def _call(single_buffer):
        def const_spec(shape):
            if single_buffer:
                # constant index_map -> never re-fetched; don't waste a dead
                # second buffer on each resident operator.
                return pl.BlockSpec(shape, lambda i: (0, 0),
                                    pipeline_mode=pl.Buffered(1))
            return pl.BlockSpec(shape, lambda i: (0, 0))

        return pl.pallas_call(
            kernel,
            out_shape=jax.ShapeDtypeStruct((d_pad, n), jnp.float32),
            grid=(d_pad // B,),
            in_specs=[
                pl.BlockSpec(memory_space=SMEM),            # mu (scalar)
                pl.BlockSpec(memory_space=SMEM),            # b2 (scalar)
                pl.BlockSpec((B, M), lambda i: (i, 0)),     # y  (streamed tile)
                pl.BlockSpec((B, n), lambda i: (i, 0)),     # x  (streamed tile)
                const_spec((M, n)),                         # A   (resident)
                const_spec((n, Cn)),                        # K1  (resident)
                const_spec((1, Cn)),                        # b1 row (resident)
                const_spec((Cn, n)),                        # K2  (resident)
            ],
            out_specs=pl.BlockSpec((B, n), lambda i: (i, 0)),
            compiler_params=pltpu.CompilerParams(
                dimension_semantics=("parallel",),          # megacore on v7x
                vmem_limit_bytes=vmem_limit,
            ),
            cost_estimate=cost,
        )(mu_arr, b2, y, x, A_c, K1, b1_row, K2)

    try:
        out = _call(True)
    except Exception:
        # pipeline_mode / pl.Buffered(1) not supported by this JAX build:
        # fall back to default double-buffering (correct, slightly more VMEM).
        out = _call(False)
    return out[:d]


# ----------------------------------------------------------------------------
# Pure-JAX reference (for correctness check only)
# ----------------------------------------------------------------------------
def block_forward_ref(y, x, A, mu, params, residual_connection):
    d = y.shape[0]
    m = int(math.isqrt(x.shape[1]))
    residual = y - (A @ x.T).T
    x_tilde = x + mu * (A.T @ residual.T).T
    img = x_tilde.reshape(d, 1, m, m)

    def conv(z, w, b):
        o = lax.conv_general_dilated(
            z, w, window_strides=(1, 1), padding="SAME",
            dimension_numbers=("NCHW", "OIHW", "NCHW"))
        return o + b.reshape(1, -1, 1, 1)

    h = jnp.maximum(conv(img, params["w1"], params["b1"]), 0.0)
    o = conv(h, params["w2"], params["b2"]).reshape(d, m * m)
    if residual_connection:
        return x_tilde.reshape(d, m * m) + o
    return o


# ----------------------------------------------------------------------------
if __name__ == "__main__":
    key = jax.random.PRNGKey(0)
    k_a, k_x, k_y, k_w1, k_b1, k_w2, k_b2, k_x2, k_y2 = jax.random.split(key, 9)

    d = 2          # batch
    m = 16         # image side -> signal dim n = 256
    n = m * m
    M = 128        # number of measurements
    C = 4          # hidden channels of the projector CNN
    mu = 0.1

    A = (jax.random.normal(k_a, (M, n), dtype=jnp.float32) / math.sqrt(M))
    x = jax.random.normal(k_x, (d, n), dtype=jnp.float32)
    y = jax.random.normal(k_y, (d, M), dtype=jnp.float32)

    params = {
        "w1": 0.1 * jax.random.normal(k_w1, (C, 1, 3, 3), dtype=jnp.float32),
        "b1": 0.1 * jax.random.normal(k_b1, (C,), dtype=jnp.float32),
        "w2": 0.1 * jax.random.normal(k_w2, (1, C, 3, 3), dtype=jnp.float32),
        "b2": 0.1 * jax.random.normal(k_b2, (1,), dtype=jnp.float32),
    }

    # 1) f32 path: bit-faithful semantics, tight tolerance (both branches)
    out = jax.block_until_ready(
        block_forward(y, x, A, mu, params, True, compute_dtype=jnp.float32))
    ref = block_forward_ref(y, x, A, mu, params, True)
    np.testing.assert_allclose(np.asarray(out), np.asarray(ref),
                               rtol=1e-4, atol=2e-4)

    out2 = jax.block_until_ready(
        block_forward(y, x, A, mu, params, False, compute_dtype=jnp.float32))
    ref2 = block_forward_ref(y, x, A, mu, params, False)
    np.testing.assert_allclose(np.asarray(out2), np.asarray(ref2),
                               rtol=1e-4, atol=2e-4)

    # 2) bf16 weights (default / fast path): loosened tolerance as reviewed
    out_bf = jax.block_until_ready(
        block_forward(y, x, A, mu, params, True, compute_dtype=jnp.bfloat16))
    np.testing.assert_allclose(np.asarray(out_bf), np.asarray(ref),
                               rtol=3e-2, atol=3e-2)

    # 3) larger batch: exercises batch padding, multi-step grid and the
    #    megacore-friendly tile split (d=50 -> B=32, grid=2)
    d2 = 50
    x_big = jax.random.normal(k_x2, (d2, n), dtype=jnp.float32)
    y_big = jax.random.normal(k_y2, (d2, M), dtype=jnp.float32)
    out_big = jax.block_until_ready(
        block_forward(y_big, x_big, A, mu, params, True,
                      compute_dtype=jnp.float32))
    ref_big = block_forward_ref(y_big, x_big, A, mu, params, True)
    np.testing.assert_allclose(np.asarray(out_big), np.asarray(ref_big),
                               rtol=1e-4, atol=2e-4)

    print("KERNEL_OK")
</pallas_src>

<mosaic_0001>
module attributes {stable_mosaic.version = 11 : i64} {
  func.func @kernel(%arg0: i32, %arg1: memref<1xf32, #tpu.memory_space<smem>>, %arg2: memref<1xf32, #tpu.memory_space<smem>>, %arg3: memref<8x128xf32, #tpu.memory_space<vmem>>, %arg4: memref<8x256xf32, #tpu.memory_space<vmem>>, %arg5: memref<128x256xf32, #tpu.memory_space<vmem>>, %arg6: memref<256x1024xf32, #tpu.memory_space<vmem>>, %arg7: memref<1x1024xf32, #tpu.memory_space<vmem>>, %arg8: memref<1024x256xf32, #tpu.memory_space<vmem>>, %arg9: memref<8x256xf32, #tpu.memory_space<vmem>>) attributes {dimension_semantics = [#tpu.dimension_semantics<parallel>], iteration_bounds = array<i64: 1>, scalar_prefetch = 0 : i64, scratch_operands = 0 : i64, tpu.core_type = #tpu.core_type<tc>, window_params = [{transform_indices = @transform_0, window_bounds = array<i64: 1>}, {transform_indices = @transform_1, window_bounds = array<i64: 1>}, {transform_indices = @transform_2, window_bounds = array<i64: 8, 128>}, {transform_indices = @transform_3, window_bounds = array<i64: 8, 256>}, {pipeline_mode = #tpu.pipeline_mode<synchronous>, transform_indices = @transform_4, window_bounds = array<i64: 128, 256>}, {pipeline_mode = #tpu.pipeline_mode<synchronous>, transform_indices = @transform_5, window_bounds = array<i64: 256, 1024>}, {pipeline_mode = #tpu.pipeline_mode<synchronous>, transform_indices = @transform_6, window_bounds = array<i64: 1, 1024>}, {pipeline_mode = #tpu.pipeline_mode<synchronous>, transform_indices = @transform_7, window_bounds = array<i64: 1024, 256>}, {transform_indices = @transform_8, window_bounds = array<i64: 8, 256>}]} {
    %c0 = arith.constant 0 : index
    %c0_0 = arith.constant 0 : index
    %0 = vector.load %arg4[%c0, %c0_0] : memref<8x256xf32, #tpu.memory_space<vmem>>, vector<8x256xf32>
    %c0_1 = arith.constant 0 : index
    %c0_2 = arith.constant 0 : index
    %1 = vector.load %arg3[%c0_1, %c0_2] : memref<8x128xf32, #tpu.memory_space<vmem>>, vector<8x128xf32>
    %c0_3 = arith.constant 0 : index
    %c0_4 = arith.constant 0 : index
    %2 = vector.load %arg5[%c0_3, %c0_4] : memref<128x256xf32, #tpu.memory_space<vmem>>, vector<128x256xf32>
    %cst = arith.constant dense<0.000000e+00> : vector<8x128xf32>
    %3 = tpu.matmul %0, %2, %cst {dimension_numbers = #tpu.dot_dimension_numbers<[1], [1], [0], [0], [0, 0, 1, 0], [], []>} : vector<8x256xf32>, vector<128x256xf32>, vector<8x128xf32> -> vector<8x128xf32>
    %4 = arith.subf %1, %3 : vector<8x128xf32>
    %c0_5 = arith.constant 0 : index
    %5 = memref.load %arg1[%c0_5] : memref<1xf32, #tpu.memory_space<smem>>
    %cst_6 = arith.constant dense<0.000000e+00> : vector<8x256xf32>
    %6 = tpu.matmul %4, %2, %cst_6 {dimension_numbers = #tpu.dot_dimension_numbers<[1], [0], [0], [1], [0, 0, 1, 1], [], []>} : vector<8x128xf32>, vector<128x256xf32>, vector<8x256xf32> -> vector<8x256xf32>
    %7 = vector.broadcast %5 : f32 to vector<8x256xf32>
    %8 = arith.mulf %7, %6 : vector<8x256xf32>
    %9 = arith.addf %0, %8 : vector<8x256xf32>
    %c0_7 = arith.constant 0 : index
    %c0_8 = arith.constant 0 : index
    %10 = vector.load %arg6[%c0_7, %c0_8] : memref<256x1024xf32, #tpu.memory_space<vmem>>, vector<256x1024xf32>
    %cst_9 = arith.constant dense<0.000000e+00> : vector<8x1024xf32>
    %11 = tpu.matmul %9, %10, %cst_9 {dimension_numbers = #tpu.dot_dimension_numbers<[1], [0], [0], [1], [0, 0, 1, 1], [], []>} : vector<8x256xf32>, vector<256x1024xf32>, vector<8x1024xf32> -> vector<8x1024xf32>
    %c0_10 = arith.constant 0 : index
    %c0_11 = arith.constant 0 : index
    %12 = vector.load %arg7[%c0_10, %c0_11] : memref<1x1024xf32, #tpu.memory_space<vmem>>, vector<1x1024xf32>
    %13 = vector.broadcast %12 : vector<1x1024xf32> to vector<8x1024xf32>
    %14 = arith.addf %11, %13 : vector<8x1024xf32>
    %cst_12 = arith.constant 0.000000e+00 : f32
    %15 = vector.broadcast %cst_12 : f32 to vector<8x1024xf32>
    %16 = arith.maximumf %14, %15 : vector<8x1024xf32>
    %c0_13 = arith.constant 0 : index
    %c0_14 = arith.constant 0 : index
    %17 = vector.load %arg8[%c0_13, %c0_14] : memref<1024x256xf32, #tpu.memory_space<vmem>>, vector<1024x256xf32>
    %cst_15 = arith.constant dense<0.000000e+00> : vector<8x256xf32>
    %18 = tpu.matmul %16, %17, %cst_15 {dimension_numbers = #tpu.dot_dimension_numbers<[1], [0], [0], [1], [0, 0, 1, 1], [], []>} : vector<8x1024xf32>, vector<1024x256xf32>, vector<8x256xf32> -> vector<8x256xf32>
    %c0_16 = arith.constant 0 : index
    %19 = memref.load %arg2[%c0_16] : memref<1xf32, #tpu.memory_space<smem>>
    %20 = vector.broadcast %19 : f32 to vector<8x256xf32>
    %21 = arith.addf %18, %20 : vector<8x256xf32>
    %22 = arith.addf %21, %9 : vector<8x256xf32>
    %c0_17 = arith.constant 0 : index
    %c0_18 = arith.constant 0 : index
    %23 = vector.load %arg9[%c0_17, %c0_18] : memref<8x256xf32, #tpu.memory_space<vmem>>, vector<8x256xf32>
    tpu.vector_store %arg9[%c0_17, %c0_18], %22 {strides = array<i32>} : memref<8x256xf32, #tpu.memory_space<vmem>>, vector<8x256xf32>,
    return
  }
  func.func @transform_0(%arg0: i32) -> i32 {
    %c0_i32 = arith.constant 0 : i32
    %c0_i32_0 = arith.constant 0 : i32
    return %c0_i32 : i32
  }
  func.func @transform_1(%arg0: i32) -> i32 {
    %c0_i32 = arith.constant 0 : i32
    %c0_i32_0 = arith.constant 0 : i32
    return %c0_i32 : i32
  }
  func.func @transform_2(%arg0: i32) -> (i32, i32) {
    %c0_i32 = arith.constant 0 : i32
    %c0_i32_0 = arith.constant 0 : i32
    return %arg0, %c0_i32 : i32, i32
  }
  func.func @transform_3(%arg0: i32) -> (i32, i32) {
    %c0_i32 = arith.constant 0 : i32
    %c0_i32_0 = arith.constant 0 : i32
    return %arg0, %c0_i32 : i32, i32
  }
  func.func @transform_4(%arg0: i32) -> (i32, i32) {
    %c0_i32 = arith.constant 0 : i32
    %c0_i32_0 = arith.constant 0 : i32
    %c0_i32_1 = arith.constant 0 : i32
    return %c0_i32, %c0_i32_0 : i32, i32
  }
  func.func @transform_5(%arg0: i32) -> (i32, i32) {
    %c0_i32 = arith.constant 0 : i32
    %c0_i32_0 = arith.constant 0 : i32
    %c0_i32_1 = arith.constant 0 : i32
    return %c0_i32, %c0_i32_0 : i32, i32
  }
  func.func @transform_6(%arg0: i32) -> (i32, i32) {
    %c0_i32 = arith.constant 0 : i32
    %c0_i32_0 = arith.constant 0 : i32
    %c0_i32_1 = arith.constant 0 : i32
    return %c0_i32, %c0_i32_0 : i32, i32
  }
  func.func @transform_7(%arg0: i32) -> (i32, i32) {
    %c0_i32 = arith.constant 0 : i32
    %c0_i32_0 = arith.constant 0 : i32
    %c0_i32_1 = arith.constant 0 : i32
    return %c0_i32, %c0_i32_0 : i32, i32
  }
  func.func @transform_8(%arg0: i32) -> (i32, i32) {
    %c0_i32 = arith.constant 0 : i32
    %c0_i32_0 = arith.constant 0 : i32
    return %arg0, %c0_i32 : i32, i32
  }
}

module attributes {stable_mosaic.version = 11 : i64} {
  func.func @kernel(%arg0: i32, %arg1: memref<1xf32, #tpu.memory_space<smem>>, %arg2: memref<1xf32, #tpu.memory_space<smem>>, %arg3: memref<8x128xf32, #tpu.memory_space<vmem>>, %arg4: memref<8x256xf32, #tpu.memory_space<vmem>>, %arg5: memref<128x256xf32, #tpu.memory_space<vmem>>, %arg6: memref<256x1024xf32, #tpu.memory_space<vmem>>, %arg7: memref<1x1024xf32, #tpu.memory_space<vmem>>, %arg8: memref<1024x256xf32, #tpu.memory_space<vmem>>, %arg9: memref<8x256xf32, #tpu.memory_space<vmem>>) attributes {dimension_semantics = [#tpu.dimension_semantics<parallel>], iteration_bounds = array<i64: 1>, scalar_prefetch = 0 : i64, scratch_operands = 0 : i64, tpu.core_type = #tpu.core_type<tc>, window_params = [{transform_indices = @transform_0, window_bounds = array<i64: 1>}, {transform_indices = @transform_1, window_bounds = array<i64: 1>}, {transform_indices = @transform_2, window_bounds = array<i64: 8, 128>}, {transform_indices = @transform_3, window_bounds = array<i64: 8, 256>}, {pipeline_mode = #tpu.pipeline_mode<synchronous>, transform_indices = @transform_4, window_bounds = array<i64: 128, 256>}, {pipeline_mode = #tpu.pipeline_mode<synchronous>, transform_indices = @transform_5, window_bounds = array<i64: 256, 1024>}, {pipeline_mode = #tpu.pipeline_mode<synchronous>, transform_indices = @transform_6, window_bounds = array<i64: 1, 1024>}, {pipeline_mode = #tpu.pipeline_mode<synchronous>, transform_indices = @transform_7, window_bounds = array<i64: 1024, 256>}, {transform_indices = @transform_8, window_bounds = array<i64: 8, 256>}]} {
    %c0 = arith.constant 0 : index
    %c0_0 = arith.constant 0 : index
    %0 = vector.load %arg4[%c0, %c0_0] : memref<8x256xf32, #tpu.memory_space<vmem>>, vector<8x256xf32>
    %c0_1 = arith.constant 0 : index
    %c0_2 = arith.constant 0 : index
    %1 = vector.load %arg3[%c0_1, %c0_2] : memref<8x128xf32, #tpu.memory_space<vmem>>, vector<8x128xf32>
    %c0_3 = arith.constant 0 : index
    %c0_4 = arith.constant 0 : index
    %2 = vector.load %arg5[%c0_3, %c0_4] : memref<128x256xf32, #tpu.memory_space<vmem>>, vector<128x256xf32>
    %cst = arith.constant dense<0.000000e+00> : vector<8x128xf32>
    %3 = tpu.matmul %0, %2, %cst {dimension_numbers = #tpu.dot_dimension_numbers<[1], [1], [0], [0], [0, 0, 1, 0], [], []>} : vector<8x256xf32>, vector<128x256xf32>, vector<8x128xf32> -> vector<8x128xf32>
    %4 = arith.subf %1, %3 : vector<8x128xf32>
    %c0_5 = arith.constant 0 : index
    %5 = memref.load %arg1[%c0_5] : memref<1xf32, #tpu.memory_space<smem>>
    %cst_6 = arith.constant dense<0.000000e+00> : vector<8x256xf32>
    %6 = tpu.matmul %4, %2, %cst_6 {dimension_numbers = #tpu.dot_dimension_numbers<[1], [0], [0], [1], [0, 0, 1, 1], [], []>} : vector<8x128xf32>, vector<128x256xf32>, vector<8x256xf32> -> vector<8x256xf32>
    %7 = vector.broadcast %5 : f32 to vector<8x256xf32>
    %8 = arith.mulf %7, %6 : vector<8x256xf32>
    %9 = arith.addf %0, %8 : vector<8x256xf32>
    %c0_7 = arith.constant 0 : index
    %c0_8 = arith.constant 0 : index
    %10 = vector.load %arg6[%c0_7, %c0_8] : memref<256x1024xf32, #tpu.memory_space<vmem>>, vector<256x1024xf32>
    %cst_9 = arith.constant dense<0.000000e+00> : vector<8x1024xf32>
    %11 = tpu.matmul %9, %10, %cst_9 {dimension_numbers = #tpu.dot_dimension_numbers<[1], [0], [0], [1], [0, 0, 1, 1], [], []>} : vector<8x256xf32>, vector<256x1024xf32>, vector<8x1024xf32> -> vector<8x1024xf32>
    %c0_10 = arith.constant 0 : index
    %c0_11 = arith.constant 0 : index
    %12 = vector.load %arg7[%c0_10, %c0_11] : memref<1x1024xf32, #tpu.memory_space<vmem>>, vector<1x1024xf32>
    %13 = vector.broadcast %12 : vector<1x1024xf32> to vector<8x1024xf32>
    %14 = arith.addf %11, %13 : vector<8x1024xf32>
    %cst_12 = arith.constant 0.000000e+00 : f32
    %15 = vector.broadcast %cst_12 : f32 to vector<8x1024xf32>
    %16 = arith.maximumf %14, %15 : vector<8x1024xf32>
    %c0_13 = arith.constant 0 : index
    %c0_14 = arith.constant 0 : index
    %17 = vector.load %arg8[%c0_13, %c0_14] : memref<1024x256xf32, #tpu.memory_space<vmem>>, vector<1024x256xf32>
    %cst_15 = arith.constant dense<0.000000e+00> : vector<8x256xf32>
    %18 = tpu.matmul %16, %17, %cst_15 {dimension_numbers = #tpu.dot_dimension_numbers<[1], [0], [0], [1], [0, 0, 1, 1], [], []>} : vector<8x1024xf32>, vector<1024x256xf32>, vector<8x256xf32> -> vector<8x256xf32>
    %c0_16 = arith.constant 0 : index
    %19 = memref.load %arg2[%c0_16] : memref<1xf32, #tpu.memory_space<smem>>
    %20 = vector.broadcast %19 : f32 to vector<8x256xf32>
    %21 = arith.addf %18, %20 : vector<8x256xf32>
    %22 = arith.addf %21, %9 : vector<8x256xf32>
    %c0_17 = arith.constant 0 : index
    %c0_18 = arith.constant 0 : index
    %23 = vector.load %arg9[%c0_17, %c0_18] : memref<8x256xf32, #tpu.memory_space<vmem>>, vector<8x256xf32>
    tpu.vector_store %arg9[%c0_17, %c0_18], %22 {strides = array<i32>} : memref<8x256xf32, #tpu.memory_space<vmem>>, vector<8x256xf32>,
    return
  }
  func.func @transform_0(%arg0: i32) -> i32 {
    %c0_i32 = arith.constant 0 : i32
    %c0_i32_0 = arith.constant 0 : i32
    return %c0_i32 : i32
  }
  func.func @transform_1(%arg0: i32) -> i32 {
    %c0_i32 = arith.constant 0 : i32
    %c0_i32_0 = arith.constant 0 : i32
    return %c0_i32 : i32
  }
  func.func @transform_2(%arg0: i32) -> (i32, i32) {
    %c0_i32 = arith.constant 0 : i32
    %c0_i32_0 = arith.constant 0 : i32
    return %arg0, %c0_i32 : i32, i32
  }
  func.func @transform_3(%arg0: i32) -> (i32, i32) {
    %c0_i32 = arith.constant 0 : i32
    %c0_i32_0 = arith.constant 0 : i32
    return %arg0, %c0_i32 : i32, i32
  }
  func.func @transform_4(%arg0: i32) -> (i32, i32) {
    %c0_i32 = arith.constant 0 : i32
    %c0_i32_0 = arith.constant 0 : i32
    %c0_i32_1 = arith.constant 0 : i32
    return %c0_i32, %c0_i32_0 : i32, i32
  }
  func.func @transform_5(%arg0: i32) -> (i32, i32) {
    %c0_i32 = arith.constant 0 : i32
    %c0_i32_0 = arith.constant 0 : i32
    %c0_i32_1 = arith.constant 0 : i32
    return %c0_i32, %c0_i32_0 : i32, i32
  }
  func.func @transform_6(%arg0: i32) -> (i32, i32) {
    %c0_i32 = arith.constant 0 : i32
    %c0_i32_0 = arith.constant 0 : i32
    %c0_i32_1 = arith.constant 0 : i32
    return %c0_i32, %c0_i32_0 : i32, i32
  }
  func.func @transform_7(%arg0: i32) -> (i32, i32) {
    %c0_i32 = arith.constant 0 : i32
    %c0_i32_0 = arith.constant 0 : i32
    %c0_i32_1 = arith.constant 0 : i32
    return %c0_i32, %c0_i32_0 : i32, i32
  }
  func.func @transform_8(%arg0: i32) -> (i32, i32) {
    %c0_i32 = arith.constant 0 : i32
    %c0_i32_0 = arith.constant 0 : i32
    return %arg0, %c0_i32 : i32, i32
  }
}

</mosaic_0001>

<llo_original>
// kernel: tpu_custom_call.1
$region0: #{tpu_custom_call.1}
  #allocation0 [shape = 'u32[]', space=smem, size = 0x4, offset = 0x4, fixed_abs, tag = 'smem constant byte address 0x4 - core index']
  #allocation1 [shape = 'u32[144,128]{1,0:T(1,128)}', space=vmem, size = 0x12000, scoped, tag = 'internal scratch']
  #allocation2 [shape = 'f32[1]{0:T(128)S(6)}', space=smem, size = 0x200, scoped, tag = 'scoped memory for tpu_custom_call.1']
  #allocation3 [shape = 'f32[1]{0:T(128)S(6)}', space=smem, size = 0x200, scoped, tag = 'scoped memory for tpu_custom_call.1']
  %s0 = inlined_call_operand.<no memory space> [shape: f32[1], index: 0, kind: input, shape index: {}]
  %s1 = inlined_call_operand.<no memory space> [shape: f32[1], index: 1, kind: input, shape index: {}]
  %s2 = inlined_call_operand.hbm [shape: f32[8,128], index: 2, kind: input, shape index: {}]
  %s3 = inlined_call_operand.hbm [shape: f32[8,256], index: 3, kind: input, shape index: {}]
  %s4 = inlined_call_operand.hbm [shape: f32[128,256], index: 4, kind: input, shape index: {}]
  %s5 = inlined_call_operand.hbm [shape: f32[256,1024], index: 5, kind: input, shape index: {}]
  %s6 = inlined_call_operand.vmem [shape: f32[1,1024], index: 6, kind: input, shape index: {}]
  %s7 = inlined_call_operand.hbm [shape: f32[1024,256], index: 7, kind: input, shape index: {}]
  %s8 = inlined_call_operand.hbm [shape: f32[8,256], index: 8, kind: output, shape index: {}]
  %s9 = sld [smem:[#allocation0]]
  $region62: #{tpu_custom_call.1} parent=0
    _
  %s11 = ssub.s32 1, %s9
  %s12 = scalar_select 0, %s11, %s9
  %13 = sst [smem:[#allocation2]] %s0
  %14 = sst [smem:[#allocation3]] %s1
  $region1: #{tpu_custom_call.1} parent=0
    #allocation4 [shape = 'u8[4096]{0}', space=vmem, size = 0x1000, scoped, tag = 'input window, operand 2, single buffered']
    #allocation5 [shape = 's32[1]{0}', space=sflag, size = 0x4, scoped, tag = 'scoped memory for tpu_custom_call.1']
    #allocation6 [shape = 's32[1]{0}', space=sflag, size = 0x4, scoped, tag = 'scoped memory for tpu_custom_call.1']
    #allocation7 [shape = 'u8[8192]{0}', space=vmem, size = 0x2000, scoped, tag = 'input window, operand 3, single buffered']
    #allocation8 [shape = 's32[1]{0}', space=sflag, size = 0x4, scoped, tag = 'scoped memory for tpu_custom_call.1']
    #allocation9 [shape = 'u8[131072]{0}', space=vmem, size = 0x20000, scoped, tag = 'input window, operand 4, single buffered']
    #allocation10 [shape = 'u8[1048576]{0}', space=vmem, size = 0x100000, scoped, tag = 'input window, operand 5, single buffered']
    #allocation11 [shape = 's32[1]{0}', space=sflag, size = 0x4, scoped, tag = 'scoped memory for tpu_custom_call.1']
    #allocation12 [shape = 'u8[1048576]{0}', space=vmem, size = 0x100000, scoped, tag = 'input window, operand 7, single buffered']
    #allocation13 [shape = 'u8[8192]{0}', space=vmem, size = 0x2000, scoped, tag = 'output window, operand 0, single buffered']
    %15 = vsyncpa [#allocation5], 0
    %16 = vsyncpa [#allocation8], 0
    %17 = vsyncpa [#allocation11], 0
    %18 = vsyncpa [#allocation6], 0
    // Predicated region
    $region2: #{tpu_custom_call.1} parent=1 // pred_check
      _
    $region3: #{tpu_custom_call.1} parent=1 // pred_check_branch
      %20 = sbr.rel (0) target = $region5
    $region4: #{tpu_custom_call.1} parent=1 // pred_region
      _
    $region5: #{tpu_custom_call.1} parent=1 // pred_fallthru
      _
    // Predicated region
    $region6: #{tpu_custom_call.1} parent=1 // pred_check
      _
    $region7: #{tpu_custom_call.1} parent=1 // pred_check_branch
      %22 = sbr.rel (0) target = $region9
    $region8: #{tpu_custom_call.1} parent=1 // pred_region
      _
    $region9: #{tpu_custom_call.1} parent=1 // pred_fallthru
      _
    // Predicated region
    $region10: #{tpu_custom_call.1} parent=1 // pred_check
      _
    $region11: #{tpu_custom_call.1} parent=1 // pred_check_branch
      %24 = sbr.rel (0) target = $region13
    $region12: #{tpu_custom_call.1} parent=1 // pred_region
      %s26 = ssub.s32 128, 128
      %27 = vsyncadd [#allocation5], %s26
      %s29 = sshll.u32 [#allocation4], 4
      %s30 = int_to_ptr.vmem [resolvable:$true] %s29
      %32 = dma.hbm_to_vmem [thread:$0]  %s2, 128, %s30, [#allocation5]
    $region13: #{tpu_custom_call.1} parent=1 // pred_fallthru
      _
    // Predicated region
    $region14: #{tpu_custom_call.1} parent=1 // pred_check
      _
    $region15: #{tpu_custom_call.1} parent=1 // pred_check_branch
      %34 = sbr.rel (0) target = $region17
    $region16: #{tpu_custom_call.1} parent=1 // pred_region
      %s36 = ssub.s32 256, 256
      %37 = vsyncadd [#allocation8], %s36
      %s39 = sshll.u32 [#allocation7], 4
      %s40 = int_to_ptr.vmem [resolvable:$true] %s39
      %42 = dma.hbm_to_vmem [thread:$0]  %s3, 256, %s40, [#allocation8]
    $region17: #{tpu_custom_call.1} parent=1 // pred_fallthru
      _
    // Predicated region
    $region18: #{tpu_custom_call.1} parent=1 // pred_check
      _
    $region19: #{tpu_custom_call.1} parent=1 // pred_check_branch
      %44 = sbr.rel (0) target = $region21
    $region20: #{tpu_custom_call.1} parent=1 // pred_region
      %s46 = ssub.s32 4096, 4096
      %47 = vsyncadd [#allocation8], %s46
      %s48 = sshll.u32 [#allocation9], 4
      %s49 = int_to_ptr.vmem [resolvable:$true] %s48
      %54 = dma.hbm_to_vmem [thread:$0]  %s4, 4096, %s49, [#allocation8], 256, 256, 16
    $region21: #{tpu_custom_call.1} parent=1 // pred_fallthru
      _
    // Predicated region
    $region22: #{tpu_custom_call.1} parent=1 // pred_check
      _
    $region23: #{tpu_custom_call.1} parent=1 // pred_check_branch
      %56 = sbr.rel (0) target = $region25
    $region24: #{tpu_custom_call.1} parent=1 // pred_region
      %s58 = ssub.s32 32768, 32768
      %59 = vsyncadd [#allocation11], %s58
      %s60 = sshll.u32 [#allocation10], 4
      %s61 = int_to_ptr.vmem [resolvable:$true] %s60
      %66 = dma.hbm_to_vmem [thread:$0]  %s5, 32768, %s61, [#allocation11], 1024, 1024, 64
    $region25: #{tpu_custom_call.1} parent=1 // pred_fallthru
      _
    // Predicated region
    $region26: #{tpu_custom_call.1} parent=1 // pred_check
      _
    $region27: #{tpu_custom_call.1} parent=1 // pred_check_branch
      %68 = sbr.rel (0) target = $region29
    $region28: #{tpu_custom_call.1} parent=1 // pred_region
      _
    $region29: #{tpu_custom_call.1} parent=1 // pred_fallthru
      _
    // Predicated region
    $region30: #{tpu_custom_call.1} parent=1 // pred_check
      _
    $region31: #{tpu_custom_call.1} parent=1 // pred_check_branch
      %70 = sbr.rel (0) target = $region33
    $region32: #{tpu_custom_call.1} parent=1 // pred_region
      %s72 = ssub.s32 32768, 32768
      %73 = vsyncadd [#allocation11], %s72
      %s74 = sshll.u32 [#allocation12], 4
      %s75 = int_to_ptr.vmem [resolvable:$true] %s74
      %80 = dma.hbm_to_vmem [thread:$0]  %s7, 32768, %s75, [#allocation11], 256, 256, 16
    $region33: #{tpu_custom_call.1} parent=1 // pred_fallthru
      _
    // Predicated region
    $region34: #{tpu_custom_call.1} parent=1 // pred_check
      _
    $region35: #{tpu_custom_call.1} parent=1 // pred_check_branch
      %82 = sbr.rel (0) target = $region37
    $region36: #{tpu_custom_call.1} parent=1 // pred_region
      %83 = dma.done [#allocation5], 128
    $region37: #{tpu_custom_call.1} parent=1 // pred_fallthru
      _
    // Predicated region
    $region38: #{tpu_custom_call.1} parent=1 // pred_check
      _
    $region39: #{tpu_custom_call.1} parent=1 // pred_check_branch
      %85 = sbr.rel (0) target = $region41
    $region40: #{tpu_custom_call.1} parent=1 // pred_region
      %86 = dma.done [#allocation8], 256
    $region41: #{tpu_custom_call.1} parent=1 // pred_fallthru
      _
    // Predicated region
    $region42: #{tpu_custom_call.1} parent=1 // pred_check
      _
    $region43: #{tpu_custom_call.1} parent=1 // pred_check_branch
      %88 = sbr.rel (0) target = $region45
    $region44: #{tpu_custom_call.1} parent=1 // pred_region
      %89 = dma.done [#allocation8], 4096
    $region45: #{tpu_custom_call.1} parent=1 // pred_fallthru
      _
    // Predicated region
    $region46: #{tpu_custom_call.1} parent=1 // pred_check
      _
    $region47: #{tpu_custom_call.1} parent=1 // pred_check_branch
      %91 = sbr.rel (0) target = $region49
    $region48: #{tpu_custom_call.1} parent=1 // pred_region
      %92 = dma.done [#allocation11], 32768
    $region49: #{tpu_custom_call.1} parent=1 // pred_fallthru
      _
    // Predicated region
    $region50: #{tpu_custom_call.1} parent=1 // pred_check
      _
    $region51: #{tpu_custom_call.1} parent=1 // pred_check_branch
      %94 = sbr.rel (0) target = $region53
    $region52: #{tpu_custom_call.1} parent=1 // pred_region
      %95 = dma.done [#allocation11], 32768
    $region53: #{tpu_custom_call.1} parent=1 // pred_fallthru
      _
    %v96 = vld [vmem:[#allocation7] sm:$0xff]
    %v97 = vld [vmem:[#allocation7 + $0x8] sm:$0xff]
    %v98 = vld [vmem:[#allocation4] sm:$0xff]
    %v99 = vld [vmem:[#allocation9] sm:$0xff]
    %v100 = vld [vmem:[#allocation9 + $0x8] sm:$0xff]
    %v101 = vld [vmem:[#allocation9 + $0x10] sm:$0xff]
    %v102 = vld [vmem:[#allocation9 + $0x18] sm:$0xff]
    %v103 = vld [vmem:[#allocation9 + $0x20] sm:$0xff]
    %v104 = vld [vmem:[#allocation9 + $0x28] sm:$0xff]
    %v105 = vld [vmem:[#allocation9 + $0x30] sm:$0xff]
    %v106 = vld [vmem:[#allocation9 + $0x38] sm:$0xff]
    %v107 = vld [vmem:[#allocation9 + $0x40] sm:$0xff]
    %v108 = vld [vmem:[#allocation9 + $0x48] sm:$0xff]
    %v109 = vld [vmem:[#allocation9 + $0x50] sm:$0xff]
    %v110 = vld [vmem:[#allocation9 + $0x58] sm:$0xff]
    %v111 = vld [vmem:[#allocation9 + $0x60] sm:$0xff]
    %v112 = vld [vmem:[#allocation9 + $0x68] sm:$0xff]
    %v113 = vld [vmem:[#allocation9 + $0x70] sm:$0xff]
    %v114 = vld [vmem:[#allocation9 + $0x78] sm:$0xff]
    %v115 = vld [vmem:[#allocation9 + $0x80] sm:$0xff]
    %v116 = vld [vmem:[#allocation9 + $0x88] sm:$0xff]
    %v117 = vld [vmem:[#allocation9 + $0x90] sm:$0xff]
    %v118 = vld [vmem:[#allocation9 + $0x98] sm:$0xff]
    %v119 = vld [vmem:[#allocation9 + $0xa0] sm:$0xff]
    %v120 = vld [vmem:[#allocation9 + $0xa8] sm:$0xff]
    %v121 = vld [vmem:[#allocation9 + $0xb0] sm:$0xff]
    %v122 = vld [vmem:[#allocation9 + $0xb8] sm:$0xff]
    %v123 = vld [vmem:[#allocation9 + $0xc0] sm:$0xff]
    %v124 = vld [vmem:[#allocation9 + $0xc8] sm:$0xff]
    %v125 = vld [vmem:[#allocation9 + $0xd0] sm:$0xff]
    %v126 = vld [vmem:[#allocation9 + $0xd8] sm:$0xff]
    %v127 = vld [vmem:[#allocation9 + $0xe0] sm:$0xff]
    %v128 = vld [vmem:[#allocation9 + $0xe8] sm:$0xff]
    %v129 = vld [vmem:[#allocation9 + $0xf0] sm:$0xff]
    %v130 = vld [vmem:[#allocation9 + $0xf8] sm:$0xff]
    %131 = vmatprep.subr.mxu0 %v100
    %132 = vmatpush1.xpose.msra.mxu0 %v99
    %133 = vmatprep.subr.mxu0 %v102
    %134 = vmatpush1.xpose.msra.mxu0 %v101
    %135 = vmatprep.subr.mxu0 %v104
    %136 = vmatpush1.xpose.msra.mxu0 %v103
    %137 = vmatprep.subr.mxu0 %v106
    %138 = vmatpush1.xpose.msra.mxu0 %v105
    %139 = vmatprep.subr.mxu0 %v108
    %140 = vmatpush1.xpose.msra.mxu0 %v107
    %141 = vmatprep.subr.mxu0 %v110
    %142 = vmatpush1.xpose.msra.mxu0 %v109
    %143 = vmatprep.subr.mxu0 %v112
    %144 = vmatpush1.xpose.msra.mxu0 %v111
    %145 = vmatprep.subr.mxu0 %v114
    %146 = vmatpush1.xpose.msra.mxu0 %v113
    %147 = vmatprep.subr.mxu0 %v116
    %148 = vmatpush1.xpose.msra.mxu0 %v115
    %149 = vmatprep.subr.mxu0 %v118
    %150 = vmatpush1.xpose.msra.mxu0 %v117
    %151 = vmatprep.subr.mxu0 %v120
    %152 = vmatpush1.xpose.msra.mxu0 %v119
    %153 = vmatprep.subr.mxu0 %v122
    %154 = vmatpush1.xpose.msra.mxu0 %v121
    %155 = vmatprep.subr.mxu0 %v124
    %156 = vmatpush1.xpose.msra.mxu0 %v123
    %157 = vmatprep.subr.mxu0 %v126
    %158 = vmatpush1.xpose.msra.mxu0 %v125
    %159 = vmatprep.subr.mxu0 %v128
    %160 = vmatpush1.xpose.msra.mxu0 %v127
    %161 = vmatprep.subr.mxu0 %v130
    %162 = vmatpush1.xpose.msra.mxu0 %v129
    %163 = vmatprep.subr.mxu0 0.0
    %164 = vmatpush1.xpose.msra.mxu0 0.0
    %165 = vmatprep.subr.mxu0 0.0
    %166 = vmatpush1.xpose.msra.mxu0 0.0
    %167 = vmatprep.subr.mxu0 0.0
    %168 = vmatpush1.xpose.msra.mxu0 0.0
    %169 = vmatprep.subr.mxu0 0.0
    %170 = vmatpush1.xpose.msra.mxu0 0.0
    %171 = vmatprep.subr.mxu0 0.0
    %172 = vmatpush1.xpose.msra.mxu0 0.0
    %173 = vmatprep.subr.mxu0 0.0
    %174 = vmatpush1.xpose.msra.mxu0 0.0
    %175 = vmatprep.subr.mxu0 0.0
    %176 = vmatpush1.xpose.msra.mxu0 0.0
    %177 = vmatprep.subr.mxu0 0.0
    %178 = vmatpush1.xpose.msra.mxu0 0.0
    %179 = vmatprep.subr.mxu0 0.0
    %180 = vmatpush1.xpose.msra.mxu0 0.0
    %181 = vmatprep.subr.mxu0 0.0
    %182 = vmatpush1.xpose.msra.mxu0 0.0
    %183 = vmatprep.subr.mxu0 0.0
    %184 = vmatpush1.xpose.msra.mxu0 0.0
    %185 = vmatprep.subr.mxu0 0.0
    %186 = vmatpush1.xpose.msra.mxu0 0.0
    %187 = vmatprep.subr.mxu0 0.0
    %188 = vmatpush1.xpose.msra.mxu0 0.0
    %189 = vmatprep.subr.mxu0 0.0
    %190 = vmatpush1.xpose.msra.mxu0 0.0
    %191 = vmatprep.subr.mxu0 0.0
    %192 = vmatpush1.xpose.msra.mxu0 0.0
    %193 = vmatprep.subr.mxu0 0.0
    %194 = vmatpush1.xpose.msra.mxu0 0.0
    %195 = vmatprep.mubr.f32.mxu0 %v97
    %196 = vmatmul.mubr.f32.gmra.mrb[0].mxu0 %v96
    %v197 = vpop.f32.mrb[0].mxu0
    %v198 = vadd.f32 0.0, %v197
    %v199 = vpop.f32.mrb[0].mxu0
    %200 = vdwg.mxu0
    %v201 = vsub.f32 %v98, %v198
    %s202 = sld [smem:[#allocation2]]
    %203 = vmatprep.subr.mxu0 %v100
    %204 = vmatpush1.msra.mxu0 %v99
    %205 = vmatprep.subr.mxu0 %v102
    %206 = vmatpush1.msra.mxu0 %v101
    %207 = vmatprep.subr.mxu0 %v104
    %208 = vmatpush1.msra.mxu0 %v103
    %209 = vmatprep.subr.mxu0 %v106
    %210 = vmatpush1.msra.mxu0 %v105
    %211 = vmatprep.subr.mxu0 %v108
    %212 = vmatpush1.msra.mxu0 %v107
    %213 = vmatprep.subr.mxu0 %v110
    %214 = vmatpush1.msra.mxu0 %v109
    %215 = vmatprep.subr.mxu0 %v112
    %216 = vmatpush1.msra.mxu0 %v111
    %217 = vmatprep.subr.mxu0 %v114
    %218 = vmatpush1.msra.mxu0 %v113
    %219 = vmatprep.subr.mxu0 %v116
    %220 = vmatpush1.msra.mxu0 %v115
    %221 = vmatprep.subr.mxu0 %v118
    %222 = vmatpush1.msra.mxu0 %v117
    %223 = vmatprep.subr.mxu0 %v120
    %224 = vmatpush1.msra.mxu0 %v119
    %225 = vmatprep.subr.mxu0 %v122
    %226 = vmatpush1.msra.mxu0 %v121
    %227 = vmatprep.subr.mxu0 %v124
    %228 = vmatpush1.msra.mxu0 %v123
    %229 = vmatprep.subr.mxu0 %v126
    %230 = vmatpush1.msra.mxu0 %v125
    %231 = vmatprep.subr.mxu0 %v128
    %232 = vmatpush1.msra.mxu0 %v127
    %233 = vmatprep.subr.mxu0 %v130
    %234 = vmatpush1.msra.mxu0 %v129
    %235 = vmatprep.subr.mxu0 0.0
    %236 = vmatpush1.msra.mxu0 0.0
    %237 = vmatprep.subr.mxu0 0.0
    %238 = vmatpush1.msra.mxu0 0.0
    %239 = vmatprep.subr.mxu0 0.0
    %240 = vmatpush1.msra.mxu0 0.0
    %241 = vmatprep.subr.mxu0 0.0
    %242 = vmatpush1.msra.mxu0 0.0
    %243 = vmatprep.subr.mxu0 0.0
    %244 = vmatpush1.msra.mxu0 0.0
    %245 = vmatprep.subr.mxu0 0.0
    %246 = vmatpush1.msra.mxu0 0.0
    %247 = vmatprep.subr.mxu0 0.0
    %248 = vmatpush1.msra.mxu0 0.0
    %249 = vmatprep.subr.mxu0 0.0
    %250 = vmatpush1.msra.mxu0 0.0
    %251 = vmatprep.subr.mxu0 0.0
    %252 = vmatpush1.msra.mxu0 0.0
    %253 = vmatprep.subr.mxu0 0.0
    %254 = vmatpush1.msra.mxu0 0.0
    %255 = vmatprep.subr.mxu0 0.0
    %256 = vmatpush1.msra.mxu0 0.0
    %257 = vmatprep.subr.mxu0 0.0
    %258 = vmatpush1.msra.mxu0 0.0
    %259 = vmatprep.subr.mxu0 0.0
    %260 = vmatpush1.msra.mxu0 0.0
    %261 = vmatprep.subr.mxu0 0.0
    %262 = vmatpush1.msra.mxu0 0.0
    %263 = vmatprep.subr.mxu0 0.0
    %264 = vmatpush1.msra.mxu0 0.0
    %265 = vmatprep.subr.mxu0 0.0
    %266 = vmatpush1.msra.mxu0 0.0
    %267 = vmatprep.mubr.f32.mxu0 0.0
    %268 = vmatmul.mubr.f32.gmra.mrb[0].mxu0 %v201
    %v269 = vpop.f32.mrb[0].mxu0
    %v270 = vadd.f32 0.0, %v269
    %v271 = vpop.f32.mrb[0].mxu0
    %v272 = vadd.f32 0.0, %v271
    %273 = vdwg.mxu0
    %v274 = vstv %s202
    %v275 = vmul.f32 %v274, %v270
    %v276 = vmul.f32 %v274, %v272
    %v277 = vadd.f32 %v96, %v275
    %v278 = vadd.f32 %v97, %v276
    %v279 = vld [vmem:[#allocation10] sm:$0xff]
    %v280 = vld [vmem:[#allocation10 + $0x8] sm:$0xff]
    %v281 = vld [vmem:[#allocation10 + $0x10] sm:$0xff]
    %v282 = vld [vmem:[#allocation10 + $0x18] sm:$0xff]
    %v283 = vld [vmem:[#allocation10 + $0x20] sm:$0xff]
    %v284 = vld [vmem:[#allocation10 + $0x28] sm:$0xff]
    %v285 = vld [vmem:[#allocation10 + $0x30] sm:$0xff]
    %v286 = vld [vmem:[#allocation10 + $0x38] sm:$0xff]
    %v287 = vld [vmem:[#allocation10 + $0x40] sm:$0xff]
    %v288 = vld [vmem:[#allocation10 + $0x48] sm:$0xff]
    %v289 = vld [vmem:[#allocation10 + $0x50] sm:$0xff]
    %v290 = vld [vmem:[#allocation10 + $0x58] sm:$0xff]
    %v291 = vld [vmem:[#allocation10 + $0x60] sm:$0xff]
    %v292 = vld [vmem:[#allocation10 + $0x68] sm:$0xff]
    %v293 = vld [vmem:[#allocation10 + $0x70] sm:$0xff]
    %v294 = vld [vmem:[#allocation10 + $0x78] sm:$0xff]
    %v295 = vld [vmem:[#allocation10 + $0x80] sm:$0xff]
    %v296 = vld [vmem:[#allocation10 + $0x88] sm:$0xff]
    %v297 = vld [vmem:[#allocation10 + $0x90] sm:$0xff]
    %v298 = vld [vmem:[#allocation10 + $0x98] sm:$0xff]
    %v299 = vld [vmem:[#allocation10 + $0xa0] sm:$0xff]
    %v300 = vld [vmem:[#allocation10 + $0xa8] sm:$0xff]
    %v301 = vld [vmem:[#allocation10 + $0xb0] sm:$0xff]
    %v302 = vld [vmem:[#allocation10 + $0xb8] sm:$0xff]
    %v303 = vld [vmem:[#allocation10 + $0xc0] sm:$0xff]
    %v304 = vld [vmem:[#allocation10 + $0xc8] sm:$0xff]
    %v305 = vld [vmem:[#allocation10 + $0xd0] sm:$0xff]
    %v306 = vld [vmem:[#allocation10 + $0xd8] sm:$0xff]
    %v307 = vld [vmem:[#allocation10 + $0xe0] sm:$0xff]
    %v308 = vld [vmem:[#allocation10 + $0xe8] sm:$0xff]
    %v309 = vld [vmem:[#allocation10 + $0xf0] sm:$0xff]
    %v310 = vld [vmem:[#allocation10 + $0xf8] sm:$0xff]
    %v311 = vld [vmem:[#allocation10 + $0x100] sm:$0xff]
    %v312 = vld [vmem:[#allocation10 + $0x108] sm:$0xff]
    %v313 = vld [vmem:[#allocation10 + $0x110] sm:$0xff]
    %v314 = vld [vmem:[#allocation10 + $0x118] sm:$0xff]
    %v315 = vld [vmem:[#allocation10 + $0x120] sm:$0xff]
    %v316 = vld [vmem:[#allocation10 + $0x128] sm:$0xff]
    %v317 = vld [vmem:[#allocation10 + $0x130] sm:$0xff]
    %v318 = vld [vmem:[#allocation10 + $0x138] sm:$0xff]
    %v319 = vld [vmem:[#allocation10 + $0x140] sm:$0xff]
    %v320 = vld [vmem:[#allocation10 + $0x148] sm:$0xff]
    %v321 = vld [vmem:[#allocation10 + $0x150] sm:$0xff]
    %v322 = vld [vmem:[#allocation10 + $0x158] sm:$0xff]
    %v323 = vld [vmem:[#allocation10 + $0x160] sm:$0xff]
    %v324 = vld [vmem:[#allocation10 + $0x168] sm:$0xff]
    %v325 = vld [vmem:[#allocation10 + $0x170] sm:$0xff]
    %v326 = vld [vmem:[#allocation10 + $0x178] sm:$0xff]
    %v327 = vld [vmem:[#allocation10 + $0x180] sm:$0xff]
    %v328 = vld [vmem:[#allocation10 + $0x188] sm:$0xff]
    %v329 = vld [vmem:[#allocation10 + $0x190] sm:$0xff]
    %v330 = vld [vmem:[#allocation10 + $0x198] sm:$0xff]
    %v331 = vld [vmem:[#allocation10 + $0x1a0] sm:$0xff]
    %v332 = vld [vmem:[#allocation10 + $0x1a8] sm:$0xff]
    %v333 = vld [vmem:[#allocation10 + $0x1b0] sm:$0xff]
    %v334 = vld [vmem:[#allocation10 + $0x1b8] sm:$0xff]
    %v335 = vld [vmem:[#allocation10 + $0x1c0] sm:$0xff]
    %v336 = vld [vmem:[#allocation10 + $0x1c8] sm:$0xff]
    %v337 = vld [vmem:[#allocation10 + $0x1d0] sm:$0xff]
    %v338 = vld [vmem:[#allocation10 + $0x1d8] sm:$0xff]
    %v339 = vld [vmem:[#allocation10 + $0x1e0] sm:$0xff]
    %v340 = vld [vmem:[#allocation10 + $0x1e8] sm:$0xff]
    %v341 = vld [vmem:[#allocation10 + $0x1f0] sm:$0xff]
    %v342 = vld [vmem:[#allocation10 + $0x1f8] sm:$0xff]
    %v343 = vld [vmem:[#allocation10 + $0x200] sm:$0xff]
    %v344 = vld [vmem:[#allocation10 + $0x208] sm:$0xff]
    %v345 = vld [vmem:[#allocation10 + $0x210] sm:$0xff]
    %v346 = vld [vmem:[#allocation10 + $0x218] sm:$0xff]
    %v347 = vld [vmem:[#allocation10 + $0x220] sm:$0xff]
    %v348 = vld [vmem:[#allocation10 + $0x228] sm:$0xff]
    %v349 = vld [vmem:[#allocation10 + $0x230] sm:$0xff]
    %v350 = vld [vmem:[#allocation10 + $0x238] sm:$0xff]
    %v351 = vld [vmem:[#allocation10 + $0x240] sm:$0xff]
    %v352 = vld [vmem:[#allocation10 + $0x248] sm:$0xff]
    %v353 = vld [vmem:[#allocation10 + $0x250] sm:$0xff]
    %v354 = vld [vmem:[#allocation10 + $0x258] sm:$0xff]
    %v355 = vld [vmem:[#allocation10 + $0x260] sm:$0xff]
    %v356 = vld [vmem:[#allocation10 + $0x268] sm:$0xff]
    %v357 = vld [vmem:[#allocation10 + $0x270] sm:$0xff]
    %v358 = vld [vmem:[#allocation10 + $0x278] sm:$0xff]
    %v359 = vld [vmem:[#allocation10 + $0x280] sm:$0xff]
    %v360 = vld [vmem:[#allocation10 + $0x288] sm:$0xff]
    %v361 = vld [vmem:[#allocation10 + $0x290] sm:$0xff]
    %v362 = vld [vmem:[#allocation10 + $0x298] sm:$0xff]
    %v363 = vld [vmem:[#allocation10 + $0x2a0] sm:$0xff]
    %v364 = vld [vmem:[#allocation10 + $0x2a8] sm:$0xff]
    %v365 = vld [vmem:[#allocation10 + $0x2b0] sm:$0xff]
    %v366 = vld [vmem:[#allocation10 + $0x2b8] sm:$0xff]
    %v367 = vld [vmem:[#allocation10 + $0x2c0] sm:$0xff]
    %v368 = vld [vmem:[#allocation10 + $0x2c8] sm:$0xff]
    %v369 = vld [vmem:[#allocation10 + $0x2d0] sm:$0xff]
    %v370 = vld [vmem:[#allocation10 + $0x2d8] sm:$0xff]
    %v371 = vld [vmem:[#allocation10 + $0x2e0] sm:$0xff]
    %v372 = vld [vmem:[#allocation10 + $0x2e8] sm:$0xff]
    %v373 = vld [vmem:[#allocation10 + $0x2f0] sm:$0xff]
    %v374 = vld [vmem:[#allocation10 + $0x2f8] sm:$0xff]
    %v375 = vld [vmem:[#allocation10 + $0x300] sm:$0xff]
    %v376 = vld [vmem:[#allocation10 + $0x308] sm:$0xff]
    %v377 = vld [vmem:[#allocation10 + $0x310] sm:$0xff]
    %v378 = vld [vmem:[#allocation10 + $0x318] sm:$0xff]
    %v379 = vld [vmem:[#allocation10 + $0x320] sm:$0xff]
    %v380 = vld [vmem:[#allocation10 + $0x328] sm:$0xff]
    %v381 = vld [vmem:[#allocation10 + $0x330] sm:$0xff]
    %v382 = vld [vmem:[#allocation10 + $0x338] sm:$0xff]
    %v383 = vld [vmem:[#allocation10 + $0x340] sm:$0xff]
    %v384 = vld [vmem:[#allocation10 + $0x348] sm:$0xff]
    %v385 = vld [vmem:[#allocation10 + $0x350] sm:$0xff]
    %v386 = vld [vmem:[#allocation10 + $0x358] sm:$0xff]
    %v387 = vld [vmem:[#allocation10 + $0x360] sm:$0xff]
    %v388 = vld [vmem:[#allocation10 + $0x368] sm:$0xff]
    %v389 = vld [vmem:[#allocation10 + $0x370] sm:$0xff]
    %v390 = vld [vmem:[#allocation10 + $0x378] sm:$0xff]
    %v391 = vld [vmem:[#allocation10 + $0x380] sm:$0xff]
    %v392 = vld [vmem:[#allocation10 + $0x388] sm:$0xff]
    %v393 = vld [vmem:[#allocation10 + $0x390] sm:$0xff]
    %v394 = vld [vmem:[#allocation10 + $0x398] sm:$0xff]
    %v395 = vld [vmem:[#allocation10 + $0x3a0] sm:$0xff]
    %v396 = vld [vmem:[#allocation10 + $0x3a8] sm:$0xff]
    %v397 = vld [vmem:[#allocation10 + $0x3b0] sm:$0xff]
    %v398 = vld [vmem:[#allocation10 + $0x3b8] sm:$0xff]
    %v399 = vld [vmem:[#allocation10 + $0x3c0] sm:$0xff]
    %v400 = vld [vmem:[#allocation10 + $0x3c8] sm:$0xff]
    %v401 = vld [vmem:[#allocation10 + $0x3d0] sm:$0xff]
    %v402 = vld [vmem:[#allocation10 + $0x3d8] sm:$0xff]
    %v403 = vld [vmem:[#allocation10 + $0x3e0] sm:$0xff]
    %v404 = vld [vmem:[#allocation10 + $0x3e8] sm:$0xff]
    %v405 = vld [vmem:[#allocation10 + $0x3f0] sm:$0xff]
    %v406 = vld [vmem:[#allocation10 + $0x3f8] sm:$0xff]
    %v407 = vld [vmem:[#allocation10 + $0x400] sm:$0xff]
    %v408 = vld [vmem:[#allocation10 + $0x408] sm:$0xff]
    %v409 = vld [vmem:[#allocation10 + $0x410] sm:$0xff]
    %v410 = vld [vmem:[#allocation10 + $0x418] sm:$0xff]
    %v411 = vld [vmem:[#allocation10 + $0x420] sm:$0xff]
    %v412 = vld [vmem:[#allocation10 + $0x428] sm:$0xff]
    %v413 = vld [vmem:[#allocation10 + $0x430] sm:$0xff]
    %v414 = vld [vmem:[#allocation10 + $0x438] sm:$0xff]
    %v415 = vld [vmem:[#allocation10 + $0x440] sm:$0xff]
    %v416 = vld [vmem:[#allocation10 + $0x448] sm:$0xff]
    %v417 = vld [vmem:[#allocation10 + $0x450] sm:$0xff]
    %v418 = vld [vmem:[#allocation10 + $0x458] sm:$0xff]
    %v419 = vld [vmem:[#allocation10 + $0x460] sm:$0xff]
    %v420 = vld [vmem:[#allocation10 + $0x468] sm:$0xff]
    %v421 = vld [vmem:[#allocation10 + $0x470] sm:$0xff]
    %v422 = vld [vmem:[#allocation10 + $0x478] sm:$0xff]
    %v423 = vld [vmem:[#allocation10 + $0x480] sm:$0xff]
    %v424 = vld [vmem:[#allocation10 + $0x488] sm:$0xff]
    %v425 = vld [vmem:[#allocation10 + $0x490] sm:$0xff]
    %v426 = vld [vmem:[#allocation10 + $0x498] sm:$0xff]
    %v427 = vld [vmem:[#allocation10 + $0x4a0] sm:$0xff]
    %v428 = vld [vmem:[#allocation10 + $0x4a8] sm:$0xff]
    %v429 = vld [vmem:[#allocation10 + $0x4b0] sm:$0xff]
    %v430 = vld [vmem:[#allocation10 + $0x4b8] sm:$0xff]
    %v431 = vld [vmem:[#allocation10 + $0x4c0] sm:$0xff]
    %v432 = vld [vmem:[#allocation10 + $0x4c8] sm:$0xff]
    %v433 = vld [vmem:[#allocation10 + $0x4d0] sm:$0xff]
    %v434 = vld [vmem:[#allocation10 + $0x4d8] sm:$0xff]
    %v435 = vld [vmem:[#allocation10 + $0x4e0] sm:$0xff]
    %v436 = vld [vmem:[#allocation10 + $0x4e8] sm:$0xff]
    %v437 = vld [vmem:[#allocation10 + $0x4f0] sm:$0xff]
    %v438 = vld [vmem:[#allocation10 + $0x4f8] sm:$0xff]
    %v439 = vld [vmem:[#allocation10 + $0x500] sm:$0xff]
    %v440 = vld [vmem:[#allocation10 + $0x508] sm:$0xff]
    %v441 = vld [vmem:[#allocation10 + $0x510] sm:$0xff]
    %v442 = vld [vmem:[#allocation10 + $0x518] sm:$0xff]
    %v443 = vld [vmem:[#allocation10 + $0x520] sm:$0xff]
    %v444 = vld [vmem:[#allocation10 + $0x528] sm:$0xff]
    %v445 = vld [vmem:[#allocation10 + $0x530] sm:$0xff]
    %v446 = vld [vmem:[#allocation10 + $0x538] sm:$0xff]
    %v447 = vld [vmem:[#allocation10 + $0x540] sm:$0xff]
    %v448 = vld [vmem:[#allocation10 + $0x548] sm:$0xff]
    %v449 = vld [vmem:[#allocation10 + $0x550] sm:$0xff]
    %v450 = vld [vmem:[#allocation10 + $0x558] sm:$0xff]
    %v451 = vld [vmem:[#allocation10 + $0x560] sm:$0xff]
    %v452 = vld [vmem:[#allocation10 + $0x568] sm:$0xff]
    %v453 = vld [vmem:[#allocation10 + $0x570] sm:$0xff]
    %v454 = vld [vmem:[#allocation10 + $0x578] sm:$0xff]
    %v455 = vld [vmem:[#allocation10 + $0x580] sm:$0xff]
    %v456 = vld [vmem:[#allocation10 + $0x588] sm:$0xff]
    %v457 = vld [vmem:[#allocation10 + $0x590] sm:$0xff]
    %v458 = vld [vmem:[#allocation10 + $0x598] sm:$0xff]
    %v459 = vld [vmem:[#allocation10 + $0x5a0] sm:$0xff]
    %v460 = vld [vmem:[#allocation10 + $0x5a8] sm:$0xff]
    %v461 = vld [vmem:[#allocation10 + $0x5b0] sm:$0xff]
    %v462 = vld [vmem:[#allocation10 + $0x5b8] sm:$0xff]
    %v463 = vld [vmem:[#allocation10 + $0x5c0] sm:$0xff]
    %v464 = vld [vmem:[#allocation10 + $0x5c8] sm:$0xff]
    %v465 = vld [vmem:[#allocation10 + $0x5d0] sm:$0xff]
    %v466 = vld [vmem:[#allocation10 + $0x5d8] sm:$0xff]
    %v467 = vld [vmem:[#allocation10 + $0x5e0] sm:$0xff]
    %v468 = vld [vmem:[#allocation10 + $0x5e8] sm:$0xff]
    %v469 = vld [vmem:[#allocation10 + $0x5f0] sm:$0xff]
    %v470 = vld [vmem:[#allocation10 + $0x5f8] sm:$0xff]
    %v471 = vld [vmem:[#allocation10 + $0x600] sm:$0xff]
    %v472 = vld [vmem:[#allocation10 + $0x608] sm:$0xff]
    %v473 = vld [vmem:[#allocation10 + $0x610] sm:$0xff]
    %v474 = vld [vmem:[#allocation10 + $0x618] sm:$0xff]
    %v475 = vld [vmem:[#allocation10 + $0x620] sm:$0xff]
    %v476 = vld [vmem:[#allocation10 + $0x628] sm:$0xff]
    %v477 = vld [vmem:[#allocation10 + $0x630] sm:$0xff]
    %v478 = vld [vmem:[#allocation10 + $0x638] sm:$0xff]
    %v479 = vld [vmem:[#allocation10 + $0x640] sm:$0xff]
    %v480 = vld [vmem:[#allocation10 + $0x648] sm:$0xff]
    %v481 = vld [vmem:[#allocation10 + $0x650] sm:$0xff]
    %v482 = vld [vmem:[#allocation10 + $0x658] sm:$0xff]
    %v483 = vld [vmem:[#allocation10 + $0x660] sm:$0xff]
    %v484 = vld [vmem:[#allocation10 + $0x668] sm:$0xff]
    %v485 = vld [vmem:[#allocation10 + $0x670] sm:$0xff]
    %v486 = vld [vmem:[#allocation10 + $0x678] sm:$0xff]
    %v487 = vld [vmem:[#allocation10 + $0x680] sm:$0xff]
    %v488 = vld [vmem:[#allocation10 + $0x688] sm:$0xff]
    %v489 = vld [vmem:[#allocation10 + $0x690] sm:$0xff]
    %v490 = vld [vmem:[#allocation10 + $0x698] sm:$0xff]
    %v491 = vld [vmem:[#allocation10 + $0x6a0] sm:$0xff]
    %v492 = vld [vmem:[#allocation10 + $0x6a8] sm:$0xff]
    %v493 = vld [vmem:[#allocation10 + $0x6b0] sm:$0xff]
    %v494 = vld [vmem:[#allocation10 + $0x6b8] sm:$0xff]
    %v495 = vld [vmem:[#allocation10 + $0x6c0] sm:$0xff]
    %v496 = vld [vmem:[#allocation10 + $0x6c8] sm:$0xff]
    %v497 = vld [vmem:[#allocation10 + $0x6d0] sm:$0xff]
    %v498 = vld [vmem:[#allocation10 + $0x6d8] sm:$0xff]
    %v499 = vld [vmem:[#allocation10 + $0x6e0] sm:$0xff]
    %v500 = vld [vmem:[#allocation10 + $0x6e8] sm:$0xff]
    %v501 = vld [vmem:[#allocation10 + $0x6f0] sm:$0xff]
    %v502 = vld [vmem:[#allocation10 + $0x6f8] sm:$0xff]
    %v503 = vld [vmem:[#allocation10 + $0x700] sm:$0xff]
    %v504 = vld [vmem:[#allocation10 + $0x708] sm:$0xff]
    %v505 = vld [vmem:[#allocation10 + $0x710] sm:$0xff]
    %v506 = vld [vmem:[#allocation10 + $0x718] sm:$0xff]
    %v507 = vld [vmem:[#allocation10 + $0x720] sm:$0xff]
    %v508 = vld [vmem:[#allocation10 + $0x728] sm:$0xff]
    %v509 = vld [vmem:[#allocation10 + $0x730] sm:$0xff]
    %v510 = vld [vmem:[#allocation10 + $0x738] sm:$0xff]
    %v511 = vld [vmem:[#allocation10 + $0x740] sm:$0xff]
    %v512 = vld [vmem:[#allocation10 + $0x748] sm:$0xff]
    %v513 = vld [vmem:[#allocation10 + $0x750] sm:$0xff]
    %v514 = vld [vmem:[#allocation10 + $0x758] sm:$0xff]
    %v515 = vld [vmem:[#allocation10 + $0x760] sm:$0xff]
    %v516 = vld [vmem:[#allocation10 + $0x768] sm:$0xff]
    %v517 = vld [vmem:[#allocation10 + $0x770] sm:$0xff]
    %v518 = vld [vmem:[#allocation10 + $0x778] sm:$0xff]
    %v519 = vld [vmem:[#allocation10 + $0x780] sm:$0xff]
    %v520 = vld [vmem:[#allocation10 + $0x788] sm:$0xff]
    %v521 = vld [vmem:[#allocation10 + $0x790] sm:$0xff]
    %v522 = vld [vmem:[#allocation10 + $0x798] sm:$0xff]
    %v523 = vld [vmem:[#allocation10 + $0x7a0] sm:$0xff]
    %v524 = vld [vmem:[#allocation10 + $0x7a8] sm:$0xff]
    %v525 = vld [vmem:[#allocation10 + $0x7b0] sm:$0xff]
    %v526 = vld [vmem:[#allocation10 + $0x7b8] sm:$0xff]
    %v527 = vld [vmem:[#allocation10 + $0x7c0] sm:$0xff]
    %v528 = vld [vmem:[#allocation10 + $0x7c8] sm:$0xff]
    %v529 = vld [vmem:[#allocation10 + $0x7d0] sm:$0xff]
    %v530 = vld [vmem:[#allocation10 + $0x7d8] sm:$0xff]
    %v531 = vld [vmem:[#allocation10 + $0x7e0] sm:$0xff]
    %v532 = vld [vmem:[#allocation10 + $0x7e8] sm:$0xff]
    %v533 = vld [vmem:[#allocation10 + $0x7f0] sm:$0xff]
    %v534 = vld [vmem:[#allocation10 + $0x7f8] sm:$0xff]
    %v535 = vld [vmem:[%s6] sm:$0xff]
    %v537 = vlaneseq
    %v538 = vshrl.u32 %v537, 7
    %v539 = vsub.s32 0, %v538
    %v540 = vrot.slane %v535, %v539
    %v541 = vlaneseq
    %v542 = vshrl.u32 %v541, 7
    %v543 = vsub.s32 1, %v542
    %v544 = vrot.slane %v535, %v543
    %v545 = vlaneseq
    %v546 = vshrl.u32 %v545, 7
    %v547 = vsub.s32 2, %v546
    %v548 = vrot.slane %v535, %v547
    %v549 = vlaneseq
    %v550 = vshrl.u32 %v549, 7
    %v551 = vsub.s32 3, %v550
    %v552 = vrot.slane %v535, %v551
    %v553 = vlaneseq
    %v554 = vshrl.u32 %v553, 7
    %v555 = vsub.s32 4, %v554
    %v556 = vrot.slane %v535, %v555
    %v557 = vlaneseq
    %v558 = vshrl.u32 %v557, 7
    %v559 = vsub.s32 5, %v558
    %v560 = vrot.slane %v535, %v559
    %v561 = vlaneseq
    %v562 = vshrl.u32 %v561, 7
    %v563 = vsub.s32 6, %v562
    %v564 = vrot.slane %v535, %v563
    %v565 = vlaneseq
    %v566 = vshrl.u32 %v565, 7
    %v567 = vsub.s32 7, %v566
    %v568 = vrot.slane %v535, %v567
    %577 = vmatprep.subr.mxu0 %v280
    %578 = vmatpush1.msra.mxu0 %v279
    %579 = vmatprep.subr.mxu0 %v288
    %580 = vmatpush1.msra.mxu0 %v287
    %581 = vmatprep.subr.mxu0 %v296
    %582 = vmatpush1.msra.mxu0 %v295
    %583 = vmatprep.subr.mxu0 %v304
    %584 = vmatpush1.msra.mxu0 %v303
    %585 = vmatprep.subr.mxu0 %v312
    %586 = vmatpush1.msra.mxu0 %v311
    %587 = vmatprep.subr.mxu0 %v320
    %588 = vmatpush1.msra.mxu0 %v319
    %589 = vmatprep.subr.mxu0 %v328
    %590 = vmatpush1.msra.mxu0 %v327
    %591 = vmatprep.subr.mxu0 %v336
    %592 = vmatpush1.msra.mxu0 %v335
    %593 = vmatprep.subr.mxu0 %v344
    %594 = vmatpush1.msra.mxu0 %v343
    %595 = vmatprep.subr.mxu0 %v352
    %596 = vmatpush1.msra.mxu0 %v351
    %597 = vmatprep.subr.mxu0 %v360
    %598 = vmatpush1.msra.mxu0 %v359
    %599 = vmatprep.subr.mxu0 %v368
    %600 = vmatpush1.msra.mxu0 %v367
    %601 = vmatprep.subr.mxu0 %v376
    %602 = vmatpush1.msra.mxu0 %v375
    %603 = vmatprep.subr.mxu0 %v384
    %604 = vmatpush1.msra.mxu0 %v383
    %605 = vmatprep.subr.mxu0 %v392
    %606 = vmatpush1.msra.mxu0 %v391
    %607 = vmatprep.subr.mxu0 %v400
    %608 = vmatpush1.msra.mxu0 %v399
    %609 = vmatprep.subr.mxu0 %v408
    %610 = vmatpush1.msra.mxu0 %v407
    %611 = vmatprep.subr.mxu0 %v416
    %612 = vmatpush1.msra.mxu0 %v415
    %613 = vmatprep.subr.mxu0 %v424
    %614 = vmatpush1.msra.mxu0 %v423
    %615 = vmatprep.subr.mxu0 %v432
    %616 = vmatpush1.msra.mxu0 %v431
    %617 = vmatprep.subr.mxu0 %v440
    %618 = vmatpush1.msra.mxu0 %v439
    %619 = vmatprep.subr.mxu0 %v448
    %620 = vmatpush1.msra.mxu0 %v447
    %621 = vmatprep.subr.mxu0 %v456
    %622 = vmatpush1.msra.mxu0 %v455
    %623 = vmatprep.subr.mxu0 %v464
    %624 = vmatpush1.msra.mxu0 %v463
    %625 = vmatprep.subr.mxu0 %v472
    %626 = vmatpush1.msra.mxu0 %v471
    %627 = vmatprep.subr.mxu0 %v480
    %628 = vmatpush1.msra.mxu0 %v479
    %629 = vmatprep.subr.mxu0 %v488
    %630 = vmatpush1.msra.mxu0 %v487
    %631 = vmatprep.subr.mxu0 %v496
    %632 = vmatpush1.msra.mxu0 %v495
    %633 = vmatprep.subr.mxu0 %v504
    %634 = vmatpush1.msra.mxu0 %v503
    %635 = vmatprep.subr.mxu0 %v512
    %636 = vmatpush1.msra.mxu0 %v511
    %637 = vmatprep.subr.mxu0 %v520
    %638 = vmatpush1.msra.mxu0 %v519
    %639 = vmatprep.subr.mxu0 %v528
    %640 = vmatpush1.msra.mxu0 %v527
    %641 = vmatprep.mubr.f32.mxu0 %v278
    %642 = vmatmul.mubr.f32.gmra.mrb[0].mxu0 %v277
    %v643 = vpop.f32.mrb[0].mxu0
    %v644 = vadd.f32 %v540, %v643
    %v645 = vpop.f32.mrb[0].mxu0
    %v646 = vadd.f32 %v544, %v645
    %647 = vdwg.mxu0
    %648 = vmatprep.subr.mxu0 %v282
    %649 = vmatpush1.msra.mxu0 %v281
    %650 = vmatprep.subr.mxu0 %v290
    %651 = vmatpush1.msra.mxu0 %v289
    %652 = vmatprep.subr.mxu0 %v298
    %653 = vmatpush1.msra.mxu0 %v297
    %654 = vmatprep.subr.mxu0 %v306
    %655 = vmatpush1.msra.mxu0 %v305
    %656 = vmatprep.subr.mxu0 %v314
    %657 = vmatpush1.msra.mxu0 %v313
    %658 = vmatprep.subr.mxu0 %v322
    %659 = vmatpush1.msra.mxu0 %v321
    %660 = vmatprep.subr.mxu0 %v330
    %661 = vmatpush1.msra.mxu0 %v329
    %662 = vmatprep.subr.mxu0 %v338
    %663 = vmatpush1.msra.mxu0 %v337
    %664 = vmatprep.subr.mxu0 %v346
    %665 = vmatpush1.msra.mxu0 %v345
    %666 = vmatprep.subr.mxu0 %v354
    %667 = vmatpush1.msra.mxu0 %v353
    %668 = vmatprep.subr.mxu0 %v362
    %669 = vmatpush1.msra.mxu0 %v361
    %670 = vmatprep.subr.mxu0 %v370
    %671 = vmatpush1.msra.mxu0 %v369
    %672 = vmatprep.subr.mxu0 %v378
    %673 = vmatpush1.msra.mxu0 %v377
    %674 = vmatprep.subr.mxu0 %v386
    %675 = vmatpush1.msra.mxu0 %v385
    %676 = vmatprep.subr.mxu0 %v394
    %677 = vmatpush1.msra.mxu0 %v393
    %678 = vmatprep.subr.mxu0 %v402
    %679 = vmatpush1.msra.mxu0 %v401
    %680 = vmatprep.subr.mxu0 %v410
    %681 = vmatpush1.msra.mxu0 %v409
    %682 = vmatprep.subr.mxu0 %v418
    %683 = vmatpush1.msra.mxu0 %v417
    %684 = vmatprep.subr.mxu0 %v426
    %685 = vmatpush1.msra.mxu0 %v425
    %686 = vmatprep.subr.mxu0 %v434
    %687 = vmatpush1.msra.mxu0 %v433
    %688 = vmatprep.subr.mxu0 %v442
    %689 = vmatpush1.msra.mxu0 %v441
    %690 = vmatprep.subr.mxu0 %v450
    %691 = vmatpush1.msra.mxu0 %v449
    %692 = vmatprep.subr.mxu0 %v458
    %693 = vmatpush1.msra.mxu0 %v457
    %694 = vmatprep.subr.mxu0 %v466
    %695 = vmatpush1.msra.mxu0 %v465
    %696 = vmatprep.subr.mxu0 %v474
    %697 = vmatpush1.msra.mxu0 %v473
    %698 = vmatprep.subr.mxu0 %v482
    %699 = vmatpush1.msra.mxu0 %v481
    %700 = vmatprep.subr.mxu0 %v490
    %701 = vmatpush1.msra.mxu0 %v489
    %702 = vmatprep.subr.mxu0 %v498
    %703 = vmatpush1.msra.mxu0 %v497
    %704 = vmatprep.subr.mxu0 %v506
    %705 = vmatpush1.msra.mxu0 %v505
    %706 = vmatprep.subr.mxu0 %v514
    %707 = vmatpush1.msra.mxu0 %v513
    %708 = vmatprep.subr.mxu0 %v522
    %709 = vmatpush1.msra.mxu0 %v521
    %710 = vmatprep.subr.mxu0 %v530
    %711 = vmatpush1.msra.mxu0 %v529
    %712 = vmatprep.mubr.f32.mxu0 %v278
    %713 = vmatmul.mubr.f32.gmra.mrb[0].mxu0 %v277
    %v714 = vpop.f32.mrb[0].mxu0
    %v715 = vadd.f32 %v548, %v714
    %v716 = vpop.f32.mrb[0].mxu0
    %v717 = vadd.f32 %v552, %v716
    %718 = vdwg.mxu0
    %719 = vmatprep.subr.mxu0 %v284
    %720 = vmatpush1.msra.mxu0 %v283
    %721 = vmatprep.subr.mxu0 %v292
    %722 = vmatpush1.msra.mxu0 %v291
    %723 = vmatprep.subr.mxu0 %v300
    %724 = vmatpush1.msra.mxu0 %v299
    %725 = vmatprep.subr.mxu0 %v308
    %726 = vmatpush1.msra.mxu0 %v307
    %727 = vmatprep.subr.mxu0 %v316
    %728 = vmatpush1.msra.mxu0 %v315
    %729 = vmatprep.subr.mxu0 %v324
    %730 = vmatpush1.msra.mxu0 %v323
    %731 = vmatprep.subr.mxu0 %v332
    %732 = vmatpush1.msra.mxu0 %v331
    %733 = vmatprep.subr.mxu0 %v340
    %734 = vmatpush1.msra.mxu0 %v339
    %735 = vmatprep.subr.mxu0 %v348
    %736 = vmatpush1.msra.mxu0 %v347
    %737 = vmatprep.subr.mxu0 %v356
    %738 = vmatpush1.msra.mxu0 %v355
    %739 = vmatprep.subr.mxu0 %v364
    %740 = vmatpush1.msra.mxu0 %v363
    %741 = vmatprep.subr.mxu0 %v372
    %742 = vmatpush1.msra.mxu0 %v371
    %743 = vmatprep.subr.mxu0 %v380
    %744 = vmatpush1.msra.mxu0 %v379
    %745 = vmatprep.subr.mxu0 %v388
    %746 = vmatpush1.msra.mxu0 %v387
    %747 = vmatprep.subr.mxu0 %v396
    %748 = vmatpush1.msra.mxu0 %v395
    %749 = vmatprep.subr.mxu0 %v404
    %750 = vmatpush1.msra.mxu0 %v403
    %751 = vmatprep.subr.mxu0 %v412
    %752 = vmatpush1.msra.mxu0 %v411
    %753 = vmatprep.subr.mxu0 %v420
    %754 = vmatpush1.msra.mxu0 %v419
    %755 = vmatprep.subr.mxu0 %v428
    %756 = vmatpush1.msra.mxu0 %v427
    %757 = vmatprep.subr.mxu0 %v436
    %758 = vmatpush1.msra.mxu0 %v435
    %759 = vmatprep.subr.mxu0 %v444
    %760 = vmatpush1.msra.mxu0 %v443
    %761 = vmatprep.subr.mxu0 %v452
    %762 = vmatpush1.msra.mxu0 %v451
    %763 = vmatprep.subr.mxu0 %v460
    %764 = vmatpush1.msra.mxu0 %v459
    %765 = vmatprep.subr.mxu0 %v468
    %766 = vmatpush1.msra.mxu0 %v467
    %767 = vmatprep.subr.mxu0 %v476
    %768 = vmatpush1.msra.mxu0 %v475
    %769 = vmatprep.subr.mxu0 %v484
    %770 = vmatpush1.msra.mxu0 %v483
    %771 = vmatprep.subr.mxu0 %v492
    %772 = vmatpush1.msra.mxu0 %v491
    %773 = vmatprep.subr.mxu0 %v500
    %774 = vmatpush1.msra.mxu0 %v499
    %775 = vmatprep.subr.mxu0 %v508
    %776 = vmatpush1.msra.mxu0 %v507
    %777 = vmatprep.subr.mxu0 %v516
    %778 = vmatpush1.msra.mxu0 %v515
    %779 = vmatprep.subr.mxu0 %v524
    %780 = vmatpush1.msra.mxu0 %v523
    %781 = vmatprep.subr.mxu0 %v532
    %782 = vmatpush1.msra.mxu0 %v531
    %783 = vmatprep.mubr.f32.mxu0 %v278
    %784 = vmatmul.mubr.f32.gmra.mrb[0].mxu0 %v277
    %v785 = vpop.f32.mrb[0].mxu0
    %v786 = vadd.f32 %v556, %v785
    %v787 = vpop.f32.mrb[0].mxu0
    %v788 = vadd.f32 %v560, %v787
    %789 = vdwg.mxu0
    %790 = vmatprep.subr.mxu0 %v286
    %791 = vmatpush1.msra.mxu0 %v285
    %792 = vmatprep.subr.mxu0 %v294
    %793 = vmatpush1.msra.mxu0 %v293
    %794 = vmatprep.subr.mxu0 %v302
    %795 = vmatpush1.msra.mxu0 %v301
    %796 = vmatprep.subr.mxu0 %v310
    %797 = vmatpush1.msra.mxu0 %v309
    %798 = vmatprep.subr.mxu0 %v318
    %799 = vmatpush1.msra.mxu0 %v317
    %800 = vmatprep.subr.mxu0 %v326
    %801 = vmatpush1.msra.mxu0 %v325
    %802 = vmatprep.subr.mxu0 %v334
    %803 = vmatpush1.msra.mxu0 %v333
    %804 = vmatprep.subr.mxu0 %v342
    %805 = vmatpush1.msra.mxu0 %v341
    %806 = vmatprep.subr.mxu0 %v350
    %807 = vmatpush1.msra.mxu0 %v349
    %808 = vmatprep.subr.mxu0 %v358
    %809 = vmatpush1.msra.mxu0 %v357
    %810 = vmatprep.subr.mxu0 %v366
    %811 = vmatpush1.msra.mxu0 %v365
    %812 = vmatprep.subr.mxu0 %v374
    %813 = vmatpush1.msra.mxu0 %v373
    %814 = vmatprep.subr.mxu0 %v382
    %815 = vmatpush1.msra.mxu0 %v381
    %816 = vmatprep.subr.mxu0 %v390
    %817 = vmatpush1.msra.mxu0 %v389
    %818 = vmatprep.subr.mxu0 %v398
    %819 = vmatpush1.msra.mxu0 %v397
    %820 = vmatprep.subr.mxu0 %v406
    %821 = vmatpush1.msra.mxu0 %v405
    %822 = vmatprep.subr.mxu0 %v414
    %823 = vmatpush1.msra.mxu0 %v413
    %824 = vmatprep.subr.mxu0 %v422
    %825 = vmatpush1.msra.mxu0 %v421
    %826 = vmatprep.subr.mxu0 %v430
    %827 = vmatpush1.msra.mxu0 %v429
    %828 = vmatprep.subr.mxu0 %v438
    %829 = vmatpush1.msra.mxu0 %v437
    %830 = vmatprep.subr.mxu0 %v446
    %831 = vmatpush1.msra.mxu0 %v445
    %832 = vmatprep.subr.mxu0 %v454
    %833 = vmatpush1.msra.mxu0 %v453
    %834 = vmatprep.subr.mxu0 %v462
    %835 = vmatpush1.msra.mxu0 %v461
    %836 = vmatprep.subr.mxu0 %v470
    %837 = vmatpush1.msra.mxu0 %v469
    %838 = vmatprep.subr.mxu0 %v478
    %839 = vmatpush1.msra.mxu0 %v477
    %840 = vmatprep.subr.mxu0 %v486
    %841 = vmatpush1.msra.mxu0 %v485
    %842 = vmatprep.subr.mxu0 %v494
    %843 = vmatpush1.msra.mxu0 %v493
    %844 = vmatprep.subr.mxu0 %v502
    %845 = vmatpush1.msra.mxu0 %v501
    %846 = vmatprep.subr.mxu0 %v510
    %847 = vmatpush1.msra.mxu0 %v509
    %848 = vmatprep.subr.mxu0 %v518
    %849 = vmatpush1.msra.mxu0 %v517
    %850 = vmatprep.subr.mxu0 %v526
    %851 = vmatpush1.msra.mxu0 %v525
    %852 = vmatprep.subr.mxu0 %v534
    %853 = vmatpush1.msra.mxu0 %v533
    %854 = vmatprep.mubr.f32.mxu0 %v278
    %855 = vmatmul.mubr.f32.gmra.mrb[0].mxu0 %v277
    %v856 = vpop.f32.mrb[0].mxu0
    %v857 = vadd.f32 %v564, %v856
    %v858 = vpop.f32.mrb[0].mxu0
    %v859 = vadd.f32 %v568, %v858
    %860 = vdwg.mxu0
    %v861 = vmax.f32 %v644, 0.0
    %v862 = vmax.f32 %v646, 0.0
    %v863 = vmax.f32 %v715, 0.0
    %v864 = vmax.f32 %v717, 0.0
    %v865 = vmax.f32 %v786, 0.0
    %v866 = vmax.f32 %v788, 0.0
    %v867 = vmax.f32 %v857, 0.0
    %v868 = vmax.f32 %v859, 0.0
    %v869 = vld [vmem:[#allocation12] sm:$0xff]
    %v870 = vld [vmem:[#allocation12 + $0x8] sm:$0xff]
    %v871 = vld [vmem:[#allocation12 + $0x10] sm:$0xff]
    %v872 = vld [vmem:[#allocation12 + $0x18] sm:$0xff]
    %v873 = vld [vmem:[#allocation12 + $0x20] sm:$0xff]
    %v874 = vld [vmem:[#allocation12 + $0x28] sm:$0xff]
    %v875 = vld [vmem:[#allocation12 + $0x30] sm:$0xff]
    %v876 = vld [vmem:[#allocation12 + $0x38] sm:$0xff]
    %v877 = vld [vmem:[#allocation12 + $0x40] sm:$0xff]
    %v878 = vld [vmem:[#allocation12 + $0x48] sm:$0xff]
    %v879 = vld [vmem:[#allocation12 + $0x50] sm:$0xff]
    %v880 = vld [vmem:[#allocation12 + $0x58] sm:$0xff]
    %v881 = vld [vmem:[#allocation12 + $0x60] sm:$0xff]
    %v882 = vld [vmem:[#allocation12 + $0x68] sm:$0xff]
    %v883 = vld [vmem:[#allocation12 + $0x70] sm:$0xff]
    %v884 = vld [vmem:[#allocation12 + $0x78] sm:$0xff]
    %v885 = vld [vmem:[#allocation12 + $0x80] sm:$0xff]
    %v886 = vld [vmem:[#allocation12 + $0x88] sm:$0xff]
    %v887 = vld [vmem:[#allocation12 + $0x90] sm:$0xff]
    %v888 = vld [vmem:[#allocation12 + $0x98] sm:$0xff]
    %v889 = vld [vmem:[#allocation12 + $0xa0] sm:$0xff]
    %v890 = vld [vmem:[#allocation12 + $0xa8] sm:$0xff]
    %v891 = vld [vmem:[#allocation12 + $0xb0] sm:$0xff]
    %v892 = vld [vmem:[#allocation12 + $0xb8] sm:$0xff]
    %v893 = vld [vmem:[#allocation12 + $0xc0] sm:$0xff]
    %v894 = vld [vmem:[#allocation12 + $0xc8] sm:$0xff]
    %v895 = vld [vmem:[#allocation12 + $0xd0] sm:$0xff]
    %v896 = vld [vmem:[#allocation12 + $0xd8] sm:$0xff]
    %v897 = vld [vmem:[#allocation12 + $0xe0] sm:$0xff]
    %v898 = vld [vmem:[#allocation12 + $0xe8] sm:$0xff]
    %v899 = vld [vmem:[#allocation12 + $0xf0] sm:$0xff]
    %v900 = vld [vmem:[#allocation12 + $0xf8] sm:$0xff]
    %v901 = vld [vmem:[#allocation12 + $0x100] sm:$0xff]
    %v902 = vld [vmem:[#allocation12 + $0x108] sm:$0xff]
    %v903 = vld [vmem:[#allocation12 + $0x110] sm:$0xff]
    %v904 = vld [vmem:[#allocation12 + $0x118] sm:$0xff]
    %v905 = vld [vmem:[#allocation12 + $0x120] sm:$0xff]
    %v906 = vld [vmem:[#allocation12 + $0x128] sm:$0xff]
    %v907 = vld [vmem:[#allocation12 + $0x130] sm:$0xff]
    %v908 = vld [vmem:[#allocation12 + $0x138] sm:$0xff]
    %v909 = vld [vmem:[#allocation12 + $0x140] sm:$0xff]
    %v910 = vld [vmem:[#allocation12 + $0x148] sm:$0xff]
    %v911 = vld [vmem:[#allocation12 + $0x150] sm:$0xff]
    %v912 = vld [vmem:[#allocation12 + $0x158] sm:$0xff]
    %v913 = vld [vmem:[#allocation12 + $0x160] sm:$0xff]
    %v914 = vld [vmem:[#allocation12 + $0x168] sm:$0xff]
    %v915 = vld [vmem:[#allocation12 + $0x170] sm:$0xff]
    %v916 = vld [vmem:[#allocation12 + $0x178] sm:$0xff]
    %v917 = vld [vmem:[#allocation12 + $0x180] sm:$0xff]
    %v918 = vld [vmem:[#allocation12 + $0x188] sm:$0xff]
    %v919 = vld [vmem:[#allocation12 + $0x190] sm:$0xff]
    %v920 = vld [vmem:[#allocation12 + $0x198] sm:$0xff]
    %v921 = vld [vmem:[#allocation12 + $0x1a0] sm:$0xff]
    %v922 = vld [vmem:[#allocation12 + $0x1a8] sm:$0xff]
    %v923 = vld [vmem:[#allocation12 + $0x1b0] sm:$0xff]
    %v924 = vld [vmem:[#allocation12 + $0x1b8] sm:$0xff]
    %v925 = vld [vmem:[#allocation12 + $0x1c0] sm:$0xff]
    %v926 = vld [vmem:[#allocation12 + $0x1c8] sm:$0xff]
    %v927 = vld [vmem:[#allocation12 + $0x1d0] sm:$0xff]
    %v928 = vld [vmem:[#allocation12 + $0x1d8] sm:$0xff]
    %v929 = vld [vmem:[#allocation12 + $0x1e0] sm:$0xff]
    %v930 = vld [vmem:[#allocation12 + $0x1e8] sm:$0xff]
    %v931 = vld [vmem:[#allocation12 + $0x1f0] sm:$0xff]
    %v932 = vld [vmem:[#allocation12 + $0x1f8] sm:$0xff]
    %v933 = vld [vmem:[#allocation12 + $0x200] sm:$0xff]
    %v934 = vld [vmem:[#allocation12 + $0x208] sm:$0xff]
    %v935 = vld [vmem:[#allocation12 + $0x210] sm:$0xff]
    %v936 = vld [vmem:[#allocation12 + $0x218] sm:$0xff]
    %v937 = vld [vmem:[#allocation12 + $0x220] sm:$0xff]
    %v938 = vld [vmem:[#allocation12 + $0x228] sm:$0xff]
    %v939 = vld [vmem:[#allocation12 + $0x230] sm:$0xff]
    %v940 = vld [vmem:[#allocation12 + $0x238] sm:$0xff]
    %v941 = vld [vmem:[#allocation12 + $0x240] sm:$0xff]
    %v942 = vld [vmem:[#allocation12 + $0x248] sm:$0xff]
    %v943 = vld [vmem:[#allocation12 + $0x250] sm:$0xff]
    %v944 = vld [vmem:[#allocation12 + $0x258] sm:$0xff]
    %v945 = vld [vmem:[#allocation12 + $0x260] sm:$0xff]
    %v946 = vld [vmem:[#allocation12 + $0x268] sm:$0xff]
    %v947 = vld [vmem:[#allocation12 + $0x270] sm:$0xff]
    %v948 = vld [vmem:[#allocation12 + $0x278] sm:$0xff]
    %v949 = vld [vmem:[#allocation12 + $0x280] sm:$0xff]
    %v950 = vld [vmem:[#allocation12 + $0x288] sm:$0xff]
    %v951 = vld [vmem:[#allocation12 + $0x290] sm:$0xff]
    %v952 = vld [vmem:[#allocation12 + $0x298] sm:$0xff]
    %v953 = vld [vmem:[#allocation12 + $0x2a0] sm:$0xff]
    %v954 = vld [vmem:[#allocation12 + $0x2a8] sm:$0xff]
    %v955 = vld [vmem:[#allocation12 + $0x2b0] sm:$0xff]
    %v956 = vld [vmem:[#allocation12 + $0x2b8] sm:$0xff]
    %v957 = vld [vmem:[#allocation12 + $0x2c0] sm:$0xff]
    %v958 = vld [vmem:[#allocation12 + $0x2c8] sm:$0xff]
    %v959 = vld [vmem:[#allocation12 + $0x2d0] sm:$0xff]
    %v960 = vld [vmem:[#allocation12 + $0x2d8] sm:$0xff]
    %v961 = vld [vmem:[#allocation12 + $0x2e0] sm:$0xff]
    %v962 = vld [vmem:[#allocation12 + $0x2e8] sm:$0xff]
    %v963 = vld [vmem:[#allocation12 + $0x2f0] sm:$0xff]
    %v964 = vld [vmem:[#allocation12 + $0x2f8] sm:$0xff]
    %v965 = vld [vmem:[#allocation12 + $0x300] sm:$0xff]
    %v966 = vld [vmem:[#allocation12 + $0x308] sm:$0xff]
    %v967 = vld [vmem:[#allocation12 + $0x310] sm:$0xff]
    %v968 = vld [vmem:[#allocation12 + $0x318] sm:$0xff]
    %v969 = vld [vmem:[#allocation12 + $0x320] sm:$0xff]
    %v970 = vld [vmem:[#allocation12 + $0x328] sm:$0xff]
    %v971 = vld [vmem:[#allocation12 + $0x330] sm:$0xff]
    %v972 = vld [vmem:[#allocation12 + $0x338] sm:$0xff]
    %v973 = vld [vmem:[#allocation12 + $0x340] sm:$0xff]
    %v974 = vld [vmem:[#allocation12 + $0x348] sm:$0xff]
    %v975 = vld [vmem:[#allocation12 + $0x350] sm:$0xff]
    %v976 = vld [vmem:[#allocation12 + $0x358] sm:$0xff]
    %v977 = vld [vmem:[#allocation12 + $0x360] sm:$0xff]
    %v978 = vld [vmem:[#allocation12 + $0x368] sm:$0xff]
    %v979 = vld [vmem:[#allocation12 + $0x370] sm:$0xff]
    %v980 = vld [vmem:[#allocation12 + $0x378] sm:$0xff]
    %v981 = vld [vmem:[#allocation12 + $0x380] sm:$0xff]
    %v982 = vld [vmem:[#allocation12 + $0x388] sm:$0xff]
    %v983 = vld [vmem:[#allocation12 + $0x390] sm:$0xff]
    %v984 = vld [vmem:[#allocation12 + $0x398] sm:$0xff]
    %v985 = vld [vmem:[#allocation12 + $0x3a0] sm:$0xff]
    %v986 = vld [vmem:[#allocation12 + $0x3a8] sm:$0xff]
    %v987 = vld [vmem:[#allocation12 + $0x3b0] sm:$0xff]
    %v988 = vld [vmem:[#allocation12 + $0x3b8] sm:$0xff]
    %v989 = vld [vmem:[#allocation12 + $0x3c0] sm:$0xff]
    %v990 = vld [vmem:[#allocation12 + $0x3c8] sm:$0xff]
    %v991 = vld [vmem:[#allocation12 + $0x3d0] sm:$0xff]
    %v992 = vld [vmem:[#allocation12 + $0x3d8] sm:$0xff]
    %v993 = vld [vmem:[#allocation12 + $0x3e0] sm:$0xff]
    %v994 = vld [vmem:[#allocation12 + $0x3e8] sm:$0xff]
    %v995 = vld [vmem:[#allocation12 + $0x3f0] sm:$0xff]
    %v996 = vld [vmem:[#allocation12 + $0x3f8] sm:$0xff]
    %v997 = vld [vmem:[#allocation12 + $0x400] sm:$0xff]
    %v998 = vld [vmem:[#allocation12 + $0x408] sm:$0xff]
    %v999 = vld [vmem:[#allocation12 + $0x410] sm:$0xff]
    %v1000 = vld [vmem:[#allocation12 + $0x418] sm:$0xff]
    %v1001 = vld [vmem:[#allocation12 + $0x420] sm:$0xff]
    %v1002 = vld [vmem:[#allocation12 + $0x428] sm:$0xff]
    %v1003 = vld [vmem:[#allocation12 + $0x430] sm:$0xff]
    %v1004 = vld [vmem:[#allocation12 + $0x438] sm:$0xff]
    %v1005 = vld [vmem:[#allocation12 + $0x440] sm:$0xff]
    %v1006 = vld [vmem:[#allocation12 + $0x448] sm:$0xff]
    %v1007 = vld [vmem:[#allocation12 + $0x450] sm:$0xff]
    %v1008 = vld [vmem:[#allocation12 + $0x458] sm:$0xff]
    %v1009 = vld [vmem:[#allocation12 + $0x460] sm:$0xff]
    %v1010 = vld [vmem:[#allocation12 + $0x468] sm:$0xff]
    %v1011 = vld [vmem:[#allocation12 + $0x470] sm:$0xff]
    %v1012 = vld [vmem:[#allocation12 + $0x478] sm:$0xff]
    %v1013 = vld [vmem:[#allocation12 + $0x480] sm:$0xff]
    %v1014 = vld [vmem:[#allocation12 + $0x488] sm:$0xff]
    %v1015 = vld [vmem:[#allocation12 + $0x490] sm:$0xff]
    %v1016 = vld [vmem:[#allocation12 + $0x498] sm:$0xff]
    %v1017 = vld [vmem:[#allocation12 + $0x4a0] sm:$0xff]
    %v1018 = vld [vmem:[#allocation12 + $0x4a8] sm:$0xff]
    %v1019 = vld [vmem:[#allocation12 + $0x4b0] sm:$0xff]
    %v1020 = vld [vmem:[#allocation12 + $0x4b8] sm:$0xff]
    %v1021 = vld [vmem:[#allocation12 + $0x4c0] sm:$0xff]
    %v1022 = vld [vmem:[#allocation12 + $0x4c8] sm:$0xff]
    %v1023 = vld [vmem:[#allocation12 + $0x4d0] sm:$0xff]
    %v1024 = vld [vmem:[#allocation12 + $0x4d8] sm:$0xff]
    %v1025 = vld [vmem:[#allocation12 + $0x4e0] sm:$0xff]
    %v1026 = vld [vmem:[#allocation12 + $0x4e8] sm:$0xff]
    %v1027 = vld [vmem:[#allocation12 + $0x4f0] sm:$0xff]
    %v1028 = vld [vmem:[#allocation12 + $0x4f8] sm:$0xff]
    %v1029 = vld [vmem:[#allocation12 + $0x500] sm:$0xff]
    %v1030 = vld [vmem:[#allocation12 + $0x508] sm:$0xff]
    %v1031 = vld [vmem:[#allocation12 + $0x510] sm:$0xff]
    %v1032 = vld [vmem:[#allocation12 + $0x518] sm:$0xff]
    %v1033 = vld [vmem:[#allocation12 + $0x520] sm:$0xff]
    %v1034 = vld [vmem:[#allocation12 + $0x528] sm:$0xff]
    %v1035 = vld [vmem:[#allocation12 + $0x530] sm:$0xff]
    %v1036 = vld [vmem:[#allocation12 + $0x538] sm:$0xff]
    %v1037 = vld [vmem:[#allocation12 + $0x540] sm:$0xff]
    %v1038 = vld [vmem:[#allocation12 + $0x548] sm:$0xff]
    %v1039 = vld [vmem:[#allocation12 + $0x550] sm:$0xff]
    %v1040 = vld [vmem:[#allocation12 + $0x558] sm:$0xff]
    %v1041 = vld [vmem:[#allocation12 + $0x560] sm:$0xff]
    %v1042 = vld [vmem:[#allocation12 + $0x568] sm:$0xff]
    %v1043 = vld [vmem:[#allocation12 + $0x570] sm:$0xff]
    %v1044 = vld [vmem:[#allocation12 + $0x578] sm:$0xff]
    %v1045 = vld [vmem:[#allocation12 + $0x580] sm:$0xff]
    %v1046 = vld [vmem:[#allocation12 + $0x588] sm:$0xff]
    %v1047 = vld [vmem:[#allocation12 + $0x590] sm:$0xff]
    %v1048 = vld [vmem:[#allocation12 + $0x598] sm:$0xff]
    %v1049 = vld [vmem:[#allocation12 + $0x5a0] sm:$0xff]
    %v1050 = vld [vmem:[#allocation12 + $0x5a8] sm:$0xff]
    %v1051 = vld [vmem:[#allocation12 + $0x5b0] sm:$0xff]
    %v1052 = vld [vmem:[#allocation12 + $0x5b8] sm:$0xff]
    %v1053 = vld [vmem:[#allocation12 + $0x5c0] sm:$0xff]
    %v1054 = vld [vmem:[#allocation12 + $0x5c8] sm:$0xff]
    %v1055 = vld [vmem:[#allocation12 + $0x5d0] sm:$0xff]
    %v1056 = vld [vmem:[#allocation12 + $0x5d8] sm:$0xff]
    %v1057 = vld [vmem:[#allocation12 + $0x5e0] sm:$0xff]
    %v1058 = vld [vmem:[#allocation12 + $0x5e8] sm:$0xff]
    %v1059 = vld [vmem:[#allocation12 + $0x5f0] sm:$0xff]
    %v1060 = vld [vmem:[#allocation12 + $0x5f8] sm:$0xff]
    %v1061 = vld [vmem:[#allocation12 + $0x600] sm:$0xff]
    %v1062 = vld [vmem:[#allocation12 + $0x608] sm:$0xff]
    %v1063 = vld [vmem:[#allocation12 + $0x610] sm:$0xff]
    %v1064 = vld [vmem:[#allocation12 + $0x618] sm:$0xff]
    %v1065 = vld [vmem:[#allocation12 + $0x620] sm:$0xff]
    %v1066 = vld [vmem:[#allocation12 + $0x628] sm:$0xff]
    %v1067 = vld [vmem:[#allocation12 + $0x630] sm:$0xff]
    %v1068 = vld [vmem:[#allocation12 + $0x638] sm:$0xff]
    %v1069 = vld [vmem:[#allocation12 + $0x640] sm:$0xff]
    %v1070 = vld [vmem:[#allocation12 + $0x648] sm:$0xff]
    %v1071 = vld [vmem:[#allocation12 + $0x650] sm:$0xff]
    %v1072 = vld [vmem:[#allocation12 + $0x658] sm:$0xff]
    %v1073 = vld [vmem:[#allocation12 + $0x660] sm:$0xff]
    %v1074 = vld [vmem:[#allocation12 + $0x668] sm:$0xff]
    %v1075 = vld [vmem:[#allocation12 + $0x670] sm:$0xff]
    %v1076 = vld [vmem:[#allocation12 + $0x678] sm:$0xff]
    %v1077 = vld [vmem:[#allocation12 + $0x680] sm:$0xff]
    %v1078 = vld [vmem:[#allocation12 + $0x688] sm:$0xff]
    %v1079 = vld [vmem:[#allocation12 + $0x690] sm:$0xff]
    %v1080 = vld [vmem:[#allocation12 + $0x698] sm:$0xff]
    %v1081 = vld [vmem:[#allocation12 + $0x6a0] sm:$0xff]
    %v1082 = vld [vmem:[#allocation12 + $0x6a8] sm:$0xff]
    %v1083 = vld [vmem:[#allocation12 + $0x6b0] sm:$0xff]
    %v1084 = vld [vmem:[#allocation12 + $0x6b8] sm:$0xff]
    %v1085 = vld [vmem:[#allocation12 + $0x6c0] sm:$0xff]
    %v1086 = vld [vmem:[#allocation12 + $0x6c8] sm:$0xff]
    %v1087 = vld [vmem:[#allocation12 + $0x6d0] sm:$0xff]
    %v1088 = vld [vmem:[#allocation12 + $0x6d8] sm:$0xff]
    %v1089 = vld [vmem:[#allocation12 + $0x6e0] sm:$0xff]
    %v1090 = vld [vmem:[#allocation12 + $0x6e8] sm:$0xff]
    %v1091 = vld [vmem:[#allocation12 + $0x6f0] sm:$0xff]
    %v1092 = vld [vmem:[#allocation12 + $0x6f8] sm:$0xff]
    %v1093 = vld [vmem:[#allocation12 + $0x700] sm:$0xff]
    %v1094 = vld [vmem:[#allocation12 + $0x708] sm:$0xff]
    %v1095 = vld [vmem:[#allocation12 + $0x710] sm:$0xff]
    %v1096 = vld [vmem:[#allocation12 + $0x718] sm:$0xff]
    %v1097 = vld [vmem:[#allocation12 + $0x720] sm:$0xff]
    %v1098 = vld [vmem:[#allocation12 + $0x728] sm:$0xff]
    %v1099 = vld [vmem:[#allocation12 + $0x730] sm:$0xff]
    %v1100 = vld [vmem:[#allocation12 + $0x738] sm:$0xff]
    %v1101 = vld [vmem:[#allocation12 + $0x740] sm:$0xff]
    %v1102 = vld [vmem:[#allocation12 + $0x748] sm:$0xff]
    %v1103 = vld [vmem:[#allocation12 + $0x750] sm:$0xff]
    %v1104 = vld [vmem:[#allocation12 + $0x758] sm:$0xff]
    %v1105 = vld [vmem:[#allocation12 + $0x760] sm:$0xff]
    %v1106 = vld [vmem:[#allocation12 + $0x768] sm:$0xff]
    %v1107 = vld [vmem:[#allocation12 + $0x770] sm:$0xff]
    %v1108 = vld [vmem:[#allocation12 + $0x778] sm:$0xff]
    %v1109 = vld [vmem:[#allocation12 + $0x780] sm:$0xff]
    %v1110 = vld [vmem:[#allocation12 + $0x788] sm:$0xff]
    %v1111 = vld [vmem:[#allocation12 + $0x790] sm:$0xff]
    %v1112 = vld [vmem:[#allocation12 + $0x798] sm:$0xff]
    %v1113 = vld [vmem:[#allocation12 + $0x7a0] sm:$0xff]
    %v1114 = vld [vmem:[#allocation12 + $0x7a8] sm:$0xff]
    %v1115 = vld [vmem:[#allocation12 + $0x7b0] sm:$0xff]
    %v1116 = vld [vmem:[#allocation12 + $0x7b8] sm:$0xff]
    %v1117 = vld [vmem:[#allocation12 + $0x7c0] sm:$0xff]
    %v1118 = vld [vmem:[#allocation12 + $0x7c8] sm:$0xff]
    %v1119 = vld [vmem:[#allocation12 + $0x7d0] sm:$0xff]
    %v1120 = vld [vmem:[#allocation12 + $0x7d8] sm:$0xff]
    %v1121 = vld [vmem:[#allocation12 + $0x7e0] sm:$0xff]
    %v1122 = vld [vmem:[#allocation12 + $0x7e8] sm:$0xff]
    %v1123 = vld [vmem:[#allocation12 + $0x7f0] sm:$0xff]
    %v1124 = vld [vmem:[#allocation12 + $0x7f8] sm:$0xff]
    %s1125 = sld [smem:[#allocation3]]
    %v1126 = vstv %s1125
    %1127 = vmatprep.subr.mxu0 %v870
    %1128 = vmatpush1.msra.mxu0 %v869
    %1129 = vmatprep.subr.mxu0 %v872
    %1130 = vmatpush1.msra.mxu0 %v871
    %1131 = vmatprep.subr.mxu0 %v874
    %1132 = vmatpush1.msra.mxu0 %v873
    %1133 = vmatprep.subr.mxu0 %v876
    %1134 = vmatpush1.msra.mxu0 %v875
    %1135 = vmatprep.subr.mxu0 %v878
    %1136 = vmatpush1.msra.mxu0 %v877
    %1137 = vmatprep.subr.mxu0 %v880
    %1138 = vmatpush1.msra.mxu0 %v879
    %1139 = vmatprep.subr.mxu0 %v882
    %1140 = vmatpush1.msra.mxu0 %v881
    %1141 = vmatprep.subr.mxu0 %v884
    %1142 = vmatpush1.msra.mxu0 %v883
    %1143 = vmatprep.subr.mxu0 %v886
    %1144 = vmatpush1.msra.mxu0 %v885
    %1145 = vmatprep.subr.mxu0 %v888
    %1146 = vmatpush1.msra.mxu0 %v887
    %1147 = vmatprep.subr.mxu0 %v890
    %1148 = vmatpush1.msra.mxu0 %v889
    %1149 = vmatprep.subr.mxu0 %v892
    %1150 = vmatpush1.msra.mxu0 %v891
    %1151 = vmatprep.subr.mxu0 %v894
    %1152 = vmatpush1.msra.mxu0 %v893
    %1153 = vmatprep.subr.mxu0 %v896
    %1154 = vmatpush1.msra.mxu0 %v895
    %1155 = vmatprep.subr.mxu0 %v898
    %1156 = vmatpush1.msra.mxu0 %v897
    %1157 = vmatprep.subr.mxu0 %v900
    %1158 = vmatpush1.msra.mxu0 %v899
    %1159 = vmatprep.subr.mxu0 %v902
    %1160 = vmatpush1.msra.mxu0 %v901
    %1161 = vmatprep.subr.mxu0 %v904
    %1162 = vmatpush1.msra.mxu0 %v903
    %1163 = vmatprep.subr.mxu0 %v906
    %1164 = vmatpush1.msra.mxu0 %v905
    %1165 = vmatprep.subr.mxu0 %v908
    %1166 = vmatpush1.msra.mxu0 %v907
    %1167 = vmatprep.subr.mxu0 %v910
    %1168 = vmatpush1.msra.mxu0 %v909
    %1169 = vmatprep.subr.mxu0 %v912
    %1170 = vmatpush1.msra.mxu0 %v911
    %1171 = vmatprep.subr.mxu0 %v914
    %1172 = vmatpush1.msra.mxu0 %v913
    %1173 = vmatprep.subr.mxu0 %v916
    %1174 = vmatpush1.msra.mxu0 %v915
    %1175 = vmatprep.subr.mxu0 %v918
    %1176 = vmatpush1.msra.mxu0 %v917
    %1177 = vmatprep.subr.mxu0 %v920
    %1178 = vmatpush1.msra.mxu0 %v919
    %1179 = vmatprep.subr.mxu0 %v922
    %1180 = vmatpush1.msra.mxu0 %v921
    %1181 = vmatprep.subr.mxu0 %v924
    %1182 = vmatpush1.msra.mxu0 %v923
    %1183 = vmatprep.subr.mxu0 %v926
    %1184 = vmatpush1.msra.mxu0 %v925
    %1185 = vmatprep.subr.mxu0 %v928
    %1186 = vmatpush1.msra.mxu0 %v927
    %1187 = vmatprep.subr.mxu0 %v930
    %1188 = vmatpush1.msra.mxu0 %v929
    %1189 = vmatprep.subr.mxu0 %v932
    %1190 = vmatpush1.msra.mxu0 %v931
    %1191 = vmatprep.mubr.f32.mxu0 %v862
    %1192 = vmatmul.mubr.f32.gmra.mrb[0].mxu0 %v861
    %v1193 = vpop.f32.mrb[0].mxu0
    %v1194 = vadd.f32 %v1126, %v1193
    %v1195 = vpop.f32.mrb[0].mxu0
    %v1196 = vadd.f32 %v1126, %v1195
    %1197 = vdwg.mxu0
    %1198 = vmatprep.subr.mxu0 %v934
    %1199 = vmatpush1.msra.mxu0 %v933
    %1200 = vmatprep.subr.mxu0 %v936
    %1201 = vmatpush1.msra.mxu0 %v935
    %1202 = vmatprep.subr.mxu0 %v938
    %1203 = vmatpush1.msra.mxu0 %v937
    %1204 = vmatprep.subr.mxu0 %v940
    %1205 = vmatpush1.msra.mxu0 %v939
    %1206 = vmatprep.subr.mxu0 %v942
    %1207 = vmatpush1.msra.mxu0 %v941
    %1208 = vmatprep.subr.mxu0 %v944
    %1209 = vmatpush1.msra.mxu0 %v943
    %1210 = vmatprep.subr.mxu0 %v946
    %1211 = vmatpush1.msra.mxu0 %v945
    %1212 = vmatprep.subr.mxu0 %v948
    %1213 = vmatpush1.msra.mxu0 %v947
    %1214 = vmatprep.subr.mxu0 %v950
    %1215 = vmatpush1.msra.mxu0 %v949
    %1216 = vmatprep.subr.mxu0 %v952
    %1217 = vmatpush1.msra.mxu0 %v951
    %1218 = vmatprep.subr.mxu0 %v954
    %1219 = vmatpush1.msra.mxu0 %v953
    %1220 = vmatprep.subr.mxu0 %v956
    %1221 = vmatpush1.msra.mxu0 %v955
    %1222 = vmatprep.subr.mxu0 %v958
    %1223 = vmatpush1.msra.mxu0 %v957
    %1224 = vmatprep.subr.mxu0 %v960
    %1225 = vmatpush1.msra.mxu0 %v959
    %1226 = vmatprep.subr.mxu0 %v962
    %1227 = vmatpush1.msra.mxu0 %v961
    %1228 = vmatprep.subr.mxu0 %v964
    %1229 = vmatpush1.msra.mxu0 %v963
    %1230 = vmatprep.subr.mxu0 %v966
    %1231 = vmatpush1.msra.mxu0 %v965
    %1232 = vmatprep.subr.mxu0 %v968
    %1233 = vmatpush1.msra.mxu0 %v967
    %1234 = vmatprep.subr.mxu0 %v970
    %1235 = vmatpush1.msra.mxu0 %v969
    %1236 = vmatprep.subr.mxu0 %v972
    %1237 = vmatpush1.msra.mxu0 %v971
    %1238 = vmatprep.subr.mxu0 %v974
    %1239 = vmatpush1.msra.mxu0 %v973
    %1240 = vmatprep.subr.mxu0 %v976
    %1241 = vmatpush1.msra.mxu0 %v975
    %1242 = vmatprep.subr.mxu0 %v978
    %1243 = vmatpush1.msra.mxu0 %v977
    %1244 = vmatprep.subr.mxu0 %v980
    %1245 = vmatpush1.msra.mxu0 %v979
    %1246 = vmatprep.subr.mxu0 %v982
    %1247 = vmatpush1.msra.mxu0 %v981
    %1248 = vmatprep.subr.mxu0 %v984
    %1249 = vmatpush1.msra.mxu0 %v983
    %1250 = vmatprep.subr.mxu0 %v986
    %1251 = vmatpush1.msra.mxu0 %v985
    %1252 = vmatprep.subr.mxu0 %v988
    %1253 = vmatpush1.msra.mxu0 %v987
    %1254 = vmatprep.subr.mxu0 %v990
    %1255 = vmatpush1.msra.mxu0 %v989
    %1256 = vmatprep.subr.mxu0 %v992
    %1257 = vmatpush1.msra.mxu0 %v991
    %1258 = vmatprep.subr.mxu0 %v994
    %1259 = vmatpush1.msra.mxu0 %v993
    %1260 = vmatprep.subr.mxu0 %v996
    %1261 = vmatpush1.msra.mxu0 %v995
    %1262 = vmatprep.mubr.f32.mxu0 %v864
    %1263 = vmatmul.mubr.f32.gmra.mrb[0].mxu0 %v863
    %v1264 = vpop.f32.mrb[0].mxu0
    %v1265 = vadd.f32 %v1194, %v1264
    %v1266 = vpop.f32.mrb[0].mxu0
    %v1267 = vadd.f32 %v1196, %v1266
    %1268 = vdwg.mxu0
    %1269 = vmatprep.subr.mxu0 %v998
    %1270 = vmatpush1.msra.mxu0 %v997
    %1271 = vmatprep.subr.mxu0 %v1000
    %1272 = vmatpush1.msra.mxu0 %v999
    %1273 = vmatprep.subr.mxu0 %v1002
    %1274 = vmatpush1.msra.mxu0 %v1001
    %1275 = vmatprep.subr.mxu0 %v1004
    %1276 = vmatpush1.msra.mxu0 %v1003
    %1277 = vmatprep.subr.mxu0 %v1006
    %1278 = vmatpush1.msra.mxu0 %v1005
    %1279 = vmatprep.subr.mxu0 %v1008
    %1280 = vmatpush1.msra.mxu0 %v1007
    %1281 = vmatprep.subr.mxu0 %v1010
    %1282 = vmatpush1.msra.mxu0 %v1009
    %1283 = vmatprep.subr.mxu0 %v1012
    %1284 = vmatpush1.msra.mxu0 %v1011
    %1285 = vmatprep.subr.mxu0 %v1014
    %1286 = vmatpush1.msra.mxu0 %v1013
    %1287 = vmatprep.subr.mxu0 %v1016
    %1288 = vmatpush1.msra.mxu0 %v1015
    %1289 = vmatprep.subr.mxu0 %v1018
    %1290 = vmatpush1.msra.mxu0 %v1017
    %1291 = vmatprep.subr.mxu0 %v1020
    %1292 = vmatpush1.msra.mxu0 %v1019
    %1293 = vmatprep.subr.mxu0 %v1022
    %1294 = vmatpush1.msra.mxu0 %v1021
    %1295 = vmatprep.subr.mxu0 %v1024
    %1296 = vmatpush1.msra.mxu0 %v1023
    %1297 = vmatprep.subr.mxu0 %v1026
    %1298 = vmatpush1.msra.mxu0 %v1025
    %1299 = vmatprep.subr.mxu0 %v1028
    %1300 = vmatpush1.msra.mxu0 %v1027
    %1301 = vmatprep.subr.mxu0 %v1030
    %1302 = vmatpush1.msra.mxu0 %v1029
    %1303 = vmatprep.subr.mxu0 %v1032
    %1304 = vmatpush1.msra.mxu0 %v1031
    %1305 = vmatprep.subr.mxu0 %v1034
    %1306 = vmatpush1.msra.mxu0 %v1033
    %1307 = vmatprep.subr.mxu0 %v1036
    %1308 = vmatpush1.msra.mxu0 %v1035
    %1309 = vmatprep.subr.mxu0 %v1038
    %1310 = vmatpush1.msra.mxu0 %v1037
    %1311 = vmatprep.subr.mxu0 %v1040
    %1312 = vmatpush1.msra.mxu0 %v1039
    %1313 = vmatprep.subr.mxu0 %v1042
    %1314 = vmatpush1.msra.mxu0 %v1041
    %1315 = vmatprep.subr.mxu0 %v1044
    %1316 = vmatpush1.msra.mxu0 %v1043
    %1317 = vmatprep.subr.mxu0 %v1046
    %1318 = vmatpush1.msra.mxu0 %v1045
    %1319 = vmatprep.subr.mxu0 %v1048
    %1320 = vmatpush1.msra.mxu0 %v1047
    %1321 = vmatprep.subr.mxu0 %v1050
    %1322 = vmatpush1.msra.mxu0 %v1049
    %1323 = vmatprep.subr.mxu0 %v1052
    %1324 = vmatpush1.msra.mxu0 %v1051
    %1325 = vmatprep.subr.mxu0 %v1054
    %1326 = vmatpush1.msra.mxu0 %v1053
    %1327 = vmatprep.subr.mxu0 %v1056
    %1328 = vmatpush1.msra.mxu0 %v1055
    %1329 = vmatprep.subr.mxu0 %v1058
    %1330 = vmatpush1.msra.mxu0 %v1057
    %1331 = vmatprep.subr.mxu0 %v1060
    %1332 = vmatpush1.msra.mxu0 %v1059
    %1333 = vmatprep.mubr.f32.mxu0 %v866
    %1334 = vmatmul.mubr.f32.gmra.mrb[0].mxu0 %v865
    %v1335 = vpop.f32.mrb[0].mxu0
    %v1336 = vadd.f32 %v1265, %v1335
    %v1337 = vpop.f32.mrb[0].mxu0
    %v1338 = vadd.f32 %v1267, %v1337
    %1339 = vdwg.mxu0
    %1340 = vmatprep.subr.mxu0 %v1062
    %1341 = vmatpush1.msra.mxu0 %v1061
    %1342 = vmatprep.subr.mxu0 %v1064
    %1343 = vmatpush1.msra.mxu0 %v1063
    %1344 = vmatprep.subr.mxu0 %v1066
    %1345 = vmatpush1.msra.mxu0 %v1065
    %1346 = vmatprep.subr.mxu0 %v1068
    %1347 = vmatpush1.msra.mxu0 %v1067
    %1348 = vmatprep.subr.mxu0 %v1070
    %1349 = vmatpush1.msra.mxu0 %v1069
    %1350 = vmatprep.subr.mxu0 %v1072
    %1351 = vmatpush1.msra.mxu0 %v1071
    %1352 = vmatprep.subr.mxu0 %v1074
    %1353 = vmatpush1.msra.mxu0 %v1073
    %1354 = vmatprep.subr.mxu0 %v1076
    %1355 = vmatpush1.msra.mxu0 %v1075
    %1356 = vmatprep.subr.mxu0 %v1078
    %1357 = vmatpush1.msra.mxu0 %v1077
    %1358 = vmatprep.subr.mxu0 %v1080
    %1359 = vmatpush1.msra.mxu0 %v1079
    %1360 = vmatprep.subr.mxu0 %v1082
    %1361 = vmatpush1.msra.mxu0 %v1081
    %1362 = vmatprep.subr.mxu0 %v1084
    %1363 = vmatpush1.msra.mxu0 %v1083
    %1364 = vmatprep.subr.mxu0 %v1086
    %1365 = vmatpush1.msra.mxu0 %v1085
    %1366 = vmatprep.subr.mxu0 %v1088
    %1367 = vmatpush1.msra.mxu0 %v1087
    %1368 = vmatprep.subr.mxu0 %v1090
    %1369 = vmatpush1.msra.mxu0 %v1089
    %1370 = vmatprep.subr.mxu0 %v1092
    %1371 = vmatpush1.msra.mxu0 %v1091
    %1372 = vmatprep.subr.mxu0 %v1094
    %1373 = vmatpush1.msra.mxu0 %v1093
    %1374 = vmatprep.subr.mxu0 %v1096
    %1375 = vmatpush1.msra.mxu0 %v1095
    %1376 = vmatprep.subr.mxu0 %v1098
    %1377 = vmatpush1.msra.mxu0 %v1097
    %1378 = vmatprep.subr.mxu0 %v1100
    %1379 = vmatpush1.msra.mxu0 %v1099
    %1380 = vmatprep.subr.mxu0 %v1102
    %1381 = vmatpush1.msra.mxu0 %v1101
    %1382 = vmatprep.subr.mxu0 %v1104
    %1383 = vmatpush1.msra.mxu0 %v1103
    %1384 = vmatprep.subr.mxu0 %v1106
    %1385 = vmatpush1.msra.mxu0 %v1105
    %1386 = vmatprep.subr.mxu0 %v1108
    %1387 = vmatpush1.msra.mxu0 %v1107
    %1388 = vmatprep.subr.mxu0 %v1110
    %1389 = vmatpush1.msra.mxu0 %v1109
    %1390 = vmatprep.subr.mxu0 %v1112
    %1391 = vmatpush1.msra.mxu0 %v1111
    %1392 = vmatprep.subr.mxu0 %v1114
    %1393 = vmatpush1.msra.mxu0 %v1113
    %1394 = vmatprep.subr.mxu0 %v1116
    %1395 = vmatpush1.msra.mxu0 %v1115
    %1396 = vmatprep.subr.mxu0 %v1118
    %1397 = vmatpush1.msra.mxu0 %v1117
    %1398 = vmatprep.subr.mxu0 %v1120
    %1399 = vmatpush1.msra.mxu0 %v1119
    %1400 = vmatprep.subr.mxu0 %v1122
    %1401 = vmatpush1.msra.mxu0 %v1121
    %1402 = vmatprep.subr.mxu0 %v1124
    %1403 = vmatpush1.msra.mxu0 %v1123
    %1404 = vmatprep.mubr.f32.mxu0 %v868
    %1405 = vmatmul.mubr.f32.gmra.mrb[0].mxu0 %v867
    %v1406 = vpop.f32.mrb[0].mxu0
    %v1407 = vadd.f32 %v1336, %v1406
    %v1408 = vpop.f32.mrb[0].mxu0
    %v1409 = vadd.f32 %v1338, %v1408
    %1410 = vdwg.mxu0
    %v1411 = vadd.f32 %v1407, %v277
    %v1412 = vadd.f32 %v1409, %v278
    %1413 = vst [vmem:[#allocation13] sm:$0xff] %v1411
    %1414 = vst [vmem:[#allocation13 + $0x8] sm:$0xff] %v1412
    // Predicated region
    $region54: #{tpu_custom_call.1} parent=1 // pred_check
      _
    $region55: #{tpu_custom_call.1} parent=1 // pred_check_branch
      %1416 = sbr.rel (0) target = $region57
    $region56: #{tpu_custom_call.1} parent=1 // pred_region
      %s1418 = ssub.s32 256, 256
      %1419 = vsyncadd [#allocation6], %s1418
      %s1421 = sshll.u32 [#allocation13], 4
      %s1422 = int_to_ptr.vmem [resolvable:$true] %s1421
      %1424 = dma.vmem_to_hbm [thread:$0]  %s1422, 256, %s8, [#allocation6]
    $region57: #{tpu_custom_call.1} parent=1 // pred_fallthru
      _
    // Predicated region
    $region58: #{tpu_custom_call.1} parent=1 // pred_check
      _
    $region59: #{tpu_custom_call.1} parent=1 // pred_check_branch
      %1426 = sbr.rel (0) target = $region61
    $region60: #{tpu_custom_call.1} parent=1 // pred_region
      %1427 = dma.done [#allocation6], 256
    $region61: #{tpu_custom_call.1} parent=1 // pred_fallthru
      _
    %1428 = vsyncpa [#allocation5], 1
    %1429 = vsyncpa [#allocation8], 1
    %1430 = vsyncpa [#allocation11], 1
    %1431 = vsyncpa [#allocation6], 1

// kernel: tpu_custom_call.1
$region0: #{tpu_custom_call.1}
  #allocation0 [shape = 'u32[]', space=smem, size = 0x4, offset = 0x4, fixed_abs, tag = 'smem constant byte address 0x4 - core index']
  #allocation1 [shape = 'u32[144,128]{1,0:T(1,128)}', space=vmem, size = 0x12000, scoped, tag = 'internal scratch']
  #allocation2 [shape = 'f32[1]{0:T(128)S(6)}', space=smem, size = 0x200, scoped, tag = 'scoped memory for tpu_custom_call.1']
  #allocation3 [shape = 'f32[1]{0:T(128)S(6)}', space=smem, size = 0x200, scoped, tag = 'scoped memory for tpu_custom_call.1']
  %s0 = inlined_call_operand.<no memory space> [shape: f32[1], index: 0, kind: input, shape index: {}]
  %s1 = inlined_call_operand.<no memory space> [shape: f32[1], index: 1, kind: input, shape index: {}]
  %s2 = inlined_call_operand.hbm [shape: f32[8,128], index: 2, kind: input, shape index: {}]
  %s3 = inlined_call_operand.hbm [shape: f32[8,256], index: 3, kind: input, shape index: {}]
  %s4 = inlined_call_operand.hbm [shape: f32[128,256], index: 4, kind: input, shape index: {}]
  %s5 = inlined_call_operand.hbm [shape: f32[256,1024], index: 5, kind: input, shape index: {}]
  %s6 = inlined_call_operand.vmem [shape: f32[1,1024], index: 6, kind: input, shape index: {}]
  %s7 = inlined_call_operand.hbm [shape: f32[1024,256], index: 7, kind: input, shape index: {}]
  %s8 = inlined_call_operand.hbm [shape: f32[8,256], index: 8, kind: output, shape index: {}]
  %s9 = sld [smem:[#allocation0]]
  $region62: #{tpu_custom_call.1} parent=0
    _
  %s11 = ssub.s32 1, %s9
  %s12 = scalar_select 0, %s11, %s9
  %13 = sst [smem:[#allocation2]] %s0
  %14 = sst [smem:[#allocation3]] %s1
  $region1: #{tpu_custom_call.1} parent=0
    #allocation4 [shape = 'u8[4096]{0}', space=vmem, size = 0x1000, scoped, tag = 'input window, operand 2, single buffered']
    #allocation5 [shape = 's32[1]{0}', space=sflag, size = 0x4, scoped, tag = 'scoped memory for tpu_custom_call.1']
    #allocation6 [shape = 's32[1]{0}', space=sflag, size = 0x4, scoped, tag = 'scoped memory for tpu_custom_call.1']
    #allocation7 [shape = 'u8[8192]{0}', space=vmem, size = 0x2000, scoped, tag = 'input window, operand 3, single buffered']
    #allocation8 [shape = 's32[1]{0}', space=sflag, size = 0x4, scoped, tag = 'scoped memory for tpu_custom_call.1']
    #allocation9 [shape = 'u8[131072]{0}', space=vmem, size = 0x20000, scoped, tag = 'input window, operand 4, single buffered']
    #allocation10 [shape = 'u8[1048576]{0}', space=vmem, size = 0x100000, scoped, tag = 'input window, operand 5, single buffered']
    #allocation11 [shape = 's32[1]{0}', space=sflag, size = 0x4, scoped, tag = 'scoped memory for tpu_custom_call.1']
    #allocation12 [shape = 'u8[1048576]{0}', space=vmem, size = 0x100000, scoped, tag = 'input window, operand 7, single buffered']
    #allocation13 [shape = 'u8[8192]{0}', space=vmem, size = 0x2000, scoped, tag = 'output window, operand 0, single buffered']
    %15 = vsyncpa [#allocation5], 0
    %16 = vsyncpa [#allocation8], 0
    %17 = vsyncpa [#allocation11], 0
    %18 = vsyncpa [#allocation6], 0
    // Predicated region
    $region2: #{tpu_custom_call.1} parent=1 // pred_check
      _
    $region3: #{tpu_custom_call.1} parent=1 // pred_check_branch
      %20 = sbr.rel (0) target = $region5
    $region4: #{tpu_custom_call.1} parent=1 // pred_region
      _
    $region5: #{tpu_custom_call.1} parent=1 // pred_fallthru
      _
    // Predicated region
    $region6: #{tpu_custom_call.1} parent=1 // pred_check
      _
    $region7: #{tpu_custom_call.1} parent=1 // pred_check_branch
      %22 = sbr.rel (0) target = $region9
    $region8: #{tpu_custom_call.1} parent=1 // pred_region
      _
    $region9: #{tpu_custom_call.1} parent=1 // pred_fallthru
      _
    // Predicated region
    $region10: #{tpu_custom_call.1} parent=1 // pred_check
      _
    $region11: #{tpu_custom_call.1} parent=1 // pred_check_branch
      %24 = sbr.rel (0) target = $region13
    $region12: #{tpu_custom_call.1} parent=1 // pred_region
      %s26 = ssub.s32 128, 128
      %27 = vsyncadd [#allocation5], %s26
      %s29 = sshll.u32 [#allocation4], 4
      %s30 = int_to_ptr.vmem [resolvable:$true] %s29
      %32 = dma.hbm_to_vmem [thread:$0]  %s2, 128, %s30, [#allocation5]
    $region13: #{tpu_custom_call.1} parent=1 // pred_fallthru
      _
    // Predicated region
    $region14: #{tpu_custom_call.1} parent=1 // pred_check
      _
    $region15: #{tpu_custom_call.1} parent=1 // pred_check_branch
      %34 = sbr.rel (0) target = $region17
    $region16: #{tpu_custom_call.1} parent=1 // pred_region
      %s36 = ssub.s32 256, 256
      %37 = vsyncadd [#allocation8], %s36
      %s39 = sshll.u32 [#allocation7], 4
      %s40 = int_to_ptr.vmem [resolvable:$true] %s39
      %42 = dma.hbm_to_vmem [thread:$0]  %s3, 256, %s40, [#allocation8]
    $region17: #{tpu_custom_call.1} parent=1 // pred_fallthru
      _
    // Predicated region
    $region18: #{tpu_custom_call.1} parent=1 // pred_check
      _
    $region19: #{tpu_custom_call.1} parent=1 // pred_check_branch
      %44 = sbr.rel (0) target = $region21
    $region20: #{tpu_custom_call.1} parent=1 // pred_region
      %s46 = ssub.s32 4096, 4096
      %47 = vsyncadd [#allocation8], %s46
      %s48 = sshll.u32 [#allocation9], 4
      %s49 = int_to_ptr.vmem [resolvable:$true] %s48
      %54 = dma.hbm_to_vmem [thread:$0]  %s4, 4096, %s49, [#allocation8], 256, 256, 16
    $region21: #{tpu_custom_call.1} parent=1 // pred_fallthru
      _
    // Predicated region
    $region22: #{tpu_custom_call.1} parent=1 // pred_check
      _
    $region23: #{tpu_custom_call.1} parent=1 // pred_check_branch
      %56 = sbr.rel (0) target = $region25
    $region24: #{tpu_custom_call.1} parent=1 // pred_region
      %s58 = ssub.s32 32768, 32768
      %59 = vsyncadd [#allocation11], %s58
      %s60 = sshll.u32 [#allocation10], 4
      %s61 = int_to_ptr.vmem [resolvable:$true] %s60
      %66 = dma.hbm_to_vmem [thread:$0]  %s5, 32768, %s61, [#allocation11], 1024, 1024, 64
    $region25: #{tpu_custom_call.1} parent=1 // pred_fallthru
      _
    // Predicated region
    $region26: #{tpu_custom_call.1} parent=1 // pred_check
      _
    $region27: #{tpu_custom_call.1} parent=1 // pred_check_branch
      %68 = sbr.rel (0) target = $region29
    $region28: #{tpu_custom_call.1} parent=1 // pred_region
      _
    $region29: #{tpu_custom_call.1} parent=1 // pred_fallthru
      _
    // Predicated region
    $region30: #{tpu_custom_call.1} parent=1 // pred_check
      _
    $region31: #{tpu_custom_call.1} parent=1 // pred_check_branch
      %70 = sbr.rel (0) target = $region33
    $region32: #{tpu_custom_call.1} parent=1 // pred_region
      %s72 = ssub.s32 32768, 32768
      %73 = vsyncadd [#allocation11], %s72
      %s74 = sshll.u32 [#allocation12], 4
      %s75 = int_to_ptr.vmem [resolvable:$true] %s74
      %80 = dma.hbm_to_vmem [thread:$0]  %s7, 32768, %s75, [#allocation11], 256, 256, 16
    $region33: #{tpu_custom_call.1} parent=1 // pred_fallthru
      _
    // Predicated region
    $region34: #{tpu_custom_call.1} parent=1 // pred_check
      _
    $region35: #{tpu_custom_call.1} parent=1 // pred_check_branch
      %82 = sbr.rel (0) target = $region37
    $region36: #{tpu_custom_call.1} parent=1 // pred_region
      %83 = dma.done [#allocation5], 128
    $region37: #{tpu_custom_call.1} parent=1 // pred_fallthru
      _
    // Predicated region
    $region38: #{tpu_custom_call.1} parent=1 // pred_check
      _
    $region39: #{tpu_custom_call.1} parent=1 // pred_check_branch
      %85 = sbr.rel (0) target = $region41
    $region40: #{tpu_custom_call.1} parent=1 // pred_region
      %86 = dma.done [#allocation8], 256
    $region41: #{tpu_custom_call.1} parent=1 // pred_fallthru
      _
    // Predicated region
    $region42: #{tpu_custom_call.1} parent=1 // pred_check
      _
    $region43: #{tpu_custom_call.1} parent=1 // pred_check_branch
      %88 = sbr.rel (0) target = $region45
    $region44: #{tpu_custom_call.1} parent=1 // pred_region
      %89 = dma.done [#allocation8], 4096
    $region45: #{tpu_custom_call.1} parent=1 // pred_fallthru
      _
    // Predicated region
    $region46: #{tpu_custom_call.1} parent=1 // pred_check
      _
    $region47: #{tpu_custom_call.1} parent=1 // pred_check_branch
      %91 = sbr.rel (0) target = $region49
    $region48: #{tpu_custom_call.1} parent=1 // pred_region
      %92 = dma.done [#allocation11], 32768
    $region49: #{tpu_custom_call.1} parent=1 // pred_fallthru
      _
    // Predicated region
    $region50: #{tpu_custom_call.1} parent=1 // pred_check
      _
    $region51: #{tpu_custom_call.1} parent=1 // pred_check_branch
      %94 = sbr.rel (0) target = $region53
    $region52: #{tpu_custom_call.1} parent=1 // pred_region
      %95 = dma.done [#allocation11], 32768
    $region53: #{tpu_custom_call.1} parent=1 // pred_fallthru
      _
    %v96 = vld [vmem:[#allocation7] sm:$0xff]
    %v97 = vld [vmem:[#allocation7 + $0x8] sm:$0xff]
    %v98 = vld [vmem:[#allocation4] sm:$0xff]
    %v99 = vld [vmem:[#allocation9] sm:$0xff]
    %v100 = vld [vmem:[#allocation9 + $0x8] sm:$0xff]
    %v101 = vld [vmem:[#allocation9 + $0x10] sm:$0xff]
    %v102 = vld [vmem:[#allocation9 + $0x18] sm:$0xff]
    %v103 = vld [vmem:[#allocation9 + $0x20] sm:$0xff]
    %v104 = vld [vmem:[#allocation9 + $0x28] sm:$0xff]
    %v105 = vld [vmem:[#allocation9 + $0x30] sm:$0xff]
    %v106 = vld [vmem:[#allocation9 + $0x38] sm:$0xff]
    %v107 = vld [vmem:[#allocation9 + $0x40] sm:$0xff]
    %v108 = vld [vmem:[#allocation9 + $0x48] sm:$0xff]
    %v109 = vld [vmem:[#allocation9 + $0x50] sm:$0xff]
    %v110 = vld [vmem:[#allocation9 + $0x58] sm:$0xff]
    %v111 = vld [vmem:[#allocation9 + $0x60] sm:$0xff]
    %v112 = vld [vmem:[#allocation9 + $0x68] sm:$0xff]
    %v113 = vld [vmem:[#allocation9 + $0x70] sm:$0xff]
    %v114 = vld [vmem:[#allocation9 + $0x78] sm:$0xff]
    %v115 = vld [vmem:[#allocation9 + $0x80] sm:$0xff]
    %v116 = vld [vmem:[#allocation9 + $0x88] sm:$0xff]
    %v117 = vld [vmem:[#allocation9 + $0x90] sm:$0xff]
    %v118 = vld [vmem:[#allocation9 + $0x98] sm:$0xff]
    %v119 = vld [vmem:[#allocation9 + $0xa0] sm:$0xff]
    %v120 = vld [vmem:[#allocation9 + $0xa8] sm:$0xff]
    %v121 = vld [vmem:[#allocation9 + $0xb0] sm:$0xff]
    %v122 = vld [vmem:[#allocation9 + $0xb8] sm:$0xff]
    %v123 = vld [vmem:[#allocation9 + $0xc0] sm:$0xff]
    %v124 = vld [vmem:[#allocation9 + $0xc8] sm:$0xff]
    %v125 = vld [vmem:[#allocation9 + $0xd0] sm:$0xff]
    %v126 = vld [vmem:[#allocation9 + $0xd8] sm:$0xff]
    %v127 = vld [vmem:[#allocation9 + $0xe0] sm:$0xff]
    %v128 = vld [vmem:[#allocation9 + $0xe8] sm:$0xff]
    %v129 = vld [vmem:[#allocation9 + $0xf0] sm:$0xff]
    %v130 = vld [vmem:[#allocation9 + $0xf8] sm:$0xff]
    %131 = vmatprep.subr.mxu0 %v100
    %132 = vmatpush1.xpose.msra.mxu0 %v99
    %133 = vmatprep.subr.mxu0 %v102
    %134 = vmatpush1.xpose.msra.mxu0 %v101
    %135 = vmatprep.subr.mxu0 %v104
    %136 = vmatpush1.xpose.msra.mxu0 %v103
    %137 = vmatprep.subr.mxu0 %v106
    %138 = vmatpush1.xpose.msra.mxu0 %v105
    %139 = vmatprep.subr.mxu0 %v108
    %140 = vmatpush1.xpose.msra.mxu0 %v107
    %141 = vmatprep.subr.mxu0 %v110
    %142 = vmatpush1.xpose.msra.mxu0 %v109
    %143 = vmatprep.subr.mxu0 %v112
    %144 = vmatpush1.xpose.msra.mxu0 %v111
    %145 = vmatprep.subr.mxu0 %v114
    %146 = vmatpush1.xpose.msra.mxu0 %v113
    %147 = vmatprep.subr.mxu0 %v116
    %148 = vmatpush1.xpose.msra.mxu0 %v115
    %149 = vmatprep.subr.mxu0 %v118
    %150 = vmatpush1.xpose.msra.mxu0 %v117
    %151 = vmatprep.subr.mxu0 %v120
    %152 = vmatpush1.xpose.msra.mxu0 %v119
    %153 = vmatprep.subr.mxu0 %v122
    %154 = vmatpush1.xpose.msra.mxu0 %v121
    %155 = vmatprep.subr.mxu0 %v124
    %156 = vmatpush1.xpose.msra.mxu0 %v123
    %157 = vmatprep.subr.mxu0 %v126
    %158 = vmatpush1.xpose.msra.mxu0 %v125
    %159 = vmatprep.subr.mxu0 %v128
    %160 = vmatpush1.xpose.msra.mxu0 %v127
    %161 = vmatprep.subr.mxu0 %v130
    %162 = vmatpush1.xpose.msra.mxu0 %v129
    %163 = vmatprep.subr.mxu0 0.0
    %164 = vmatpush1.xpose.msra.mxu0 0.0
    %165 = vmatprep.subr.mxu0 0.0
    %166 = vmatpush1.xpose.msra.mxu0 0.0
    %167 = vmatprep.subr.mxu0 0.0
    %168 = vmatpush1.xpose.msra.mxu0 0.0
    %169 = vmatprep.subr.mxu0 0.0
    %170 = vmatpush1.xpose.msra.mxu0 0.0
    %171 = vmatprep.subr.mxu0 0.0
    %172 = vmatpush1.xpose.msra.mxu0 0.0
    %173 = vmatprep.subr.mxu0 0.0
    %174 = vmatpush1.xpose.msra.mxu0 0.0
    %175 = vmatprep.subr.mxu0 0.0
    %176 = vmatpush1.xpose.msra.mxu0 0.0
    %177 = vmatprep.subr.mxu0 0.0
    %178 = vmatpush1.xpose.msra.mxu0 0.0
    %179 = vmatprep.subr.mxu0 0.0
    %180 = vmatpush1.xpose.msra.mxu0 0.0
    %181 = vmatprep.subr.mxu0 0.0
    %182 = vmatpush1.xpose.msra.mxu0 0.0
    %183 = vmatprep.subr.mxu0 0.0
    %184 = vmatpush1.xpose.msra.mxu0 0.0
    %185 = vmatprep.subr.mxu0 0.0
    %186 = vmatpush1.xpose.msra.mxu0 0.0
    %187 = vmatprep.subr.mxu0 0.0
    %188 = vmatpush1.xpose.msra.mxu0 0.0
    %189 = vmatprep.subr.mxu0 0.0
    %190 = vmatpush1.xpose.msra.mxu0 0.0
    %191 = vmatprep.subr.mxu0 0.0
    %192 = vmatpush1.xpose.msra.mxu0 0.0
    %193 = vmatprep.subr.mxu0 0.0
    %194 = vmatpush1.xpose.msra.mxu0 0.0
    %195 = vmatprep.mubr.f32.mxu0 %v97
    %196 = vmatmul.mubr.f32.gmra.mrb[0].mxu0 %v96
    %v197 = vpop.f32.mrb[0].mxu0
    %v198 = vadd.f32 0.0, %v197
    %v199 = vpop.f32.mrb[0].mxu0
    %200 = vdwg.mxu0
    %v201 = vsub.f32 %v98, %v198
    %s202 = sld [smem:[#allocation2]]
    %203 = vmatprep.subr.mxu0 %v100
    %204 = vmatpush1.msra.mxu0 %v99
    %205 = vmatprep.subr.mxu0 %v102
    %206 = vmatpush1.msra.mxu0 %v101
    %207 = vmatprep.subr.mxu0 %v104
    %208 = vmatpush1.msra.mxu0 %v103
    %209 = vmatprep.subr.mxu0 %v106
    %210 = vmatpush1.msra.mxu0 %v105
    %211 = vmatprep.subr.mxu0 %v108
    %212 = vmatpush1.msra.mxu0 %v107
    %213 = vmatprep.subr.mxu0 %v110
    %214 = vmatpush1.msra.mxu0 %v109
    %215 = vmatprep.subr.mxu0 %v112
    %216 = vmatpush1.msra.mxu0 %v111
    %217 = vmatprep.subr.mxu0 %v114
    %218 = vmatpush1.msra.mxu0 %v113
    %219 = vmatprep.subr.mxu0 %v116
    %220 = vmatpush1.msra.mxu0 %v115
    %221 = vmatprep.subr.mxu0 %v118
    %222 = vmatpush1.msra.mxu0 %v117
    %223 = vmatprep.subr.mxu0 %v120
    %224 = vmatpush1.msra.mxu0 %v119
    %225 = vmatprep.subr.mxu0 %v122
    %226 = vmatpush1.msra.mxu0 %v121
    %227 = vmatprep.subr.mxu0 %v124
    %228 = vmatpush1.msra.mxu0 %v123
    %229 = vmatprep.subr.mxu0 %v126
    %230 = vmatpush1.msra.mxu0 %v125
    %231 = vmatprep.subr.mxu0 %v128
    %232 = vmatpush1.msra.mxu0 %v127
    %233 = vmatprep.subr.mxu0 %v130
    %234 = vmatpush1.msra.mxu0 %v129
    %235 = vmatprep.subr.mxu0 0.0
    %236 = vmatpush1.msra.mxu0 0.0
    %237 = vmatprep.subr.mxu0 0.0
    %238 = vmatpush1.msra.mxu0 0.0
    %239 = vmatprep.subr.mxu0 0.0
    %240 = vmatpush1.msra.mxu0 0.0
    %241 = vmatprep.subr.mxu0 0.0
    %242 = vmatpush1.msra.mxu0 0.0
    %243 = vmatprep.subr.mxu0 0.0
    %244 = vmatpush1.msra.mxu0 0.0
    %245 = vmatprep.subr.mxu0 0.0
    %246 = vmatpush1.msra.mxu0 0.0
    %247 = vmatprep.subr.mxu0 0.0
    %248 = vmatpush1.msra.mxu0 0.0
    %249 = vmatprep.subr.mxu0 0.0
    %250 = vmatpush1.msra.mxu0 0.0
    %251 = vmatprep.subr.mxu0 0.0
    %252 = vmatpush1.msra.mxu0 0.0
    %253 = vmatprep.subr.mxu0 0.0
    %254 = vmatpush1.msra.mxu0 0.0
    %255 = vmatprep.subr.mxu0 0.0
    %256 = vmatpush1.msra.mxu0 0.0
    %257 = vmatprep.subr.mxu0 0.0
    %258 = vmatpush1.msra.mxu0 0.0
    %259 = vmatprep.subr.mxu0 0.0
    %260 = vmatpush1.msra.mxu0 0.0
    %261 = vmatprep.subr.mxu0 0.0
    %262 = vmatpush1.msra.mxu0 0.0
    %263 = vmatprep.subr.mxu0 0.0
    %264 = vmatpush1.msra.mxu0 0.0
    %265 = vmatprep.subr.mxu0 0.0
    %266 = vmatpush1.msra.mxu0 0.0
    %267 = vmatprep.mubr.f32.mxu0 0.0
    %268 = vmatmul.mubr.f32.gmra.mrb[0].mxu0 %v201
    %v269 = vpop.f32.mrb[0].mxu0
    %v270 = vadd.f32 0.0, %v269
    %v271 = vpop.f32.mrb[0].mxu0
    %v272 = vadd.f32 0.0, %v271
    %273 = vdwg.mxu0
    %v274 = vstv %s202
    %v275 = vmul.f32 %v274, %v270
    %v276 = vmul.f32 %v274, %v272
    %v277 = vadd.f32 %v96, %v275
    %v278 = vadd.f32 %v97, %v276
    %v279 = vld [vmem:[#allocation10] sm:$0xff]
    %v280 = vld [vmem:[#allocation10 + $0x8] sm:$0xff]
    %v281 = vld [vmem:[#allocation10 + $0x10] sm:$0xff]
    %v282 = vld [vmem:[#allocation10 + $0x18] sm:$0xff]
    %v283 = vld [vmem:[#allocation10 + $0x20] sm:$0xff]
    %v284 = vld [vmem:[#allocation10 + $0x28] sm:$0xff]
    %v285 = vld [vmem:[#allocation10 + $0x30] sm:$0xff]
    %v286 = vld [vmem:[#allocation10 + $0x38] sm:$0xff]
    %v287 = vld [vmem:[#allocation10 + $0x40] sm:$0xff]
    %v288 = vld [vmem:[#allocation10 + $0x48] sm:$0xff]
    %v289 = vld [vmem:[#allocation10 + $0x50] sm:$0xff]
    %v290 = vld [vmem:[#allocation10 + $0x58] sm:$0xff]
    %v291 = vld [vmem:[#allocation10 + $0x60] sm:$0xff]
    %v292 = vld [vmem:[#allocation10 + $0x68] sm:$0xff]
    %v293 = vld [vmem:[#allocation10 + $0x70] sm:$0xff]
    %v294 = vld [vmem:[#allocation10 + $0x78] sm:$0xff]
    %v295 = vld [vmem:[#allocation10 + $0x80] sm:$0xff]
    %v296 = vld [vmem:[#allocation10 + $0x88] sm:$0xff]
    %v297 = vld [vmem:[#allocation10 + $0x90] sm:$0xff]
    %v298 = vld [vmem:[#allocation10 + $0x98] sm:$0xff]
    %v299 = vld [vmem:[#allocation10 + $0xa0] sm:$0xff]
    %v300 = vld [vmem:[#allocation10 + $0xa8] sm:$0xff]
    %v301 = vld [vmem:[#allocation10 + $0xb0] sm:$0xff]
    %v302 = vld [vmem:[#allocation10 + $0xb8] sm:$0xff]
    %v303 = vld [vmem:[#allocation10 + $0xc0] sm:$0xff]
    %v304 = vld [vmem:[#allocation10 + $0xc8] sm:$0xff]
    %v305 = vld [vmem:[#allocation10 + $0xd0] sm:$0xff]
    %v306 = vld [vmem:[#allocation10 + $0xd8] sm:$0xff]
    %v307 = vld [vmem:[#allocation10 + $0xe0] sm:$0xff]
    %v308 = vld [vmem:[#allocation10 + $0xe8] sm:$0xff]
    %v309 = vld [vmem:[#allocation10 + $0xf0] sm:$0xff]
    %v310 = vld [vmem:[#allocation10 + $0xf8] sm:$0xff]
    %v311 = vld [vmem:[#allocation10 + $0x100] sm:$0xff]
    %v312 = vld [vmem:[#allocation10 + $0x108] sm:$0xff]
    %v313 = vld [vmem:[#allocation10 + $0x110] sm:$0xff]
    %v314 = vld [vmem:[#allocation10 + $0x118] sm:$0xff]
    %v315 = vld [vmem:[#allocation10 + $0x120] sm:$0xff]
    %v316 = vld [vmem:[#allocation10 + $0x128] sm:$0xff]
    %v317 = vld [vmem:[#allocation10 + $0x130] sm:$0xff]
    %v318 = vld [vmem:[#allocation10 + $0x138] sm:$0xff]
    %v319 = vld [vmem:[#allocation10 + $0x140] sm:$0xff]
    %v320 = vld [vmem:[#allocation10 + $0x148] sm:$0xff]
    %v321 = vld [vmem:[#allocation10 + $0x150] sm:$0xff]
    %v322 = vld [vmem:[#allocation10 + $0x158] sm:$0xff]
    %v323 = vld [vmem:[#allocation10 + $0x160] sm:$0xff]
    %v324 = vld [vmem:[#allocation10 + $0x168] sm:$0xff]
    %v325 = vld [vmem:[#allocation10 + $0x170] sm:$0xff]
    %v326 = vld [vmem:[#allocation10 + $0x178] sm:$0xff]
    %v327 = vld [vmem:[#allocation10 + $0x180] sm:$0xff]
    %v328 = vld [vmem:[#allocation10 + $0x188] sm:$0xff]
    %v329 = vld [vmem:[#allocation10 + $0x190] sm:$0xff]
    %v330 = vld [vmem:[#allocation10 + $0x198] sm:$0xff]
    %v331 = vld [vmem:[#allocation10 + $0x1a0] sm:$0xff]
    %v332 = vld [vmem:[#allocation10 + $0x1a8] sm:$0xff]
    %v333 = vld [vmem:[#allocation10 + $0x1b0] sm:$0xff]
    %v334 = vld [vmem:[#allocation10 + $0x1b8] sm:$0xff]
    %v335 = vld [vmem:[#allocation10 + $0x1c0] sm:$0xff]
    %v336 = vld [vmem:[#allocation10 + $0x1c8] sm:$0xff]
    %v337 = vld [vmem:[#allocation10 + $0x1d0] sm:$0xff]
    %v338 = vld [vmem:[#allocation10 + $0x1d8] sm:$0xff]
    %v339 = vld [vmem:[#allocation10 + $0x1e0] sm:$0xff]
    %v340 = vld [vmem:[#allocation10 + $0x1e8] sm:$0xff]
    %v341 = vld [vmem:[#allocation10 + $0x1f0] sm:$0xff]
    %v342 = vld [vmem:[#allocation10 + $0x1f8] sm:$0xff]
    %v343 = vld [vmem:[#allocation10 + $0x200] sm:$0xff]
    %v344 = vld [vmem:[#allocation10 + $0x208] sm:$0xff]
    %v345 = vld [vmem:[#allocation10 + $0x210] sm:$0xff]
    %v346 = vld [vmem:[#allocation10 + $0x218] sm:$0xff]
    %v347 = vld [vmem:[#allocation10 + $0x220] sm:$0xff]
    %v348 = vld [vmem:[#allocation10 + $0x228] sm:$0xff]
    %v349 = vld [vmem:[#allocation10 + $0x230] sm:$0xff]
    %v350 = vld [vmem:[#allocation10 + $0x238] sm:$0xff]
    %v351 = vld [vmem:[#allocation10 + $0x240] sm:$0xff]
    %v352 = vld [vmem:[#allocation10 + $0x248] sm:$0xff]
    %v353 = vld [vmem:[#allocation10 + $0x250] sm:$0xff]
    %v354 = vld [vmem:[#allocation10 + $0x258] sm:$0xff]
    %v355 = vld [vmem:[#allocation10 + $0x260] sm:$0xff]
    %v356 = vld [vmem:[#allocation10 + $0x268] sm:$0xff]
    %v357 = vld [vmem:[#allocation10 + $0x270] sm:$0xff]
    %v358 = vld [vmem:[#allocation10 + $0x278] sm:$0xff]
    %v359 = vld [vmem:[#allocation10 + $0x280] sm:$0xff]
    %v360 = vld [vmem:[#allocation10 + $0x288] sm:$0xff]
    %v361 = vld [vmem:[#allocation10 + $0x290] sm:$0xff]
    %v362 = vld [vmem:[#allocation10 + $0x298] sm:$0xff]
    %v363 = vld [vmem:[#allocation10 + $0x2a0] sm:$0xff]
    %v364 = vld [vmem:[#allocation10 + $0x2a8] sm:$0xff]
    %v365 = vld [vmem:[#allocation10 + $0x2b0] sm:$0xff]
    %v366 = vld [vmem:[#allocation10 + $0x2b8] sm:$0xff]
    %v367 = vld [vmem:[#allocation10 + $0x2c0] sm:$0xff]
    %v368 = vld [vmem:[#allocation10 + $0x2c8] sm:$0xff]
    %v369 = vld [vmem:[#allocation10 + $0x2d0] sm:$0xff]
    %v370 = vld [vmem:[#allocation10 + $0x2d8] sm:$0xff]
    %v371 = vld [vmem:[#allocation10 + $0x2e0] sm:$0xff]
    %v372 = vld [vmem:[#allocation10 + $0x2e8] sm:$0xff]
    %v373 = vld [vmem:[#allocation10 + $0x2f0] sm:$0xff]
    %v374 = vld [vmem:[#allocation10 + $0x2f8] sm:$0xff]
    %v375 = vld [vmem:[#allocation10 + $0x300] sm:$0xff]
    %v376 = vld [vmem:[#allocation10 + $0x308] sm:$0xff]
    %v377 = vld [vmem:[#allocation10 + $0x310] sm:$0xff]
    %v378 = vld [vmem:[#allocation10 + $0x318] sm:$0xff]
    %v379 = vld [vmem:[#allocation10 + $0x320] sm:$0xff]
    %v380 = vld [vmem:[#allocation10 + $0x328] sm:$0xff]
    %v381 = vld [vmem:[#allocation10 + $0x330] sm:$0xff]
    %v382 = vld [vmem:[#allocation10 + $0x338] sm:$0xff]
    %v383 = vld [vmem:[#allocation10 + $0x340] sm:$0xff]
    %v384 = vld [vmem:[#allocation10 + $0x348] sm:$0xff]
    %v385 = vld [vmem:[#allocation10 + $0x350] sm:$0xff]
    %v386 = vld [vmem:[#allocation10 + $0x358] sm:$0xff]
    %v387 = vld [vmem:[#allocation10 + $0x360] sm:$0xff]
    %v388 = vld [vmem:[#allocation10 + $0x368] sm:$0xff]
    %v389 = vld [vmem:[#allocation10 + $0x370] sm:$0xff]
    %v390 = vld [vmem:[#allocation10 + $0x378] sm:$0xff]
    %v391 = vld [vmem:[#allocation10 + $0x380] sm:$0xff]
    %v392 = vld [vmem:[#allocation10 + $0x388] sm:$0xff]
    %v393 = vld [vmem:[#allocation10 + $0x390] sm:$0xff]
    %v394 = vld [vmem:[#allocation10 + $0x398] sm:$0xff]
    %v395 = vld [vmem:[#allocation10 + $0x3a0] sm:$0xff]
    %v396 = vld [vmem:[#allocation10 + $0x3a8] sm:$0xff]
    %v397 = vld [vmem:[#allocation10 + $0x3b0] sm:$0xff]
    %v398 = vld [vmem:[#allocation10 + $0x3b8] sm:$0xff]
    %v399 = vld [vmem:[#allocation10 + $0x3c0] sm:$0xff]
    %v400 = vld [vmem:[#allocation10 + $0x3c8] sm:$0xff]
    %v401 = vld [vmem:[#allocation10 + $0x3d0] sm:$0xff]
    %v402 = vld [vmem:[#allocation10 + $0x3d8] sm:$0xff]
    %v403 = vld [vmem:[#allocation10 + $0x3e0] sm:$0xff]
    %v404 = vld [vmem:[#allocation10 + $0x3e8] sm:$0xff]
    %v405 = vld [vmem:[#allocation10 + $0x3f0] sm:$0xff]
    %v406 = vld [vmem:[#allocation10 + $0x3f8] sm:$0xff]
    %v407 = vld [vmem:[#allocation10 + $0x400] sm:$0xff]
    %v408 = vld [vmem:[#allocation10 + $0x408] sm:$0xff]
    %v409 = vld [vmem:[#allocation10 + $0x410] sm:$0xff]
    %v410 = vld [vmem:[#allocation10 + $0x418] sm:$0xff]
    %v411 = vld [vmem:[#allocation10 + $0x420] sm:$0xff]
    %v412 = vld [vmem:[#allocation10 + $0x428] sm:$0xff]
    %v413 = vld [vmem:[#allocation10 + $0x430] sm:$0xff]
    %v414 = vld [vmem:[#allocation10 + $0x438] sm:$0xff]
    %v415 = vld [vmem:[#allocation10 + $0x440] sm:$0xff]
    %v416 = vld [vmem:[#allocation10 + $0x448] sm:$0xff]
    %v417 = vld [vmem:[#allocation10 + $0x450] sm:$0xff]
    %v418 = vld [vmem:[#allocation10 + $0x458] sm:$0xff]
    %v419 = vld [vmem:[#allocation10 + $0x460] sm:$0xff]
    %v420 = vld [vmem:[#allocation10 + $0x468] sm:$0xff]
    %v421 = vld [vmem:[#allocation10 + $0x470] sm:$0xff]
    %v422 = vld [vmem:[#allocation10 + $0x478] sm:$0xff]
    %v423 = vld [vmem:[#allocation10 + $0x480] sm:$0xff]
    %v424 = vld [vmem:[#allocation10 + $0x488] sm:$0xff]
    %v425 = vld [vmem:[#allocation10 + $0x490] sm:$0xff]
    %v426 = vld [vmem:[#allocation10 + $0x498] sm:$0xff]
    %v427 = vld [vmem:[#allocation10 + $0x4a0] sm:$0xff]
    %v428 = vld [vmem:[#allocation10 + $0x4a8] sm:$0xff]
    %v429 = vld [vmem:[#allocation10 + $0x4b0] sm:$0xff]
    %v430 = vld [vmem:[#allocation10 + $0x4b8] sm:$0xff]
    %v431 = vld [vmem:[#allocation10 + $0x4c0] sm:$0xff]
    %v432 = vld [vmem:[#allocation10 + $0x4c8] sm:$0xff]
    %v433 = vld [vmem:[#allocation10 + $0x4d0] sm:$0xff]
    %v434 = vld [vmem:[#allocation10 + $0x4d8] sm:$0xff]
    %v435 = vld [vmem:[#allocation10 + $0x4e0] sm:$0xff]
    %v436 = vld [vmem:[#allocation10 + $0x4e8] sm:$0xff]
    %v437 = vld [vmem:[#allocation10 + $0x4f0] sm:$0xff]
    %v438 = vld [vmem:[#allocation10 + $0x4f8] sm:$0xff]
    %v439 = vld [vmem:[#allocation10 + $0x500] sm:$0xff]
    %v440 = vld [vmem:[#allocation10 + $0x508] sm:$0xff]
    %v441 = vld [vmem:[#allocation10 + $0x510] sm:$0xff]
    %v442 = vld [vmem:[#allocation10 + $0x518] sm:$0xff]
    %v443 = vld [vmem:[#allocation10 + $0x520] sm:$0xff]
    %v444 = vld [vmem:[#allocation10 + $0x528] sm:$0xff]
    %v445 = vld [vmem:[#allocation10 + $0x530] sm:$0xff]
    %v446 = vld [vmem:[#allocation10 + $0x538] sm:$0xff]
    %v447 = vld [vmem:[#allocation10 + $0x540] sm:$0xff]
    %v448 = vld [vmem:[#allocation10 + $0x548] sm:$0xff]
    %v449 = vld [vmem:[#allocation10 + $0x550] sm:$0xff]
    %v450 = vld [vmem:[#allocation10 + $0x558] sm:$0xff]
    %v451 = vld [vmem:[#allocation10 + $0x560] sm:$0xff]
    %v452 = vld [vmem:[#allocation10 + $0x568] sm:$0xff]
    %v453 = vld [vmem:[#allocation10 + $0x570] sm:$0xff]
    %v454 = vld [vmem:[#allocation10 + $0x578] sm:$0xff]
    %v455 = vld [vmem:[#allocation10 + $0x580] sm:$0xff]
    %v456 = vld [vmem:[#allocation10 + $0x588] sm:$0xff]
    %v457 = vld [vmem:[#allocation10 + $0x590] sm:$0xff]
    %v458 = vld [vmem:[#allocation10 + $0x598] sm:$0xff]
    %v459 = vld [vmem:[#allocation10 + $0x5a0] sm:$0xff]
    %v460 = vld [vmem:[#allocation10 + $0x5a8] sm:$0xff]
    %v461 = vld [vmem:[#allocation10 + $0x5b0] sm:$0xff]
    %v462 = vld [vmem:[#allocation10 + $0x5b8] sm:$0xff]
    %v463 = vld [vmem:[#allocation10 + $0x5c0] sm:$0xff]
    %v464 = vld [vmem:[#allocation10 + $0x5c8] sm:$0xff]
    %v465 = vld [vmem:[#allocation10 + $0x5d0] sm:$0xff]
    %v466 = vld [vmem:[#allocation10 + $0x5d8] sm:$0xff]
    %v467 = vld [vmem:[#allocation10 + $0x5e0] sm:$0xff]
    %v468 = vld [vmem:[#allocation10 + $0x5e8] sm:$0xff]
    %v469 = vld [vmem:[#allocation10 + $0x5f0] sm:$0xff]
    %v470 = vld [vmem:[#allocation10 + $0x5f8] sm:$0xff]
    %v471 = vld [vmem:[#allocation10 + $0x600] sm:$0xff]
    %v472 = vld [vmem:[#allocation10 + $0x608] sm:$0xff]
    %v473 = vld [vmem:[#allocation10 + $0x610] sm:$0xff]
    %v474 = vld [vmem:[#allocation10 + $0x618] sm:$0xff]
    %v475 = vld [vmem:[#allocation10 + $0x620] sm:$0xff]
    %v476 = vld [vmem:[#allocation10 + $0x628] sm:$0xff]
    %v477 = vld [vmem:[#allocation10 + $0x630] sm:$0xff]
    %v478 = vld [vmem:[#allocation10 + $0x638] sm:$0xff]
    %v479 = vld [vmem:[#allocation10 + $0x640] sm:$0xff]
    %v480 = vld [vmem:[#allocation10 + $0x648] sm:$0xff]
    %v481 = vld [vmem:[#allocation10 + $0x650] sm:$0xff]
    %v482 = vld [vmem:[#allocation10 + $0x658] sm:$0xff]
    %v483 = vld [vmem:[#allocation10 + $0x660] sm:$0xff]
    %v484 = vld [vmem:[#allocation10 + $0x668] sm:$0xff]
    %v485 = vld [vmem:[#allocation10 + $0x670] sm:$0xff]
    %v486 = vld [vmem:[#allocation10 + $0x678] sm:$0xff]
    %v487 = vld [vmem:[#allocation10 + $0x680] sm:$0xff]
    %v488 = vld [vmem:[#allocation10 + $0x688] sm:$0xff]
    %v489 = vld [vmem:[#allocation10 + $0x690] sm:$0xff]
    %v490 = vld [vmem:[#allocation10 + $0x698] sm:$0xff]
    %v491 = vld [vmem:[#allocation10 + $0x6a0] sm:$0xff]
    %v492 = vld [vmem:[#allocation10 + $0x6a8] sm:$0xff]
    %v493 = vld [vmem:[#allocation10 + $0x6b0] sm:$0xff]
    %v494 = vld [vmem:[#allocation10 + $0x6b8] sm:$0xff]
    %v495 = vld [vmem:[#allocation10 + $0x6c0] sm:$0xff]
    %v496 = vld [vmem:[#allocation10 + $0x6c8] sm:$0xff]
    %v497 = vld [vmem:[#allocation10 + $0x6d0] sm:$0xff]
    %v498 = vld [vmem:[#allocation10 + $0x6d8] sm:$0xff]
    %v499 = vld [vmem:[#allocation10 + $0x6e0] sm:$0xff]
    %v500 = vld [vmem:[#allocation10 + $0x6e8] sm:$0xff]
    %v501 = vld [vmem:[#allocation10 + $0x6f0] sm:$0xff]
    %v502 = vld [vmem:[#allocation10 + $0x6f8] sm:$0xff]
    %v503 = vld [vmem:[#allocation10 + $0x700] sm:$0xff]
    %v504 = vld [vmem:[#allocation10 + $0x708] sm:$0xff]
    %v505 = vld [vmem:[#allocation10 + $0x710] sm:$0xff]
    %v506 = vld [vmem:[#allocation10 + $0x718] sm:$0xff]
    %v507 = vld [vmem:[#allocation10 + $0x720] sm:$0xff]
    %v508 = vld [vmem:[#allocation10 + $0x728] sm:$0xff]
    %v509 = vld [vmem:[#allocation10 + $0x730] sm:$0xff]
    %v510 = vld [vmem:[#allocation10 + $0x738] sm:$0xff]
    %v511 = vld [vmem:[#allocation10 + $0x740] sm:$0xff]
    %v512 = vld [vmem:[#allocation10 + $0x748] sm:$0xff]
    %v513 = vld [vmem:[#allocation10 + $0x750] sm:$0xff]
    %v514 = vld [vmem:[#allocation10 + $0x758] sm:$0xff]
    %v515 = vld [vmem:[#allocation10 + $0x760] sm:$0xff]
    %v516 = vld [vmem:[#allocation10 + $0x768] sm:$0xff]
    %v517 = vld [vmem:[#allocation10 + $0x770] sm:$0xff]
    %v518 = vld [vmem:[#allocation10 + $0x778] sm:$0xff]
    %v519 = vld [vmem:[#allocation10 + $0x780] sm:$0xff]
    %v520 = vld [vmem:[#allocation10 + $0x788] sm:$0xff]
    %v521 = vld [vmem:[#allocation10 + $0x790] sm:$0xff]
    %v522 = vld [vmem:[#allocation10 + $0x798] sm:$0xff]
    %v523 = vld [vmem:[#allocation10 + $0x7a0] sm:$0xff]
    %v524 = vld [vmem:[#allocation10 + $0x7a8] sm:$0xff]
    %v525 = vld [vmem:[#allocation10 + $0x7b0] sm:$0xff]
    %v526 = vld [vmem:[#allocation10 + $0x7b8] sm:$0xff]
    %v527 = vld [vmem:[#allocation10 + $0x7c0] sm:$0xff]
    %v528 = vld [vmem:[#allocation10 + $0x7c8] sm:$0xff]
    %v529 = vld [vmem:[#allocation10 + $0x7d0] sm:$0xff]
    %v530 = vld [vmem:[#allocation10 + $0x7d8] sm:$0xff]
    %v531 = vld [vmem:[#allocation10 + $0x7e0] sm:$0xff]
    %v532 = vld [vmem:[#allocation10 + $0x7e8] sm:$0xff]
    %v533 = vld [vmem:[#allocation10 + $0x7f0] sm:$0xff]
    %v534 = vld [vmem:[#allocation10 + $0x7f8] sm:$0xff]
    %v535 = vld [vmem:[%s6] sm:$0xff]
    %v537 = vlaneseq
    %v538 = vshrl.u32 %v537, 7
    %v539 = vsub.s32 0, %v538
    %v540 = vrot.slane %v535, %v539
    %v541 = vlaneseq
    %v542 = vshrl.u32 %v541, 7
    %v543 = vsub.s32 1, %v542
    %v544 = vrot.slane %v535, %v543
    %v545 = vlaneseq
    %v546 = vshrl.u32 %v545, 7
    %v547 = vsub.s32 2, %v546
    %v548 = vrot.slane %v535, %v547
    %v549 = vlaneseq
    %v550 = vshrl.u32 %v549, 7
    %v551 = vsub.s32 3, %v550
    %v552 = vrot.slane %v535, %v551
    %v553 = vlaneseq
    %v554 = vshrl.u32 %v553, 7
    %v555 = vsub.s32 4, %v554
    %v556 = vrot.slane %v535, %v555
    %v557 = vlaneseq
    %v558 = vshrl.u32 %v557, 7
    %v559 = vsub.s32 5, %v558
    %v560 = vrot.slane %v535, %v559
    %v561 = vlaneseq
    %v562 = vshrl.u32 %v561, 7
    %v563 = vsub.s32 6, %v562
    %v564 = vrot.slane %v535, %v563
    %v565 = vlaneseq
    %v566 = vshrl.u32 %v565, 7
    %v567 = vsub.s32 7, %v566
    %v568 = vrot.slane %v535, %v567
    %577 = vmatprep.subr.mxu0 %v280
    %578 = vmatpush1.msra.mxu0 %v279
    %579 = vmatprep.subr.mxu0 %v288
    %580 = vmatpush1.msra.mxu0 %v287
    %581 = vmatprep.subr.mxu0 %v296
    %582 = vmatpush1.msra.mxu0 %v295
    %583 = vmatprep.subr.mxu0 %v304
    %584 = vmatpush1.msra.mxu0 %v303
    %585 = vmatprep.subr.mxu0 %v312
    %586 = vmatpush1.msra.mxu0 %v311
    %587 = vmatprep.subr.mxu0 %v320
    %588 = vmatpush1.msra.mxu0 %v319
    %589 = vmatprep.subr.mxu0 %v328
    %590 = vmatpush1.msra.mxu0 %v327
    %591 = vmatprep.subr.mxu0 %v336
    %592 = vmatpush1.msra.mxu0 %v335
    %593 = vmatprep.subr.mxu0 %v344
    %594 = vmatpush1.msra.mxu0 %v343
    %595 = vmatprep.subr.mxu0 %v352
    %596 = vmatpush1.msra.mxu0 %v351
    %597 = vmatprep.subr.mxu0 %v360
    %598 = vmatpush1.msra.mxu0 %v359
    %599 = vmatprep.subr.mxu0 %v368
    %600 = vmatpush1.msra.mxu0 %v367
    %601 = vmatprep.subr.mxu0 %v376
    %602 = vmatpush1.msra.mxu0 %v375
    %603 = vmatprep.subr.mxu0 %v384
    %604 = vmatpush1.msra.mxu0 %v383
    %605 = vmatprep.subr.mxu0 %v392
    %606 = vmatpush1.msra.mxu0 %v391
    %607 = vmatprep.subr.mxu0 %v400
    %608 = vmatpush1.msra.mxu0 %v399
    %609 = vmatprep.subr.mxu0 %v408
    %610 = vmatpush1.msra.mxu0 %v407
    %611 = vmatprep.subr.mxu0 %v416
    %612 = vmatpush1.msra.mxu0 %v415
    %613 = vmatprep.subr.mxu0 %v424
    %614 = vmatpush1.msra.mxu0 %v423
    %615 = vmatprep.subr.mxu0 %v432
    %616 = vmatpush1.msra.mxu0 %v431
    %617 = vmatprep.subr.mxu0 %v440
    %618 = vmatpush1.msra.mxu0 %v439
    %619 = vmatprep.subr.mxu0 %v448
    %620 = vmatpush1.msra.mxu0 %v447
    %621 = vmatprep.subr.mxu0 %v456
    %622 = vmatpush1.msra.mxu0 %v455
    %623 = vmatprep.subr.mxu0 %v464
    %624 = vmatpush1.msra.mxu0 %v463
    %625 = vmatprep.subr.mxu0 %v472
    %626 = vmatpush1.msra.mxu0 %v471
    %627 = vmatprep.subr.mxu0 %v480
    %628 = vmatpush1.msra.mxu0 %v479
    %629 = vmatprep.subr.mxu0 %v488
    %630 = vmatpush1.msra.mxu0 %v487
    %631 = vmatprep.subr.mxu0 %v496
    %632 = vmatpush1.msra.mxu0 %v495
    %633 = vmatprep.subr.mxu0 %v504
    %634 = vmatpush1.msra.mxu0 %v503
    %635 = vmatprep.subr.mxu0 %v512
    %636 = vmatpush1.msra.mxu0 %v511
    %637 = vmatprep.subr.mxu0 %v520
    %638 = vmatpush1.msra.mxu0 %v519
    %639 = vmatprep.subr.mxu0 %v528
    %640 = vmatpush1.msra.mxu0 %v527
    %641 = vmatprep.mubr.f32.mxu0 %v278
    %642 = vmatmul.mubr.f32.gmra.mrb[0].mxu0 %v277
    %v643 = vpop.f32.mrb[0].mxu0
    %v644 = vadd.f32 %v540, %v643
    %v645 = vpop.f32.mrb[0].mxu0
    %v646 = vadd.f32 %v544, %v645
    %647 = vdwg.mxu0
    %648 = vmatprep.subr.mxu0 %v282
    %649 = vmatpush1.msra.mxu0 %v281
    %650 = vmatprep.subr.mxu0 %v290
    %651 = vmatpush1.msra.mxu0 %v289
    %652 = vmatprep.subr.mxu0 %v298
    %653 = vmatpush1.msra.mxu0 %v297
    %654 = vmatprep.subr.mxu0 %v306
    %655 = vmatpush1.msra.mxu0 %v305
    %656 = vmatprep.subr.mxu0 %v314
    %657 = vmatpush1.msra.mxu0 %v313
    %658 = vmatprep.subr.mxu0 %v322
    %659 = vmatpush1.msra.mxu0 %v321
    %660 = vmatprep.subr.mxu0 %v330
    %661 = vmatpush1.msra.mxu0 %v329
    %662 = vmatprep.subr.mxu0 %v338
    %663 = vmatpush1.msra.mxu0 %v337
    %664 = vmatprep.subr.mxu0 %v346
    %665 = vmatpush1.msra.mxu0 %v345
    %666 = vmatprep.subr.mxu0 %v354
    %667 = vmatpush1.msra.mxu0 %v353
    %668 = vmatprep.subr.mxu0 %v362
    %669 = vmatpush1.msra.mxu0 %v361
    %670 = vmatprep.subr.mxu0 %v370
    %671 = vmatpush1.msra.mxu0 %v369
    %672 = vmatprep.subr.mxu0 %v378
    %673 = vmatpush1.msra.mxu0 %v377
    %674 = vmatprep.subr.mxu0 %v386
    %675 = vmatpush1.msra.mxu0 %v385
    %676 = vmatprep.subr.mxu0 %v394
    %677 = vmatpush1.msra.mxu0 %v393
    %678 = vmatprep.subr.mxu0 %v402
    %679 = vmatpush1.msra.mxu0 %v401
    %680 = vmatprep.subr.mxu0 %v410
    %681 = vmatpush1.msra.mxu0 %v409
    %682 = vmatprep.subr.mxu0 %v418
    %683 = vmatpush1.msra.mxu0 %v417
    %684 = vmatprep.subr.mxu0 %v426
    %685 = vmatpush1.msra.mxu0 %v425
    %686 = vmatprep.subr.mxu0 %v434
    %687 = vmatpush1.msra.mxu0 %v433
    %688 = vmatprep.subr.mxu0 %v442
    %689 = vmatpush1.msra.mxu0 %v441
    %690 = vmatprep.subr.mxu0 %v450
    %691 = vmatpush1.msra.mxu0 %v449
    %692 = vmatprep.subr.mxu0 %v458
    %693 = vmatpush1.msra.mxu0 %v457
    %694 = vmatprep.subr.mxu0 %v466
    %695 = vmatpush1.msra.mxu0 %v465
    %696 = vmatprep.subr.mxu0 %v474
    %697 = vmatpush1.msra.mxu0 %v473
    %698 = vmatprep.subr.mxu0 %v482
    %699 = vmatpush1.msra.mxu0 %v481
    %700 = vmatprep.subr.mxu0 %v490
    %701 = vmatpush1.msra.mxu0 %v489
    %702 = vmatprep.subr.mxu0 %v498
    %703 = vmatpush1.msra.mxu0 %v497
    %704 = vmatprep.subr.mxu0 %v506
    %705 = vmatpush1.msra.mxu0 %v505
    %706 = vmatprep.subr.mxu0 %v514
    %707 = vmatpush1.msra.mxu0 %v513
    %708 = vmatprep.subr.mxu0 %v522
    %709 = vmatpush1.msra.mxu0 %v521
    %710 = vmatprep.subr.mxu0 %v530
    %711 = vmatpush1.msra.mxu0 %v529
    %712 = vmatprep.mubr.f32.mxu0 %v278
    %713 = vmatmul.mubr.f32.gmra.mrb[0].mxu0 %v277
    %v714 = vpop.f32.mrb[0].mxu0
    %v715 = vadd.f32 %v548, %v714
    %v716 = vpop.f32.mrb[0].mxu0
    %v717 = vadd.f32 %v552, %v716
    %718 = vdwg.mxu0
    %719 = vmatprep.subr.mxu0 %v284
    %720 = vmatpush1.msra.mxu0 %v283
    %721 = vmatprep.subr.mxu0 %v292
    %722 = vmatpush1.msra.mxu0 %v291
    %723 = vmatprep.subr.mxu0 %v300
    %724 = vmatpush1.msra.mxu0 %v299
    %725 = vmatprep.subr.mxu0 %v308
    %726 = vmatpush1.msra.mxu0 %v307
    %727 = vmatprep.subr.mxu0 %v316
    %728 = vmatpush1.msra.mxu0 %v315
    %729 = vmatprep.subr.mxu0 %v324
    %730 = vmatpush1.msra.mxu0 %v323
    %731 = vmatprep.subr.mxu0 %v332
    %732 = vmatpush1.msra.mxu0 %v331
    %733 = vmatprep.subr.mxu0 %v340
    %734 = vmatpush1.msra.mxu0 %v339
    %735 = vmatprep.subr.mxu0 %v348
    %736 = vmatpush1.msra.mxu0 %v347
    %737 = vmatprep.subr.mxu0 %v356
    %738 = vmatpush1.msra.mxu0 %v355
    %739 = vmatprep.subr.mxu0 %v364
    %740 = vmatpush1.msra.mxu0 %v363
    %741 = vmatprep.subr.mxu0 %v372
    %742 = vmatpush1.msra.mxu0 %v371
    %743 = vmatprep.subr.mxu0 %v380
    %744 = vmatpush1.msra.mxu0 %v379
    %745 = vmatprep.subr.mxu0 %v388
    %746 = vmatpush1.msra.mxu0 %v387
    %747 = vmatprep.subr.mxu0 %v396
    %748 = vmatpush1.msra.mxu0 %v395
    %749 = vmatprep.subr.mxu0 %v404
    %750 = vmatpush1.msra.mxu0 %v403
    %751 = vmatprep.subr.mxu0 %v412
    %752 = vmatpush1.msra.mxu0 %v411
    %753 = vmatprep.subr.mxu0 %v420
    %754 = vmatpush1.msra.mxu0 %v419
    %755 = vmatprep.subr.mxu0 %v428
    %756 = vmatpush1.msra.mxu0 %v427
    %757 = vmatprep.subr.mxu0 %v436
    %758 = vmatpush1.msra.mxu0 %v435
    %759 = vmatprep.subr.mxu0 %v444
    %760 = vmatpush1.msra.mxu0 %v443
    %761 = vmatprep.subr.mxu0 %v452
    %762 = vmatpush1.msra.mxu0 %v451
    %763 = vmatprep.subr.mxu0 %v460
    %764 = vmatpush1.msra.mxu0 %v459
    %765 = vmatprep.subr.mxu0 %v468
    %766 = vmatpush1.msra.mxu0 %v467
    %767 = vmatprep.subr.mxu0 %v476
    %768 = vmatpush1.msra.mxu0 %v475
    %769 = vmatprep.subr.mxu0 %v484
    %770 = vmatpush1.msra.mxu0 %v483
    %771 = vmatprep.subr.mxu0 %v492
    %772 = vmatpush1.msra.mxu0 %v491
    %773 = vmatprep.subr.mxu0 %v500
    %774 = vmatpush1.msra.mxu0 %v499
    %775 = vmatprep.subr.mxu0 %v508
    %776 = vmatpush1.msra.mxu0 %v507
    %777 = vmatprep.subr.mxu0 %v516
    %778 = vmatpush1.msra.mxu0 %v515
    %779 = vmatprep.subr.mxu0 %v524
    %780 = vmatpush1.msra.mxu0 %v523
    %781 = vmatprep.subr.mxu0 %v532
    %782 = vmatpush1.msra.mxu0 %v531
    %783 = vmatprep.mubr.f32.mxu0 %v278
    %784 = vmatmul.mubr.f32.gmra.mrb[0].mxu0 %v277
    %v785 = vpop.f32.mrb[0].mxu0
    %v786 = vadd.f32 %v556, %v785
    %v787 = vpop.f32.mrb[0].mxu0
    %v788 = vadd.f32 %v560, %v787
    %789 = vdwg.mxu0
    %790 = vmatprep.subr.mxu0 %v286
    %791 = vmatpush1.msra.mxu0 %v285
    %792 = vmatprep.subr.mxu0 %v294
    %793 = vmatpush1.msra.mxu0 %v293
    %794 = vmatprep.subr.mxu0 %v302
    %795 = vmatpush1.msra.mxu0 %v301
    %796 = vmatprep.subr.mxu0 %v310
    %797 = vmatpush1.msra.mxu0 %v309
    %798 = vmatprep.subr.mxu0 %v318
    %799 = vmatpush1.msra.mxu0 %v317
    %800 = vmatprep.subr.mxu0 %v326
    %801 = vmatpush1.msra.mxu0 %v325
    %802 = vmatprep.subr.mxu0 %v334
    %803 = vmatpush1.msra.mxu0 %v333
    %804 = vmatprep.subr.mxu0 %v342
    %805 = vmatpush1.msra.mxu0 %v341
    %806 = vmatprep.subr.mxu0 %v350
    %807 = vmatpush1.msra.mxu0 %v349
    %808 = vmatprep.subr.mxu0 %v358
    %809 = vmatpush1.msra.mxu0 %v357
    %810 = vmatprep.subr.mxu0 %v366
    %811 = vmatpush1.msra.mxu0 %v365
    %812 = vmatprep.subr.mxu0 %v374
    %813 = vmatpush1.msra.mxu0 %v373
    %814 = vmatprep.subr.mxu0 %v382
    %815 = vmatpush1.msra.mxu0 %v381
    %816 = vmatprep.subr.mxu0 %v390
    %817 = vmatpush1.msra.mxu0 %v389
    %818 = vmatprep.subr.mxu0 %v398
    %819 = vmatpush1.msra.mxu0 %v397
    %820 = vmatprep.subr.mxu0 %v406
    %821 = vmatpush1.msra.mxu0 %v405
    %822 = vmatprep.subr.mxu0 %v414
    %823 = vmatpush1.msra.mxu0 %v413
    %824 = vmatprep.subr.mxu0 %v422
    %825 = vmatpush1.msra.mxu0 %v421
    %826 = vmatprep.subr.mxu0 %v430
    %827 = vmatpush1.msra.mxu0 %v429
    %828 = vmatprep.subr.mxu0 %v438
    %829 = vmatpush1.msra.mxu0 %v437
    %830 = vmatprep.subr.mxu0 %v446
    %831 = vmatpush1.msra.mxu0 %v445
    %832 = vmatprep.subr.mxu0 %v454
    %833 = vmatpush1.msra.mxu0 %v453
    %834 = vmatprep.subr.mxu0 %v462
    %835 = vmatpush1.msra.mxu0 %v461
    %836 = vmatprep.subr.mxu0 %v470
    %837 = vmatpush1.msra.mxu0 %v469
    %838 = vmatprep.subr.mxu0 %v478
    %839 = vmatpush1.msra.mxu0 %v477
    %840 = vmatprep.subr.mxu0 %v486
    %841 = vmatpush1.msra.mxu0 %v485
    %842 = vmatprep.subr.mxu0 %v494
    %843 = vmatpush1.msra.mxu0 %v493
    %844 = vmatprep.subr.mxu0 %v502
    %845 = vmatpush1.msra.mxu0 %v501
    %846 = vmatprep.subr.mxu0 %v510
    %847 = vmatpush1.msra.mxu0 %v509
    %848 = vmatprep.subr.mxu0 %v518
    %849 = vmatpush1.msra.mxu0 %v517
    %850 = vmatprep.subr.mxu0 %v526
    %851 = vmatpush1.msra.mxu0 %v525
    %852 = vmatprep.subr.mxu0 %v534
    %853 = vmatpush1.msra.mxu0 %v533
    %854 = vmatprep.mubr.f32.mxu0 %v278
    %855 = vmatmul.mubr.f32.gmra.mrb[0].mxu0 %v277
    %v856 = vpop.f32.mrb[0].mxu0
    %v857 = vadd.f32 %v564, %v856
    %v858 = vpop.f32.mrb[0].mxu0
    %v859 = vadd.f32 %v568, %v858
    %860 = vdwg.mxu0
    %v861 = vmax.f32 %v644, 0.0
    %v862 = vmax.f32 %v646, 0.0
    %v863 = vmax.f32 %v715, 0.0
    %v864 = vmax.f32 %v717, 0.0
    %v865 = vmax.f32 %v786, 0.0
    %v866 = vmax.f32 %v788, 0.0
    %v867 = vmax.f32 %v857, 0.0
    %v868 = vmax.f32 %v859, 0.0
    %v869 = vld [vmem:[#allocation12] sm:$0xff]
    %v870 = vld [vmem:[#allocation12 + $0x8] sm:$0xff]
    %v871 = vld [vmem:[#allocation12 + $0x10] sm:$0xff]
    %v872 = vld [vmem:[#allocation12 + $0x18] sm:$0xff]
    %v873 = vld [vmem:[#allocation12 + $0x20] sm:$0xff]
    %v874 = vld [vmem:[#allocation12 + $0x28] sm:$0xff]
    %v875 = vld [vmem:[#allocation12 + $0x30] sm:$0xff]
    %v876 = vld [vmem:[#allocation12 + $0x38] sm:$0xff]
    %v877 = vld [vmem:[#allocation12 + $0x40] sm:$0xff]
    %v878 = vld [vmem:[#allocation12 + $0x48] sm:$0xff]
    %v879 = vld [vmem:[#allocation12 + $0x50] sm:$0xff]
    %v880 = vld [vmem:[#allocation12 + $0x58] sm:$0xff]
    %v881 = vld [vmem:[#allocation12 + $0x60] sm:$0xff]
    %v882 = vld [vmem:[#allocation12 + $0x68] sm:$0xff]
    %v883 = vld [vmem:[#allocation12 + $0x70] sm:$0xff]
    %v884 = vld [vmem:[#allocation12 + $0x78] sm:$0xff]
    %v885 = vld [vmem:[#allocation12 + $0x80] sm:$0xff]
    %v886 = vld [vmem:[#allocation12 + $0x88] sm:$0xff]
    %v887 = vld [vmem:[#allocation12 + $0x90] sm:$0xff]
    %v888 = vld [vmem:[#allocation12 + $0x98] sm:$0xff]
    %v889 = vld [vmem:[#allocation12 + $0xa0] sm:$0xff]
    %v890 = vld [vmem:[#allocation12 + $0xa8] sm:$0xff]
    %v891 = vld [vmem:[#allocation12 + $0xb0] sm:$0xff]
    %v892 = vld [vmem:[#allocation12 + $0xb8] sm:$0xff]
    %v893 = vld [vmem:[#allocation12 + $0xc0] sm:$0xff]
    %v894 = vld [vmem:[#allocation12 + $0xc8] sm:$0xff]
    %v895 = vld [vmem:[#allocation12 + $0xd0] sm:$0xff]
    %v896 = vld [vmem:[#allocation12 + $0xd8] sm:$0xff]
    %v897 = vld [vmem:[#allocation12 + $0xe0] sm:$0xff]
    %v898 = vld [vmem:[#allocation12 + $0xe8] sm:$0xff]
    %v899 = vld [vmem:[#allocation12 + $0xf0] sm:$0xff]
    %v900 = vld [vmem:[#allocation12 + $0xf8] sm:$0xff]
    %v901 = vld [vmem:[#allocation12 + $0x100] sm:$0xff]
    %v902 = vld [vmem:[#allocation12 + $0x108] sm:$0xff]
    %v903 = vld [vmem:[#allocation12 + $0x110] sm:$0xff]
    %v904 = vld [vmem:[#allocation12 + $0x118] sm:$0xff]
    %v905 = vld [vmem:[#allocation12 + $0x120] sm:$0xff]
    %v906 = vld [vmem:[#allocation12 + $0x128] sm:$0xff]
    %v907 = vld [vmem:[#allocation12 + $0x130] sm:$0xff]
    %v908 = vld [vmem:[#allocation12 + $0x138] sm:$0xff]
    %v909 = vld [vmem:[#allocation12 + $0x140] sm:$0xff]
    %v910 = vld [vmem:[#allocation12 + $0x148] sm:$0xff]
    %v911 = vld [vmem:[#allocation12 + $0x150] sm:$0xff]
    %v912 = vld [vmem:[#allocation12 + $0x158] sm:$0xff]
    %v913 = vld [vmem:[#allocation12 + $0x160] sm:$0xff]
    %v914 = vld [vmem:[#allocation12 + $0x168] sm:$0xff]
    %v915 = vld [vmem:[#allocation12 + $0x170] sm:$0xff]
    %v916 = vld [vmem:[#allocation12 + $0x178] sm:$0xff]
    %v917 = vld [vmem:[#allocation12 + $0x180] sm:$0xff]
    %v918 = vld [vmem:[#allocation12 + $0x188] sm:$0xff]
    %v919 = vld [vmem:[#allocation12 + $0x190] sm:$0xff]
    %v920 = vld [vmem:[#allocation12 + $0x198] sm:$0xff]
    %v921 = vld [vmem:[#allocation12 + $0x1a0] sm:$0xff]
    %v922 = vld [vmem:[#allocation12 + $0x1a8] sm:$0xff]
    %v923 = vld [vmem:[#allocation12 + $0x1b0] sm:$0xff]
    %v924 = vld [vmem:[#allocation12 + $0x1b8] sm:$0xff]
    %v925 = vld [vmem:[#allocation12 + $0x1c0] sm:$0xff]
    %v926 = vld [vmem:[#allocation12 + $0x1c8] sm:$0xff]
    %v927 = vld [vmem:[#allocation12 + $0x1d0] sm:$0xff]
    %v928 = vld [vmem:[#allocation12 + $0x1d8] sm:$0xff]
    %v929 = vld [vmem:[#allocation12 + $0x1e0] sm:$0xff]
    %v930 = vld [vmem:[#allocation12 + $0x1e8] sm:$0xff]
    %v931 = vld [vmem:[#allocation12 + $0x1f0] sm:$0xff]
    %v932 = vld [vmem:[#allocation12 + $0x1f8] sm:$0xff]
    %v933 = vld [vmem:[#allocation12 + $0x200] sm:$0xff]
    %v934 = vld [vmem:[#allocation12 + $0x208] sm:$0xff]
    %v935 = vld [vmem:[#allocation12 + $0x210] sm:$0xff]
    %v936 = vld [vmem:[#allocation12 + $0x218] sm:$0xff]
    %v937 = vld [vmem:[#allocation12 + $0x220] sm:$0xff]
    %v938 = vld [vmem:[#allocation12 + $0x228] sm:$0xff]
    %v939 = vld [vmem:[#allocation12 + $0x230] sm:$0xff]
    %v940 = vld [vmem:[#allocation12 + $0x238] sm:$0xff]
    %v941 = vld [vmem:[#allocation12 + $0x240] sm:$0xff]
    %v942 = vld [vmem:[#allocation12 + $0x248] sm:$0xff]
    %v943 = vld [vmem:[#allocation12 + $0x250] sm:$0xff]
    %v944 = vld [vmem:[#allocation12 + $0x258] sm:$0xff]
    %v945 = vld [vmem:[#allocation12 + $0x260] sm:$0xff]
    %v946 = vld [vmem:[#allocation12 + $0x268] sm:$0xff]
    %v947 = vld [vmem:[#allocation12 + $0x270] sm:$0xff]
    %v948 = vld [vmem:[#allocation12 + $0x278] sm:$0xff]
    %v949 = vld [vmem:[#allocation12 + $0x280] sm:$0xff]
    %v950 = vld [vmem:[#allocation12 + $0x288] sm:$0xff]
    %v951 = vld [vmem:[#allocation12 + $0x290] sm:$0xff]
    %v952 = vld [vmem:[#allocation12 + $0x298] sm:$0xff]
    %v953 = vld [vmem:[#allocation12 + $0x2a0] sm:$0xff]
    %v954 = vld [vmem:[#allocation12 + $0x2a8] sm:$0xff]
    %v955 = vld [vmem:[#allocation12 + $0x2b0] sm:$0xff]
    %v956 = vld [vmem:[#allocation12 + $0x2b8] sm:$0xff]
    %v957 = vld [vmem:[#allocation12 + $0x2c0] sm:$0xff]
    %v958 = vld [vmem:[#allocation12 + $0x2c8] sm:$0xff]
    %v959 = vld [vmem:[#allocation12 + $0x2d0] sm:$0xff]
    %v960 = vld [vmem:[#allocation12 + $0x2d8] sm:$0xff]
    %v961 = vld [vmem:[#allocation12 + $0x2e0] sm:$0xff]
    %v962 = vld [vmem:[#allocation12 + $0x2e8] sm:$0xff]
    %v963 = vld [vmem:[#allocation12 + $0x2f0] sm:$0xff]
    %v964 = vld [vmem:[#allocation12 + $0x2f8] sm:$0xff]
    %v965 = vld [vmem:[#allocation12 + $0x300] sm:$0xff]
    %v966 = vld [vmem:[#allocation12 + $0x308] sm:$0xff]
    %v967 = vld [vmem:[#allocation12 + $0x310] sm:$0xff]
    %v968 = vld [vmem:[#allocation12 + $0x318] sm:$0xff]
    %v969 = vld [vmem:[#allocation12 + $0x320] sm:$0xff]
    %v970 = vld [vmem:[#allocation12 + $0x328] sm:$0xff]
    %v971 = vld [vmem:[#allocation12 + $0x330] sm:$0xff]
    %v972 = vld [vmem:[#allocation12 + $0x338] sm:$0xff]
    %v973 = vld [vmem:[#allocation12 + $0x340] sm:$0xff]
    %v974 = vld [vmem:[#allocation12 + $0x348] sm:$0xff]
    %v975 = vld [vmem:[#allocation12 + $0x350] sm:$0xff]
    %v976 = vld [vmem:[#allocation12 + $0x358] sm:$0xff]
    %v977 = vld [vmem:[#allocation12 + $0x360] sm:$0xff]
    %v978 = vld [vmem:[#allocation12 + $0x368] sm:$0xff]
    %v979 = vld [vmem:[#allocation12 + $0x370] sm:$0xff]
    %v980 = vld [vmem:[#allocation12 + $0x378] sm:$0xff]
    %v981 = vld [vmem:[#allocation12 + $0x380] sm:$0xff]
    %v982 = vld [vmem:[#allocation12 + $0x388] sm:$0xff]
    %v983 = vld [vmem:[#allocation12 + $0x390] sm:$0xff]
    %v984 = vld [vmem:[#allocation12 + $0x398] sm:$0xff]
    %v985 = vld [vmem:[#allocation12 + $0x3a0] sm:$0xff]
    %v986 = vld [vmem:[#allocation12 + $0x3a8] sm:$0xff]
    %v987 = vld [vmem:[#allocation12 + $0x3b0] sm:$0xff]
    %v988 = vld [vmem:[#allocation12 + $0x3b8] sm:$0xff]
    %v989 = vld [vmem:[#allocation12 + $0x3c0] sm:$0xff]
    %v990 = vld [vmem:[#allocation12 + $0x3c8] sm:$0xff]
    %v991 = vld [vmem:[#allocation12 + $0x3d0] sm:$0xff]
    %v992 = vld [vmem:[#allocation12 + $0x3d8] sm:$0xff]
    %v993 = vld [vmem:[#allocation12 + $0x3e0] sm:$0xff]
    %v994 = vld [vmem:[#allocation12 + $0x3e8] sm:$0xff]
    %v995 = vld [vmem:[#allocation12 + $0x3f0] sm:$0xff]
    %v996 = vld [vmem:[#allocation12 + $0x3f8] sm:$0xff]
    %v997 = vld [vmem:[#allocation12 + $0x400] sm:$0xff]
    %v998 = vld [vmem:[#allocation12 + $0x408] sm:$0xff]
    %v999 = vld [vmem:[#allocation12 + $0x410] sm:$0xff]
    %v1000 = vld [vmem:[#allocation12 + $0x418] sm:$0xff]
    %v1001 = vld [vmem:[#allocation12 + $0x420] sm:$0xff]
    %v1002 = vld [vmem:[#allocation12 + $0x428] sm:$0xff]
    %v1003 = vld [vmem:[#allocation12 + $0x430] sm:$0xff]
    %v1004 = vld [vmem:[#allocation12 + $0x438] sm:$0xff]
    %v1005 = vld [vmem:[#allocation12 + $0x440] sm:$0xff]
    %v1006 = vld [vmem:[#allocation12 + $0x448] sm:$0xff]
    %v1007 = vld [vmem:[#allocation12 + $0x450] sm:$0xff]
    %v1008 = vld [vmem:[#allocation12 + $0x458] sm:$0xff]
    %v1009 = vld [vmem:[#allocation12 + $0x460] sm:$0xff]
    %v1010 = vld [vmem:[#allocation12 + $0x468] sm:$0xff]
    %v1011 = vld [vmem:[#allocation12 + $0x470] sm:$0xff]
    %v1012 = vld [vmem:[#allocation12 + $0x478] sm:$0xff]
    %v1013 = vld [vmem:[#allocation12 + $0x480] sm:$0xff]
    %v1014 = vld [vmem:[#allocation12 + $0x488] sm:$0xff]
    %v1015 = vld [vmem:[#allocation12 + $0x490] sm:$0xff]
    %v1016 = vld [vmem:[#allocation12 + $0x498] sm:$0xff]
    %v1017 = vld [vmem:[#allocation12 + $0x4a0] sm:$0xff]
    %v1018 = vld [vmem:[#allocation12 + $0x4a8] sm:$0xff]
    %v1019 = vld [vmem:[#allocation12 + $0x4b0] sm:$0xff]
    %v1020 = vld [vmem:[#allocation12 + $0x4b8] sm:$0xff]
    %v1021 = vld [vmem:[#allocation12 + $0x4c0] sm:$0xff]
    %v1022 = vld [vmem:[#allocation12 + $0x4c8] sm:$0xff]
    %v1023 = vld [vmem:[#allocation12 + $0x4d0] sm:$0xff]
    %v1024 = vld [vmem:[#allocation12 + $0x4d8] sm:$0xff]
    %v1025 = vld [vmem:[#allocation12 + $0x4e0] sm:$0xff]
    %v1026 = vld [vmem:[#allocation12 + $0x4e8] sm:$0xff]
    %v1027 = vld [vmem:[#allocation12 + $0x4f0] sm:$0xff]
    %v1028 = vld [vmem:[#allocation12 + $0x4f8] sm:$0xff]
    %v1029 = vld [vmem:[#allocation12 + $0x500] sm:$0xff]
    %v1030 = vld [vmem:[#allocation12 + $0x508] sm:$0xff]
    %v1031 = vld [vmem:[#allocation12 + $0x510] sm:$0xff]
    %v1032 = vld [vmem:[#allocation12 + $0x518] sm:$0xff]
    %v1033 = vld [vmem:[#allocation12 + $0x520] sm:$0xff]
    %v1034 = vld [vmem:[#allocation12 + $0x528] sm:$0xff]
    %v1035 = vld [vmem:[#allocation12 + $0x530] sm:$0xff]
    %v1036 = vld [vmem:[#allocation12 + $0x538] sm:$0xff]
    %v1037 = vld [vmem:[#allocation12 + $0x540] sm:$0xff]
    %v1038 = vld [vmem:[#allocation12 + $0x548] sm:$0xff]
    %v1039 = vld [vmem:[#allocation12 + $0x550] sm:$0xff]
    %v1040 = vld [vmem:[#allocation12 + $0x558] sm:$0xff]
    %v1041 = vld [vmem:[#allocation12 + $0x560] sm:$0xff]
    %v1042 = vld [vmem:[#allocation12 + $0x568] sm:$0xff]
    %v1043 = vld [vmem:[#allocation12 + $0x570] sm:$0xff]
    %v1044 = vld [vmem:[#allocation12 + $0x578] sm:$0xff]
    %v1045 = vld [vmem:[#allocation12 + $0x580] sm:$0xff]
    %v1046 = vld [vmem:[#allocation12 + $0x588] sm:$0xff]
    %v1047 = vld [vmem:[#allocation12 + $0x590] sm:$0xff]
    %v1048 = vld [vmem:[#allocation12 + $0x598] sm:$0xff]
    %v1049 = vld [vmem:[#allocation12 + $0x5a0] sm:$0xff]
    %v1050 = vld [vmem:[#allocation12 + $0x5a8] sm:$0xff]
    %v1051 = vld [vmem:[#allocation12 + $0x5b0] sm:$0xff]
    %v1052 = vld [vmem:[#allocation12 + $0x5b8] sm:$0xff]
    %v1053 = vld [vmem:[#allocation12 + $0x5c0] sm:$0xff]
    %v1054 = vld [vmem:[#allocation12 + $0x5c8] sm:$0xff]
    %v1055 = vld [vmem:[#allocation12 + $0x5d0] sm:$0xff]
    %v1056 = vld [vmem:[#allocation12 + $0x5d8] sm:$0xff]
    %v1057 = vld [vmem:[#allocation12 + $0x5e0] sm:$0xff]
    %v1058 = vld [vmem:[#allocation12 + $0x5e8] sm:$0xff]
    %v1059 = vld [vmem:[#allocation12 + $0x5f0] sm:$0xff]
    %v1060 = vld [vmem:[#allocation12 + $0x5f8] sm:$0xff]
    %v1061 = vld [vmem:[#allocation12 + $0x600] sm:$0xff]
    %v1062 = vld [vmem:[#allocation12 + $0x608] sm:$0xff]
    %v1063 = vld [vmem:[#allocation12 + $0x610] sm:$0xff]
    %v1064 = vld [vmem:[#allocation12 + $0x618] sm:$0xff]
    %v1065 = vld [vmem:[#allocation12 + $0x620] sm:$0xff]
    %v1066 = vld [vmem:[#allocation12 + $0x628] sm:$0xff]
    %v1067 = vld [vmem:[#allocation12 + $0x630] sm:$0xff]
    %v1068 = vld [vmem:[#allocation12 + $0x638] sm:$0xff]
    %v1069 = vld [vmem:[#allocation12 + $0x640] sm:$0xff]
    %v1070 = vld [vmem:[#allocation12 + $0x648] sm:$0xff]
    %v1071 = vld [vmem:[#allocation12 + $0x650] sm:$0xff]
    %v1072 = vld [vmem:[#allocation12 + $0x658] sm:$0xff]
    %v1073 = vld [vmem:[#allocation12 + $0x660] sm:$0xff]
    %v1074 = vld [vmem:[#allocation12 + $0x668] sm:$0xff]
    %v1075 = vld [vmem:[#allocation12 + $0x670] sm:$0xff]
    %v1076 = vld [vmem:[#allocation12 + $0x678] sm:$0xff]
    %v1077 = vld [vmem:[#allocation12 + $0x680] sm:$0xff]
    %v1078 = vld [vmem:[#allocation12 + $0x688] sm:$0xff]
    %v1079 = vld [vmem:[#allocation12 + $0x690] sm:$0xff]
    %v1080 = vld [vmem:[#allocation12 + $0x698] sm:$0xff]
    %v1081 = vld [vmem:[#allocation12 + $0x6a0] sm:$0xff]
    %v1082 = vld [vmem:[#allocation12 + $0x6a8] sm:$0xff]
    %v1083 = vld [vmem:[#allocation12 + $0x6b0] sm:$0xff]
    %v1084 = vld [vmem:[#allocation12 + $0x6b8] sm:$0xff]
    %v1085 = vld [vmem:[#allocation12 + $0x6c0] sm:$0xff]
    %v1086 = vld [vmem:[#allocation12 + $0x6c8] sm:$0xff]
    %v1087 = vld [vmem:[#allocation12 + $0x6d0] sm:$0xff]
    %v1088 = vld [vmem:[#allocation12 + $0x6d8] sm:$0xff]
    %v1089 = vld [vmem:[#allocation12 + $0x6e0] sm:$0xff]
    %v1090 = vld [vmem:[#allocation12 + $0x6e8] sm:$0xff]
    %v1091 = vld [vmem:[#allocation12 + $0x6f0] sm:$0xff]
    %v1092 = vld [vmem:[#allocation12 + $0x6f8] sm:$0xff]
    %v1093 = vld [vmem:[#allocation12 + $0x700] sm:$0xff]
    %v1094 = vld [vmem:[#allocation12 + $0x708] sm:$0xff]
    %v1095 = vld [vmem:[#allocation12 + $0x710] sm:$0xff]
    %v1096 = vld [vmem:[#allocation12 + $0x718] sm:$0xff]
    %v1097 = vld [vmem:[#allocation12 + $0x720] sm:$0xff]
    %v1098 = vld [vmem:[#allocation12 + $0x728] sm:$0xff]
    %v1099 = vld [vmem:[#allocation12 + $0x730] sm:$0xff]
    %v1100 = vld [vmem:[#allocation12 + $0x738] sm:$0xff]
    %v1101 = vld [vmem:[#allocation12 + $0x740] sm:$0xff]
    %v1102 = vld [vmem:[#allocation12 + $0x748] sm:$0xff]
    %v1103 = vld [vmem:[#allocation12 + $0x750] sm:$0xff]
    %v1104 = vld [vmem:[#allocation12 + $0x758] sm:$0xff]
    %v1105 = vld [vmem:[#allocation12 + $0x760] sm:$0xff]
    %v1106 = vld [vmem:[#allocation12 + $0x768] sm:$0xff]
    %v1107 = vld [vmem:[#allocation12 + $0x770] sm:$0xff]
    %v1108 = vld [vmem:[#allocation12 + $0x778] sm:$0xff]
    %v1109 = vld [vmem:[#allocation12 + $0x780] sm:$0xff]
    %v1110 = vld [vmem:[#allocation12 + $0x788] sm:$0xff]
    %v1111 = vld [vmem:[#allocation12 + $0x790] sm:$0xff]
    %v1112 = vld [vmem:[#allocation12 + $0x798] sm:$0xff]
    %v1113 = vld [vmem:[#allocation12 + $0x7a0] sm:$0xff]
    %v1114 = vld [vmem:[#allocation12 + $0x7a8] sm:$0xff]
    %v1115 = vld [vmem:[#allocation12 + $0x7b0] sm:$0xff]
    %v1116 = vld [vmem:[#allocation12 + $0x7b8] sm:$0xff]
    %v1117 = vld [vmem:[#allocation12 + $0x7c0] sm:$0xff]
    %v1118 = vld [vmem:[#allocation12 + $0x7c8] sm:$0xff]
    %v1119 = vld [vmem:[#allocation12 + $0x7d0] sm:$0xff]
    %v1120 = vld [vmem:[#allocation12 + $0x7d8] sm:$0xff]
    %v1121 = vld [vmem:[#allocation12 + $0x7e0] sm:$0xff]
    %v1122 = vld [vmem:[#allocation12 + $0x7e8] sm:$0xff]
    %v1123 = vld [vmem:[#allocation12 + $0x7f0] sm:$0xff]
    %v1124 = vld [vmem:[#allocation12 + $0x7f8] sm:$0xff]
    %s1125 = sld [smem:[#allocation3]]
    %v1126 = vstv %s1125
    %1127 = vmatprep.subr.mxu0 %v870
    %1128 = vmatpush1.msra.mxu0 %v869
    %1129 = vmatprep.subr.mxu0 %v872
    %1130 = vmatpush1.msra.mxu0 %v871
    %1131 = vmatprep.subr.mxu0 %v874
    %1132 = vmatpush1.msra.mxu0 %v873
    %1133 = vmatprep.subr.mxu0 %v876
    %1134 = vmatpush1.msra.mxu0 %v875
    %1135 = vmatprep.subr.mxu0 %v878
    %1136 = vmatpush1.msra.mxu0 %v877
    %1137 = vmatprep.subr.mxu0 %v880
    %1138 = vmatpush1.msra.mxu0 %v879
    %1139 = vmatprep.subr.mxu0 %v882
    %1140 = vmatpush1.msra.mxu0 %v881
    %1141 = vmatprep.subr.mxu0 %v884
    %1142 = vmatpush1.msra.mxu0 %v883
    %1143 = vmatprep.subr.mxu0 %v886
    %1144 = vmatpush1.msra.mxu0 %v885
    %1145 = vmatprep.subr.mxu0 %v888
    %1146 = vmatpush1.msra.mxu0 %v887
    %1147 = vmatprep.subr.mxu0 %v890
    %1148 = vmatpush1.msra.mxu0 %v889
    %1149 = vmatprep.subr.mxu0 %v892
    %1150 = vmatpush1.msra.mxu0 %v891
    %1151 = vmatprep.subr.mxu0 %v894
    %1152 = vmatpush1.msra.mxu0 %v893
    %1153 = vmatprep.subr.mxu0 %v896
    %1154 = vmatpush1.msra.mxu0 %v895
    %1155 = vmatprep.subr.mxu0 %v898
    %1156 = vmatpush1.msra.mxu0 %v897
    %1157 = vmatprep.subr.mxu0 %v900
    %1158 = vmatpush1.msra.mxu0 %v899
    %1159 = vmatprep.subr.mxu0 %v902
    %1160 = vmatpush1.msra.mxu0 %v901
    %1161 = vmatprep.subr.mxu0 %v904
    %1162 = vmatpush1.msra.mxu0 %v903
    %1163 = vmatprep.subr.mxu0 %v906
    %1164 = vmatpush1.msra.mxu0 %v905
    %1165 = vmatprep.subr.mxu0 %v908
    %1166 = vmatpush1.msra.mxu0 %v907
    %1167 = vmatprep.subr.mxu0 %v910
    %1168 = vmatpush1.msra.mxu0 %v909
    %1169 = vmatprep.subr.mxu0 %v912
    %1170 = vmatpush1.msra.mxu0 %v911
    %1171 = vmatprep.subr.mxu0 %v914
    %1172 = vmatpush1.msra.mxu0 %v913
    %1173 = vmatprep.subr.mxu0 %v916
    %1174 = vmatpush1.msra.mxu0 %v915
    %1175 = vmatprep.subr.mxu0 %v918
    %1176 = vmatpush1.msra.mxu0 %v917
    %1177 = vmatprep.subr.mxu0 %v920
    %1178 = vmatpush1.msra.mxu0 %v919
    %1179 = vmatprep.subr.mxu0 %v922
    %1180 = vmatpush1.msra.mxu0 %v921
    %1181 = vmatprep.subr.mxu0 %v924
    %1182 = vmatpush1.msra.mxu0 %v923
    %1183 = vmatprep.subr.mxu0 %v926
    %1184 = vmatpush1.msra.mxu0 %v925
    %1185 = vmatprep.subr.mxu0 %v928
    %1186 = vmatpush1.msra.mxu0 %v927
    %1187 = vmatprep.subr.mxu0 %v930
    %1188 = vmatpush1.msra.mxu0 %v929
    %1189 = vmatprep.subr.mxu0 %v932
    %1190 = vmatpush1.msra.mxu0 %v931
    %1191 = vmatprep.mubr.f32.mxu0 %v862
    %1192 = vmatmul.mubr.f32.gmra.mrb[0].mxu0 %v861
    %v1193 = vpop.f32.mrb[0].mxu0
    %v1194 = vadd.f32 %v1126, %v1193
    %v1195 = vpop.f32.mrb[0].mxu0
    %v1196 = vadd.f32 %v1126, %v1195
    %1197 = vdwg.mxu0
    %1198 = vmatprep.subr.mxu0 %v934
    %1199 = vmatpush1.msra.mxu0 %v933
    %1200 = vmatprep.subr.mxu0 %v936
    %1201 = vmatpush1.msra.mxu0 %v935
    %1202 = vmatprep.subr.mxu0 %v938
    %1203 = vmatpush1.msra.mxu0 %v937
    %1204 = vmatprep.subr.mxu0 %v940
    %1205 = vmatpush1.msra.mxu0 %v939
    %1206 = vmatprep.subr.mxu0 %v942
    %1207 = vmatpush1.msra.mxu0 %v941
    %1208 = vmatprep.subr.mxu0 %v944
    %1209 = vmatpush1.msra.mxu0 %v943
    %1210 = vmatprep.subr.mxu0 %v946
    %1211 = vmatpush1.msra.mxu0 %v945
    %1212 = vmatprep.subr.mxu0 %v948
    %1213 = vmatpush1.msra.mxu0 %v947
    %1214 = vmatprep.subr.mxu0 %v950
    %1215 = vmatpush1.msra.mxu0 %v949
    %1216 = vmatprep.subr.mxu0 %v952
    %1217 = vmatpush1.msra.mxu0 %v951
    %1218 = vmatprep.subr.mxu0 %v954
    %1219 = vmatpush1.msra.mxu0 %v953
    %1220 = vmatprep.subr.mxu0 %v956
    %1221 = vmatpush1.msra.mxu0 %v955
    %1222 = vmatprep.subr.mxu0 %v958
    %1223 = vmatpush1.msra.mxu0 %v957
    %1224 = vmatprep.subr.mxu0 %v960
    %1225 = vmatpush1.msra.mxu0 %v959
    %1226 = vmatprep.subr.mxu0 %v962
    %1227 = vmatpush1.msra.mxu0 %v961
    %1228 = vmatprep.subr.mxu0 %v964
    %1229 = vmatpush1.msra.mxu0 %v963
    %1230 = vmatprep.subr.mxu0 %v966
    %1231 = vmatpush1.msra.mxu0 %v965
    %1232 = vmatprep.subr.mxu0 %v968
    %1233 = vmatpush1.msra.mxu0 %v967
    %1234 = vmatprep.subr.mxu0 %v970
    %1235 = vmatpush1.msra.mxu0 %v969
    %1236 = vmatprep.subr.mxu0 %v972
    %1237 = vmatpush1.msra.mxu0 %v971
    %1238 = vmatprep.subr.mxu0 %v974
    %1239 = vmatpush1.msra.mxu0 %v973
    %1240 = vmatprep.subr.mxu0 %v976
    %1241 = vmatpush1.msra.mxu0 %v975
    %1242 = vmatprep.subr.mxu0 %v978
    %1243 = vmatpush1.msra.mxu0 %v977
    %1244 = vmatprep.subr.mxu0 %v980
    %1245 = vmatpush1.msra.mxu0 %v979
    %1246 = vmatprep.subr.mxu0 %v982
    %1247 = vmatpush1.msra.mxu0 %v981
    %1248 = vmatprep.subr.mxu0 %v984
    %1249 = vmatpush1.msra.mxu0 %v983
    %1250 = vmatprep.subr.mxu0 %v986
    %1251 = vmatpush1.msra.mxu0 %v985
    %1252 = vmatprep.subr.mxu0 %v988
    %1253 = vmatpush1.msra.mxu0 %v987
    %1254 = vmatprep.subr.mxu0 %v990
    %1255 = vmatpush1.msra.mxu0 %v989
    %1256 = vmatprep.subr.mxu0 %v992
    %1257 = vmatpush1.msra.mxu0 %v991
    %1258 = vmatprep.subr.mxu0 %v994
    %1259 = vmatpush1.msra.mxu0 %v993
    %1260 = vmatprep.subr.mxu0 %v996
    %1261 = vmatpush1.msra.mxu0 %v995
    %1262 = vmatprep.mubr.f32.mxu0 %v864
    %1263 = vmatmul.mubr.f32.gmra.mrb[0].mxu0 %v863
    %v1264 = vpop.f32.mrb[0].mxu0
    %v1265 = vadd.f32 %v1194, %v1264
    %v1266 = vpop.f32.mrb[0].mxu0
    %v1267 = vadd.f32 %v1196, %v1266
    %1268 = vdwg.mxu0
    %1269 = vmatprep.subr.mxu0 %v998
    %1270 = vmatpush1.msra.mxu0 %v997
    %1271 = vmatprep.subr.mxu0 %v1000
    %1272 = vmatpush1.msra.mxu0 %v999
    %1273 = vmatprep.subr.mxu0 %v1002
    %1274 = vmatpush1.msra.mxu0 %v1001
    %1275 = vmatprep.subr.mxu0 %v1004
    %1276 = vmatpush1.msra.mxu0 %v1003
    %1277 = vmatprep.subr.mxu0 %v1006
    %1278 = vmatpush1.msra.mxu0 %v1005
    %1279 = vmatprep.subr.mxu0 %v1008
    %1280 = vmatpush1.msra.mxu0 %v1007
    %1281 = vmatprep.subr.mxu0 %v1010
    %1282 = vmatpush1.msra.mxu0 %v1009
    %1283 = vmatprep.subr.mxu0 %v1012
    %1284 = vmatpush1.msra.mxu0 %v1011
    %1285 = vmatprep.subr.mxu0 %v1014
    %1286 = vmatpush1.msra.mxu0 %v1013
    %1287 = vmatprep.subr.mxu0 %v1016
    %1288 = vmatpush1.msra.mxu0 %v1015
    %1289 = vmatprep.subr.mxu0 %v1018
    %1290 = vmatpush1.msra.mxu0 %v1017
    %1291 = vmatprep.subr.mxu0 %v1020
    %1292 = vmatpush1.msra.mxu0 %v1019
    %1293 = vmatprep.subr.mxu0 %v1022
    %1294 = vmatpush1.msra.mxu0 %v1021
    %1295 = vmatprep.subr.mxu0 %v1024
    %1296 = vmatpush1.msra.mxu0 %v1023
    %1297 = vmatprep.subr.mxu0 %v1026
    %1298 = vmatpush1.msra.mxu0 %v1025
    %1299 = vmatprep.subr.mxu0 %v1028
    %1300 = vmatpush1.msra.mxu0 %v1027
    %1301 = vmatprep.subr.mxu0 %v1030
    %1302 = vmatpush1.msra.mxu0 %v1029
    %1303 = vmatprep.subr.mxu0 %v1032
    %1304 = vmatpush1.msra.mxu0 %v1031
    %1305 = vmatprep.subr.mxu0 %v1034
    %1306 = vmatpush1.msra.mxu0 %v1033
    %1307 = vmatprep.subr.mxu0 %v1036
    %1308 = vmatpush1.msra.mxu0 %v1035
    %1309 = vmatprep.subr.mxu0 %v1038
    %1310 = vmatpush1.msra.mxu0 %v1037
    %1311 = vmatprep.subr.mxu0 %v1040
    %1312 = vmatpush1.msra.mxu0 %v1039
    %1313 = vmatprep.subr.mxu0 %v1042
    %1314 = vmatpush1.msra.mxu0 %v1041
    %1315 = vmatprep.subr.mxu0 %v1044
    %1316 = vmatpush1.msra.mxu0 %v1043
    %1317 = vmatprep.subr.mxu0 %v1046
    %1318 = vmatpush1.msra.mxu0 %v1045
    %1319 = vmatprep.subr.mxu0 %v1048
    %1320 = vmatpush1.msra.mxu0 %v1047
    %1321 = vmatprep.subr.mxu0 %v1050
    %1322 = vmatpush1.msra.mxu0 %v1049
    %1323 = vmatprep.subr.mxu0 %v1052
    %1324 = vmatpush1.msra.mxu0 %v1051
    %1325 = vmatprep.subr.mxu0 %v1054
    %1326 = vmatpush1.msra.mxu0 %v1053
    %1327 = vmatprep.subr.mxu0 %v1056
    %1328 = vmatpush1.msra.mxu0 %v1055
    %1329 = vmatprep.subr.mxu0 %v1058
    %1330 = vmatpush1.msra.mxu0 %v1057
    %1331 = vmatprep.subr.mxu0 %v1060
    %1332 = vmatpush1.msra.mxu0 %v1059
    %1333 = vmatprep.mubr.f32.mxu0 %v866
    %1334 = vmatmul.mubr.f32.gmra.mrb[0].mxu0 %v865
    %v1335 = vpop.f32.mrb[0].mxu0
    %v1336 = vadd.f32 %v1265, %v1335
    %v1337 = vpop.f32.mrb[0].mxu0
    %v1338 = vadd.f32 %v1267, %v1337
    %1339 = vdwg.mxu0
    %1340 = vmatprep.subr.mxu0 %v1062
    %1341 = vmatpush1.msra.mxu0 %v1061
    %1342 = vmatprep.subr.mxu0 %v1064
    %1343 = vmatpush1.msra.mxu0 %v1063
    %1344 = vmatprep.subr.mxu0 %v1066
    %1345 = vmatpush1.msra.mxu0 %v1065
    %1346 = vmatprep.subr.mxu0 %v1068
    %1347 = vmatpush1.msra.mxu0 %v1067
    %1348 = vmatprep.subr.mxu0 %v1070
    %1349 = vmatpush1.msra.mxu0 %v1069
    %1350 = vmatprep.subr.mxu0 %v1072
    %1351 = vmatpush1.msra.mxu0 %v1071
    %1352 = vmatprep.subr.mxu0 %v1074
    %1353 = vmatpush1.msra.mxu0 %v1073
    %1354 = vmatprep.subr.mxu0 %v1076
    %1355 = vmatpush1.msra.mxu0 %v1075
    %1356 = vmatprep.subr.mxu0 %v1078
    %1357 = vmatpush1.msra.mxu0 %v1077
    %1358 = vmatprep.subr.mxu0 %v1080
    %1359 = vmatpush1.msra.mxu0 %v1079
    %1360 = vmatprep.subr.mxu0 %v1082
    %1361 = vmatpush1.msra.mxu0 %v1081
    %1362 = vmatprep.subr.mxu0 %v1084
    %1363 = vmatpush1.msra.mxu0 %v1083
    %1364 = vmatprep.subr.mxu0 %v1086
    %1365 = vmatpush1.msra.mxu0 %v1085
    %1366 = vmatprep.subr.mxu0 %v1088
    %1367 = vmatpush1.msra.mxu0 %v1087
    %1368 = vmatprep.subr.mxu0 %v1090
    %1369 = vmatpush1.msra.mxu0 %v1089
    %1370 = vmatprep.subr.mxu0 %v1092
    %1371 = vmatpush1.msra.mxu0 %v1091
    %1372 = vmatprep.subr.mxu0 %v1094
    %1373 = vmatpush1.msra.mxu0 %v1093
    %1374 = vmatprep.subr.mxu0 %v1096
    %1375 = vmatpush1.msra.mxu0 %v1095
    %1376 = vmatprep.subr.mxu0 %v1098
    %1377 = vmatpush1.msra.mxu0 %v1097
    %1378 = vmatprep.subr.mxu0 %v1100
    %1379 = vmatpush1.msra.mxu0 %v1099
    %1380 = vmatprep.subr.mxu0 %v1102
    %1381 = vmatpush1.msra.mxu0 %v1101
    %1382 = vmatprep.subr.mxu0 %v1104
    %1383 = vmatpush1.msra.mxu0 %v1103
    %1384 = vmatprep.subr.mxu0 %v1106
    %1385 = vmatpush1.msra.mxu0 %v1105
    %1386 = vmatprep.subr.mxu0 %v1108
    %1387 = vmatpush1.msra.mxu0 %v1107
    %1388 = vmatprep.subr.mxu0 %v1110
    %1389 = vmatpush1.msra.mxu0 %v1109
    %1390 = vmatprep.subr.mxu0 %v1112
    %1391 = vmatpush1.msra.mxu0 %v1111
    %1392 = vmatprep.subr.mxu0 %v1114
    %1393 = vmatpush1.msra.mxu0 %v1113
    %1394 = vmatprep.subr.mxu0 %v1116
    %1395 = vmatpush1.msra.mxu0 %v1115
    %1396 = vmatprep.subr.mxu0 %v1118
    %1397 = vmatpush1.msra.mxu0 %v1117
    %1398 = vmatprep.subr.mxu0 %v1120
    %1399 = vmatpush1.msra.mxu0 %v1119
    %1400 = vmatprep.subr.mxu0 %v1122
    %1401 = vmatpush1.msra.mxu0 %v1121
    %1402 = vmatprep.subr.mxu0 %v1124
    %1403 = vmatpush1.msra.mxu0 %v1123
    %1404 = vmatprep.mubr.f32.mxu0 %v868
    %1405 = vmatmul.mubr.f32.gmra.mrb[0].mxu0 %v867
    %v1406 = vpop.f32.mrb[0].mxu0
    %v1407 = vadd.f32 %v1336, %v1406
    %v1408 = vpop.f32.mrb[0].mxu0
    %v1409 = vadd.f32 %v1338, %v1408
    %1410 = vdwg.mxu0
    %v1411 = vadd.f32 %v1407, %v277
    %v1412 = vadd.f32 %v1409, %v278
    %1413 = vst [vmem:[#allocation13] sm:$0xff] %v1411
    %1414 = vst [vmem:[#allocation13 + $0x8] sm:$0xff] %v1412
    // Predicated region
    $region54: #{tpu_custom_call.1} parent=1 // pred_check
      _
    $region55: #{tpu_custom_call.1} parent=1 // pred_check_branch
      %1416 = sbr.rel (0) target = $region57
    $region56: #{tpu_custom_call.1} parent=1 // pred_region
      %s1418 = ssub.s32 256, 256
      %1419 = vsyncadd [#allocation6], %s1418
      %s1421 = sshll.u32 [#allocation13], 4
      %s1422 = int_to_ptr.vmem [resolvable:$true] %s1421
      %1424 = dma.vmem_to_hbm [thread:$0]  %s1422, 256, %s8, [#allocation6]
    $region57: #{tpu_custom_call.1} parent=1 // pred_fallthru
      _
    // Predicated region
    $region58: #{tpu_custom_call.1} parent=1 // pred_check
      _
    $region59: #{tpu_custom_call.1} parent=1 // pred_check_branch
      %1426 = sbr.rel (0) target = $region61
    $region60: #{tpu_custom_call.1} parent=1 // pred_region
      %1427 = dma.done [#allocation6], 256
    $region61: #{tpu_custom_call.1} parent=1 // pred_fallthru
      _
    %1428 = vsyncpa [#allocation5], 1
    %1429 = vsyncpa [#allocation8], 1
    %1430 = vsyncpa [#allocation11], 1
    %1431 = vsyncpa [#allocation6], 1

</llo_original>
